<compile_context>
chip_gen: v5e
topology: v5e:2x2
jax: 0.10.0
libtpu: 0.0.40
codegen_flags: <defaults>
</compile_context>

<pallas_src>
import jax
import jax.numpy as jnp
from jax.experimental import pallas as pl
from jax.experimental.pallas import tpu as pltpu

# ----- small shapes consistent with the module's forward -----
B = 2                 # batch of videos
T = 8                 # feat_len (frames per video)
C, H, W = 3, 16, 16   # frame size (scaled down from 3x224x224)
EMBED = 128           # CLIP embedding dim (scaled down from 512)
N_QUAL = 5            # qualitys = [bad, poor, fair, good, perfect]
N_TEXT = N_QUAL * N_QUAL   # 25 (spatial, temporal) prompt combinations
N_PAD = 128           # prompt dim lane-padded to a full vreg lane width
HIDDEN = 128          # rectifier hidden width
SPA_CH = 5 * 64       # per-frame spatial-rectifier channels (scaled from 5*256)
TEM_CH = 64           # per-frame temporal-rectifier channels (scaled from 256)
NH = 3                # spatialRec1/2/3 and temporalRec1/2/3
LOGIT_SCALE = 1.0 / 0.07   # clip.logit_scale.exp() at CLIP's default init
EPS = 1e-12           # eps under the L2-normalization rsqrt


# ---------------------------------------------------------------------------
# One fused kernel: image projection -> normalize -> cosine sim -> softmax ->
# 5x5 quality marginals -> frame pooling -> 6 rectifier MLPs -> alpha/beta fusion
# ---------------------------------------------------------------------------
def _fused_kernel(x_ref, wimg_ref, txt_ref, clsw_ref,
                  spa_ref, spw1_ref, spb1_ref, spw2_ref, spb2_ref,
                  tem_ref, tpw1_ref, tpb1_ref, tpw2_ref, tpb2_ref,
                  out_ref):
    b_n = txt_ref.shape[0]
    n_pad = txt_ref.shape[2]
    t_n = x_ref.shape[0] // b_n
    d = wimg_ref.shape[1]
    nh = spw2_ref.shape[1] // 2

    # ---- "clip.encode_image": bf16 MXU matmul (f32 acc), then eps-guarded L2-norm ----
    img = jnp.dot(x_ref[...], wimg_ref[...], preferred_element_type=jnp.float32)
    img = img * jax.lax.rsqrt(jnp.sum(img * img, axis=-1, keepdims=True) + EPS)
    img3 = img.reshape(b_n, t_n, d)                               # (B, T, D)

    # ---- cosine similarity; text already L2-normalized and pre-scaled by logit_scale,
    #      padded prompt columns are exactly zero -> zero logits there ----
    logits = jnp.einsum('btd,bdn->btn', img3, txt_ref[...],
                        preferred_element_type=jnp.float32)       # (B, T, N_PAD)

    # ---- batched softmax over real prompts only (mask padded lanes to -inf) ----
    lane = jax.lax.broadcasted_iota(jnp.int32, logits.shape, dimension=2)
    masked = jnp.where(lane < N_TEXT, logits, -1e30)
    m = jnp.max(masked, axis=-1, keepdims=True)
    e = jnp.exp(masked - m)
    # NOTE: approx reciprocal (EUP) introduces ~1e-3 relative error vs exact softmax.
    p = e * pl.reciprocal(jnp.sum(e, axis=-1, keepdims=True), approx=True)

    # ---- 5x5 quality marginals (expected 1..5 spatial / temporal quality) and the
    #      mean pre-softmax logit, pooled over frames ----
    st = jnp.dot(p.reshape(b_n * t_n, n_pad), clsw_ref[...],
                 preferred_element_type=jnp.float32)              # (B*T, 2) = [xs, xt]
    st3 = st.reshape(b_n, t_n, 2)
    xa = jnp.sum(logits, axis=-1) * (1.0 / N_TEXT)                # padded logits are 0
    xsta = jnp.concatenate(
        [jnp.mean(st3, axis=1), jnp.mean(xa, axis=1, keepdims=True)],
        axis=-1)                                                  # (B, 3) = [xs, xt, xa]

    # ---- spatial rectifiers: 3 heads fused into one (IN,384) + block-diag (384,6) ----
    hS = jnp.maximum(
        jnp.dot(spa_ref[...], spw1_ref[...], preferred_element_type=jnp.float32)
        + spb1_ref[...], 0.0)
    outS = jnp.dot(hS, spw2_ref[...], preferred_element_type=jnp.float32) + spb2_ref[...]
    # ---- temporal rectifiers (same fusion) ----
    hT = jnp.maximum(
        jnp.dot(tem_ref[...], tpw1_ref[...], preferred_element_type=jnp.float32)
        + tpb1_ref[...], 0.0)
    outT = jnp.dot(hT, tpw2_ref[...], preferred_element_type=jnp.float32) + tpb2_ref[...]
    # TODO(synk): nn.Dropout(p) is identity in eval mode; training-mode dropout
    # (pltpu.prng_random_bits mask) is intentionally not applied here.

    # columns 0..2 = alphas for heads (s,t,a); columns 3..5 = betas.
    aS = jnp.abs(outS[:, 0:nh] + 1.0)      # |alphaS + 1|
    bS = outS[:, nh:2 * nh]
    aT = jnp.abs(outT[:, 0:nh] + 1.0)
    bT = outT[:, nh:2 * nh]

    qs = aS * xsta + bS
    qt = aT * xsta + bT
    qst = jnp.sqrt(aS * aT) * xsta + 0.5 * (bS + bT)

    # single lane-packed output slab, written with static slice stores:
    # [xs, xt, xa | qs_s, qs_t, qs_a | qt_s, qt_t, qt_a | qst_s, qst_t, qst_a]
    out_ref[:, 0:nh] = xsta
    out_ref[:, nh:2 * nh] = qs
    out_ref[:, 2 * nh:3 * nh] = qt
    out_ref[:, 3 * nh:4 * nh] = qst


# ---------------------------------------------------------------------------
# Parameters (deterministic, synthetic), packed for the fused kernel
# ---------------------------------------------------------------------------
def init_params(key):
    ks = jax.random.split(key, 8)
    in_sp = T * SPA_CH
    in_tp = T * TEM_CH

    def lin_w(k, fan_in, fan_out):
        return jax.random.uniform(k, (fan_in, fan_out), jnp.float32, -1.0, 1.0) / \
            jnp.sqrt(jnp.float32(fan_in))

    def lin_b(k, fan_in, fan_out):
        return jax.random.uniform(k, (fan_out,), jnp.float32, -1.0, 1.0) / \
            jnp.sqrt(jnp.float32(fan_in))

    def pack_heads(head_keys, in_dim):
        """Pack 3 (Linear(in,128)+ReLU+Linear(128,2)) heads into fused weights."""
        w1s, b1s, w2s, b2s = [], [], [], []
        for h in range(NH):
            k1, k2, k3, k4 = jax.random.split(head_keys[h], 4)
            w1s.append(lin_w(k1, in_dim, HIDDEN))
            b1s.append(lin_b(k2, in_dim, HIDDEN))
            w2s.append(lin_w(k3, HIDDEN, 2))
            b2s.append(lin_b(k4, HIDDEN, 2))
        w1c = jnp.concatenate(w1s, axis=1)                                  # (IN, 3*H)
        b1c = jnp.concatenate(b1s, axis=0).reshape(1, NH * HIDDEN)          # (1, 3*H)
        # block-diagonal second layer: alpha columns 0..2, beta columns 3..5
        w2bd = jnp.zeros((NH * HIDDEN, 2 * NH), jnp.float32)
        for h in range(NH):
            w2bd = w2bd.at[h * HIDDEN:(h + 1) * HIDDEN, h].set(w2s[h][:, 0])
            w2bd = w2bd.at[h * HIDDEN:(h + 1) * HIDDEN, NH + h].set(w2s[h][:, 1])
        b2c = jnp.concatenate(
            [jnp.stack([b2s[h][0] for h in range(NH)]),
             jnp.stack([b2s[h][1] for h in range(NH)])]).reshape(1, 2 * NH)  # (1, 6)
        # big first-layer weight is a bf16 MXU operand; bias / second layer stay f32.
        return w1c.astype(jnp.bfloat16), b1c, w2bd, b2c

    sp_w1, sp_b1, sp_w2, sp_b2 = pack_heads(jax.random.split(ks[2], NH), in_sp)
    tp_w1, tp_b1, tp_w2, tp_b2 = pack_heads(jax.random.split(ks[3], NH), in_tp)

    # prompt index n = s*5 + t  ->  spatial weight s+1, temporal weight t+1;
    # lane-padded to N_PAD with zero rows (padded probabilities are zero anyway).
    idx = jnp.arange(N_TEXT)
    cls_w = jnp.zeros((N_PAD, 2), jnp.float32)
    cls_w = cls_w.at[:N_TEXT, 0].set((idx // N_QUAL + 1).astype(jnp.float32))
    cls_w = cls_w.at[:N_TEXT, 1].set((idx % N_QUAL + 1).astype(jnp.float32))

    # synthetic clip.encode_text output for the 25 prompts per video:
    # pre-L2-normalized along EMBED, pre-scaled by logit_scale, transposed to
    # (B, EMBED, N_PAD) with zero padding on the prompt lanes.
    # TODO(synk): clip.tokenize + the transformer text encoder have no Pallas
    # equivalent here; replaced by fixed synthetic per-prompt features.
    txt = jax.random.normal(ks[1], (B, N_TEXT, EMBED), jnp.float32)
    txt = txt * jax.lax.rsqrt(jnp.sum(txt * txt, axis=-1, keepdims=True) + EPS)
    txt_t = jnp.zeros((B, EMBED, N_PAD), jnp.float32)
    txt_t = txt_t.at[:, :, :N_TEXT].set(LOGIT_SCALE * jnp.swapaxes(txt, 1, 2))

    return {
        # synthetic clip.encode_image projection (flattened frame -> EMBED), bf16 MXU feed
        "w_img": (jax.random.normal(ks[0], (C * H * W, EMBED), jnp.float32) * 0.02
                  ).astype(jnp.bfloat16),
        "txt_t": txt_t,
        "cls_w": cls_w,
        "sp_w1": sp_w1, "sp_b1": sp_b1, "sp_w2": sp_w2, "sp_b2": sp_b2,
        "tp_w1": tp_w1, "tp_b1": tp_b1, "tp_w2": tp_w2, "tp_b2": tp_b2,
    }


# ---------------------------------------------------------------------------
# Forward: one grid-less pallas_call, tiny final stacking in plain JAX (fused by XLA)
# ---------------------------------------------------------------------------
def _forward_impl(x, tem_feat, spa_feat, params):
    Bn, Tn = x.shape[0], x.shape[1]
    # activations that feed the big bf16 matmuls are cast to bf16 in the wrapper;
    # everything elementwise downstream stays f32 inside the kernel.
    x_flat = x.reshape(Bn * Tn, -1).astype(jnp.bfloat16)      # (B*T, C*H*W)
    spa_flat = spa_feat.reshape(Bn, -1).astype(jnp.bfloat16)  # (B, T*SPA_CH)
    tem_flat = tem_feat.reshape(Bn, -1).astype(jnp.bfloat16)  # (B, T*TEM_CH)

    operands = (x_flat, params["w_img"], params["txt_t"], params["cls_w"],
                spa_flat, params["sp_w1"], params["sp_b1"], params["sp_w2"], params["sp_b2"],
                tem_flat, params["tp_w1"], params["tp_b1"], params["tp_w2"], params["tp_b2"])

    # advisory cost estimate for XLA's scheduler (latency-bound micro-kernel)
    chw = x_flat.shape[1]
    flops = 2 * (Bn * Tn * chw * EMBED                       # image projection
                 + Bn * Tn * EMBED * N_PAD                   # cosine similarity
                 + Bn * Tn * N_PAD * 2                       # quality marginals
                 + Bn * spa_flat.shape[1] * NH * HIDDEN      # spatial rectifiers L1
                 + Bn * tem_flat.shape[1] * NH * HIDDEN      # temporal rectifiers L1
                 + 2 * Bn * NH * HIDDEN * 2 * NH)            # second layers
    transcendentals = Bn * Tn * (N_PAD + 2) + 2 * Bn * NH
    bytes_accessed = (sum(int(o.size) * o.dtype.itemsize for o in operands)
                      + Bn * 4 * NH * 4)

    out = pl.pallas_call(
        _fused_kernel,
        out_shape=jax.ShapeDtypeStruct((Bn, 4 * NH), jnp.float32),
        compiler_params=pltpu.CompilerParams(vmem_limit_bytes=8 * 1024 * 1024),
        cost_estimate=pl.CostEstimate(flops=flops,
                                      transcendentals=transcendentals,
                                      bytes_accessed=bytes_accessed),
    )(*operands)

    xsta, qs, qt, qst = out[:, 0:3], out[:, 3:6], out[:, 6:9], out[:, 9:12]
    # stacks match torch: t = (xt, qt_t, qs_t, qst_t), etc.
    t = jnp.stack([xsta[:, 1], qt[:, 1], qs[:, 1], qst[:, 1]], axis=0)   # (4, B)
    s = jnp.stack([xsta[:, 0], qt[:, 0], qs[:, 0], qst[:, 0]], axis=0)
    a = jnp.stack([xsta[:, 2], qt[:, 2], qs[:, 2], qst[:, 2]], axis=0)

    if Bn == 1:  # torch squeezes (and moves to cpu) when batch == 1
        t, s, a = t[:, 0], s[:, 0], a[:, 0]
    return t, s, a


forward = jax.jit(_forward_impl)


if __name__ == "__main__":
    key = jax.random.PRNGKey(0)
    kx, kt, ks, kp = jax.random.split(key, 4)
    x = jax.random.normal(kx, (B, T, C, H, W), jnp.float32)
    tem_feat = jax.random.normal(kt, (B, T, TEM_CH), jnp.float32)
    spa_feat = jax.random.normal(ks, (B, T, SPA_CH), jnp.float32)
    params = init_params(kp)

    t, s, a = forward(x, tem_feat, spa_feat, params)
    jax.block_until_ready((t, s, a))
    assert t.shape == (4, B) and s.shape == (4, B) and a.shape == (4, B)
    assert bool(jnp.all(jnp.isfinite(t)) & jnp.all(jnp.isfinite(s)) & jnp.all(jnp.isfinite(a)))
    print("KERNEL_OK")
</pallas_src>

<mosaic_0001>
module attributes {stable_mosaic.version = 11 : i64} {
  func.func @_fused_kernel(%arg0: memref<16x768xbf16, #tpu.memory_space<vmem>>, %arg1: memref<768x128xbf16, #tpu.memory_space<vmem>>, %arg2: memref<2x128x128xf32, #tpu.memory_space<vmem>>, %arg3: memref<128x2xf32, #tpu.memory_space<vmem>>, %arg4: memref<2x2560xbf16, #tpu.memory_space<vmem>>, %arg5: memref<2560x384xbf16, #tpu.memory_space<vmem>>, %arg6: memref<1x384xf32, #tpu.memory_space<vmem>>, %arg7: memref<384x6xf32, #tpu.memory_space<vmem>>, %arg8: memref<1x6xf32, #tpu.memory_space<vmem>>, %arg9: memref<2x512xbf16, #tpu.memory_space<vmem>>, %arg10: memref<512x384xbf16, #tpu.memory_space<vmem>>, %arg11: memref<1x384xf32, #tpu.memory_space<vmem>>, %arg12: memref<384x6xf32, #tpu.memory_space<vmem>>, %arg13: memref<1x6xf32, #tpu.memory_space<vmem>>, %arg14: memref<2x12xf32, #tpu.memory_space<vmem>>) attributes {dimension_semantics = [], scalar_prefetch = 0 : i64, scratch_operands = 0 : i64, tpu.core_type = #tpu.core_type<tc>} {
    %c0 = arith.constant 0 : index
    %c0_0 = arith.constant 0 : index
    %0 = vector.load %arg0[%c0, %c0_0] : memref<16x768xbf16, #tpu.memory_space<vmem>>, vector<16x768xbf16>
    %c0_1 = arith.constant 0 : index
    %c0_2 = arith.constant 0 : index
    %1 = vector.load %arg1[%c0_1, %c0_2] : memref<768x128xbf16, #tpu.memory_space<vmem>>, vector<768x128xbf16>
    %cst = arith.constant dense<0.000000e+00> : vector<16x128xf32>
    %2 = tpu.matmul %0, %1, %cst {dimension_numbers = #tpu.dot_dimension_numbers<[1], [0], [0], [1], [0, 0, 1, 1], [], []>} : vector<16x768xbf16>, vector<768x128xbf16>, vector<16x128xf32> -> vector<16x128xf32>
    %3 = arith.mulf %2, %2 : vector<16x128xf32>
    %cst_3 = arith.constant dense<0.000000e+00> : vector<16xf32>
    %4 = vector.multi_reduction <add>, %3, %cst_3 [1] : vector<16x128xf32> to vector<16xf32>
    %5 = vector.shape_cast %4 : vector<16xf32> to vector<16x1xf32>
    %cst_4 = arith.constant 9.99999996E-13 : f32
    %6 = vector.broadcast %cst_4 : f32 to vector<16x1xf32>
    %7 = arith.addf %5, %6 : vector<16x1xf32>
    %8 = math.rsqrt %7 : vector<16x1xf32>
    %9 = vector.broadcast %8 : vector<16x1xf32> to vector<16x128xf32>
    %10 = arith.mulf %2, %9 : vector<16x128xf32>
    %11 = vector.shape_cast %10 : vector<16x128xf32> to vector<2x8x128xf32>
    %c0_5 = arith.constant 0 : index
    %c0_6 = arith.constant 0 : index
    %c0_7 = arith.constant 0 : index
    %12 = vector.load %arg2[%c0_5, %c0_6, %c0_7] : memref<2x128x128xf32, #tpu.memory_space<vmem>>, vector<2x128x128xf32>
    "tpu.trace_start"() <{level = 10 : i32, message = "btd,bdn->btn"}> : () -> ()
    %cst_8 = arith.constant dense<0.000000e+00> : vector<2x8x128xf32>
    %13 = tpu.matmul %11, %12, %cst_8 {dimension_numbers = #tpu.dot_dimension_numbers<[2], [1], [1], [2], [0, 0, 0, 1, 1, 2], [0], [0]>} : vector<2x8x128xf32>, vector<2x128x128xf32>, vector<2x8x128xf32> -> vector<2x8x128xf32>
    "tpu.trace_stop"() : () -> ()
    %14 = tpu.iota {dimensions = array<i32: 2>} : vector<2x8x128xi32>
    %c25_i32 = arith.constant 25 : i32
    %15 = vector.broadcast %c25_i32 : i32 to vector<2x8x128xi32>
    %16 = arith.cmpi slt, %14, %15 : vector<2x8x128xi32>
    %cst_9 = arith.constant -1.000000e+30 : f32
    %17 = vector.broadcast %cst_9 : f32 to vector<2x8x128xf32>
    %18 = arith.select %16, %13, %17 : vector<2x8x128xi1>, vector<2x8x128xf32>
    %cst_10 = arith.constant dense<0xFF800000> : vector<2x8xf32>
    %19 = vector.multi_reduction <maximumf>, %18, %cst_10 [2] : vector<2x8x128xf32> to vector<2x8xf32>
    %20 = vector.shape_cast %19 : vector<2x8xf32> to vector<2x8x1xf32>
    %21 = vector.broadcast %20 : vector<2x8x1xf32> to vector<2x8x128xf32>
    %22 = arith.subf %18, %21 : vector<2x8x128xf32>
    %23 = math.exp %22 : vector<2x8x128xf32>
    %cst_11 = arith.constant dense<0.000000e+00> : vector<2x8xf32>
    %24 = vector.multi_reduction <add>, %23, %cst_11 [2] : vector<2x8x128xf32> to vector<2x8xf32>
    %25 = vector.shape_cast %24 : vector<2x8xf32> to vector<2x8x1xf32>
    %26 = tpu.reciprocal %25 {approx = true} : vector<2x8x1xf32> -> vector<2x8x1xf32>
    %27 = vector.broadcast %26 : vector<2x8x1xf32> to vector<2x8x128xf32>
    %28 = arith.mulf %23, %27 : vector<2x8x128xf32>
    %29 = vector.shape_cast %28 : vector<2x8x128xf32> to vector<16x128xf32>
    %c0_12 = arith.constant 0 : index
    %c0_13 = arith.constant 0 : index
    %30 = vector.load %arg3[%c0_12, %c0_13] : memref<128x2xf32, #tpu.memory_space<vmem>>, vector<128x2xf32>
    %cst_14 = arith.constant dense<0.000000e+00> : vector<16x2xf32>
    %31 = tpu.matmul %29, %30, %cst_14 {dimension_numbers = #tpu.dot_dimension_numbers<[1], [0], [0], [1], [0, 0, 1, 1], [], []>} : vector<16x128xf32>, vector<128x2xf32>, vector<16x2xf32> -> vector<16x2xf32>
    %32 = vector.shape_cast %31 : vector<16x2xf32> to vector<2x8x2xf32>
    %cst_15 = arith.constant dense<0.000000e+00> : vector<2x8xf32>
    %33 = vector.multi_reduction <add>, %13, %cst_15 [2] : vector<2x8x128xf32> to vector<2x8xf32>
    %cst_16 = arith.constant 4.000000e-02 : f32
    %34 = vector.broadcast %cst_16 : f32 to vector<2x8xf32>
    %35 = arith.mulf %33, %34 : vector<2x8xf32>
    %cst_17 = arith.constant dense<0.000000e+00> : vector<2x2xf32>
    %36 = vector.multi_reduction <add>, %32, %cst_17 [1] : vector<2x8x2xf32> to vector<2x2xf32>
    %cst_18 = arith.constant 8.000000e+00 : f32
    %37 = vector.broadcast %cst_18 : f32 to vector<2x2xf32>
    %38 = arith.divf %36, %37 : vector<2x2xf32>
    %cst_19 = arith.constant dense<0.000000e+00> : vector<2xf32>
    %39 = vector.multi_reduction <add>, %35, %cst_19 [1] : vector<2x8xf32> to vector<2xf32>
    %40 = vector.shape_cast %39 : vector<2xf32> to vector<2x1xf32>
    %cst_20 = arith.constant 8.000000e+00 : f32
    %41 = vector.broadcast %cst_20 : f32 to vector<2x1xf32>
    %42 = arith.divf %40, %41 : vector<2x1xf32>
    %43 = tpu.concatenate %38, %42 in 1 : vector<2x2xf32>, vector<2x1xf32> -> vector<2x3xf32>
    %c0_21 = arith.constant 0 : index
    %c0_22 = arith.constant 0 : index
    %44 = vector.load %arg4[%c0_21, %c0_22] : memref<2x2560xbf16, #tpu.memory_space<vmem>>, vector<2x2560xbf16>
    %c0_23 = arith.constant 0 : index
    %c0_24 = arith.constant 0 : index
    %45 = vector.load %arg5[%c0_23, %c0_24] : memref<2560x384xbf16, #tpu.memory_space<vmem>>, vector<2560x384xbf16>
    %cst_25 = arith.constant dense<0.000000e+00> : vector<2x384xf32>
    %46 = tpu.matmul %44, %45, %cst_25 {dimension_numbers = #tpu.dot_dimension_numbers<[1], [0], [0], [1], [0, 0, 1, 1], [], []>} : vector<2x2560xbf16>, vector<2560x384xbf16>, vector<2x384xf32> -> vector<2x384xf32>
    %c0_26 = arith.constant 0 : index
    %c0_27 = arith.constant 0 : index
    %47 = vector.load %arg6[%c0_26, %c0_27] : memref<1x384xf32, #tpu.memory_space<vmem>>, vector<1x384xf32>
    %48 = vector.broadcast %47 : vector<1x384xf32> to vector<2x384xf32>
    %49 = arith.addf %46, %48 : vector<2x384xf32>
    %cst_28 = arith.constant 0.000000e+00 : f32
    %50 = vector.broadcast %cst_28 : f32 to vector<2x384xf32>
    %51 = arith.maximumf %49, %50 : vector<2x384xf32>
    %c0_29 = arith.constant 0 : index
    %c0_30 = arith.constant 0 : index
    %52 = vector.load %arg7[%c0_29, %c0_30] : memref<384x6xf32, #tpu.memory_space<vmem>>, vector<384x6xf32>
    %cst_31 = arith.constant dense<0.000000e+00> : vector<2x6xf32>
    %53 = tpu.matmul %51, %52, %cst_31 {dimension_numbers = #tpu.dot_dimension_numbers<[1], [0], [0], [1], [0, 0, 1, 1], [], []>} : vector<2x384xf32>, vector<384x6xf32>, vector<2x6xf32> -> vector<2x6xf32>
    %c0_32 = arith.constant 0 : index
    %c0_33 = arith.constant 0 : index
    %54 = vector.load %arg8[%c0_32, %c0_33] : memref<1x6xf32, #tpu.memory_space<vmem>>, vector<1x6xf32>
    %55 = vector.broadcast %54 : vector<1x6xf32> to vector<2x6xf32>
    %56 = arith.addf %53, %55 : vector<2x6xf32>
    %c0_34 = arith.constant 0 : index
    %c0_35 = arith.constant 0 : index
    %57 = vector.load %arg9[%c0_34, %c0_35] : memref<2x512xbf16, #tpu.memory_space<vmem>>, vector<2x512xbf16>
    %c0_36 = arith.constant 0 : index
    %c0_37 = arith.constant 0 : index
    %58 = vector.load %arg10[%c0_36, %c0_37] : memref<512x384xbf16, #tpu.memory_space<vmem>>, vector<512x384xbf16>
    %cst_38 = arith.constant dense<0.000000e+00> : vector<2x384xf32>
    %59 = tpu.matmul %57, %58, %cst_38 {dimension_numbers = #tpu.dot_dimension_numbers<[1], [0], [0], [1], [0, 0, 1, 1], [], []>} : vector<2x512xbf16>, vector<512x384xbf16>, vector<2x384xf32> -> vector<2x384xf32>
    %c0_39 = arith.constant 0 : index
    %c0_40 = arith.constant 0 : index
    %60 = vector.load %arg11[%c0_39, %c0_40] : memref<1x384xf32, #tpu.memory_space<vmem>>, vector<1x384xf32>
    %61 = vector.broadcast %60 : vector<1x384xf32> to vector<2x384xf32>
    %62 = arith.addf %59, %61 : vector<2x384xf32>
    %cst_41 = arith.constant 0.000000e+00 : f32
    %63 = vector.broadcast %cst_41 : f32 to vector<2x384xf32>
    %64 = arith.maximumf %62, %63 : vector<2x384xf32>
    %c0_42 = arith.constant 0 : index
    %c0_43 = arith.constant 0 : index
    %65 = vector.load %arg12[%c0_42, %c0_43] : memref<384x6xf32, #tpu.memory_space<vmem>>, vector<384x6xf32>
    %cst_44 = arith.constant dense<0.000000e+00> : vector<2x6xf32>
    %66 = tpu.matmul %64, %65, %cst_44 {dimension_numbers = #tpu.dot_dimension_numbers<[1], [0], [0], [1], [0, 0, 1, 1], [], []>} : vector<2x384xf32>, vector<384x6xf32>, vector<2x6xf32> -> vector<2x6xf32>
    %c0_45 = arith.constant 0 : index
    %c0_46 = arith.constant 0 : index
    %67 = vector.load %arg13[%c0_45, %c0_46] : memref<1x6xf32, #tpu.memory_space<vmem>>, vector<1x6xf32>
    %68 = vector.broadcast %67 : vector<1x6xf32> to vector<2x6xf32>
    %69 = arith.addf %66, %68 : vector<2x6xf32>
    %70 = vector.extract_strided_slice %56 {offsets = [0, 0], sizes = [2, 3], strides = [1, 1]} : vector<2x6xf32> to vector<2x3xf32>
    %cst_47 = arith.constant 1.000000e+00 : f32
    %71 = vector.broadcast %cst_47 : f32 to vector<2x3xf32>
    %72 = arith.addf %70, %71 : vector<2x3xf32>
    %73 = math.absf %72 : vector<2x3xf32>
    %74 = vector.extract_strided_slice %56 {offsets = [0, 3], sizes = [2, 3], strides = [1, 1]} : vector<2x6xf32> to vector<2x3xf32>
    %75 = vector.extract_strided_slice %69 {offsets = [0, 0], sizes = [2, 3], strides = [1, 1]} : vector<2x6xf32> to vector<2x3xf32>
    %cst_48 = arith.constant 1.000000e+00 : f32
    %76 = vector.broadcast %cst_48 : f32 to vector<2x3xf32>
    %77 = arith.addf %75, %76 : vector<2x3xf32>
    %78 = math.absf %77 : vector<2x3xf32>
    %79 = vector.extract_strided_slice %69 {offsets = [0, 3], sizes = [2, 3], strides = [1, 1]} : vector<2x6xf32> to vector<2x3xf32>
    %80 = arith.mulf %73, %43 : vector<2x3xf32>
    %81 = arith.addf %80, %74 : vector<2x3xf32>
    %82 = arith.mulf %78, %43 : vector<2x3xf32>
    %83 = arith.addf %82, %79 : vector<2x3xf32>
    %84 = arith.mulf %73, %78 : vector<2x3xf32>
    %85 = math.sqrt %84 : vector<2x3xf32>
    %86 = arith.mulf %85, %43 : vector<2x3xf32>
    %87 = arith.addf %74, %79 : vector<2x3xf32>
    %cst_49 = arith.constant 5.000000e-01 : f32
    %88 = vector.broadcast %cst_49 : f32 to vector<2x3xf32>
    %89 = arith.mulf %88, %87 : vector<2x3xf32>
    %90 = arith.addf %86, %89 : vector<2x3xf32>
    %c0_50 = arith.constant 0 : index
    %c0_51 = arith.constant 0 : index
    %91 = vector.load %arg14[%c0_50, %c0_51] : memref<2x12xf32, #tpu.memory_space<vmem>>, vector<2x3xf32>
    tpu.vector_store %arg14[%c0_50, %c0_51], %43 {strides = array<i32>} : memref<2x12xf32, #tpu.memory_space<vmem>>, vector<2x3xf32>,
    %c0_52 = arith.constant 0 : index
    %c3 = arith.constant 3 : index
    %92 = vector.load %arg14[%c0_52, %c3] : memref<2x12xf32, #tpu.memory_space<vmem>>, vector<2x3xf32>
    tpu.vector_store %arg14[%c0_52, %c3], %81 {strides = array<i32>} : memref<2x12xf32, #tpu.memory_space<vmem>>, vector<2x3xf32>,
    %c0_53 = arith.constant 0 : index
    %c6 = arith.constant 6 : index
    %93 = vector.load %arg14[%c0_53, %c6] : memref<2x12xf32, #tpu.memory_space<vmem>>, vector<2x3xf32>
    tpu.vector_store %arg14[%c0_53, %c6], %83 {strides = array<i32>} : memref<2x12xf32, #tpu.memory_space<vmem>>, vector<2x3xf32>,
    %c0_54 = arith.constant 0 : index
    %c9 = arith.constant 9 : index
    %94 = vector.load %arg14[%c0_54, %c9] : memref<2x12xf32, #tpu.memory_space<vmem>>, vector<2x3xf32>
    tpu.vector_store %arg14[%c0_54, %c9], %90 {strides = array<i32>} : memref<2x12xf32, #tpu.memory_space<vmem>>, vector<2x3xf32>,
    return
  }
}

</mosaic_0001>

<llo_original>
// kernel: _forward_impl.1
$region0: #{_forward_impl.1}
  #allocation0 [shape = 'u32[]', space=smem, size = 0x4, offset = 0x4, fixed_abs, tag = 'smem constant byte address 0x4 - core index']
  #allocation1 [shape = 'u32[72,128]{1,0:T(1,128)}', space=vmem, size = 0x9000, scoped, tag = 'internal scratch']
  %s0 = inlined_call_operand.vmem [shape: bf16[16,768], index: 0, kind: input, shape index: {}]
  %s1 = inlined_call_operand.hbm [shape: bf16[768,128], index: 1, kind: input, shape index: {}]
  %s2 = inlined_call_operand.hbm [shape: f32[2,128,128], index: 2, kind: input, shape index: {}]
  %s3 = inlined_call_operand.vmem [shape: f32[128,2], index: 3, kind: input, shape index: {}]
  %s4 = inlined_call_operand.vmem [shape: bf16[2,2560], index: 4, kind: input, shape index: {}]
  %s5 = inlined_call_operand.hbm [shape: bf16[2560,384], index: 5, kind: input, shape index: {}]
  %s6 = inlined_call_operand.hbm [shape: f32[1,384], index: 6, kind: input, shape index: {}]
  %s7 = inlined_call_operand.vmem [shape: f32[384,6], index: 7, kind: input, shape index: {}]
  %s8 = inlined_call_operand.hbm [shape: f32[1,6], index: 8, kind: input, shape index: {}]
  %s9 = inlined_call_operand.vmem [shape: bf16[2,512], index: 9, kind: input, shape index: {}]
  %s10 = inlined_call_operand.hbm [shape: bf16[512,384], index: 10, kind: input, shape index: {}]
  %s11 = inlined_call_operand.hbm [shape: f32[1,384], index: 11, kind: input, shape index: {}]
  %s12 = inlined_call_operand.vmem [shape: f32[384,6], index: 12, kind: input, shape index: {}]
  %s13 = inlined_call_operand.hbm [shape: f32[1,6], index: 13, kind: input, shape index: {}]
  %s14 = inlined_call_operand.vmem [shape: f32[2,12], index: 14, kind: output, shape index: {}]
  %s15 = sld [smem:[#allocation0]]
  $region98: #{_forward_impl.1} parent=0
    _
  %s17 = ssub.s32 1, %s15
  %s18 = scalar_select 0, %s17, %s15
  $region1: #{_forward_impl.1} parent=0
    #allocation2 [shape = 'u8[196608]{0}', space=vmem, size = 0x30000, scoped, tag = 'input window, operand 1, single buffered']
    #allocation3 [shape = 's32[1]{0}', space=sflag, size = 0x4, scoped, tag = 'scoped memory for _forward_impl.1']
    #allocation4 [shape = 'u8[131072]{0}', space=vmem, size = 0x20000, scoped, tag = 'input window, operand 2, single buffered']
    #allocation5 [shape = 's32[1]{0}', space=sflag, size = 0x4, scoped, tag = 'scoped memory for _forward_impl.1']
    #allocation6 [shape = 'u8[1966080]{0}', space=vmem, size = 0x1e0000, scoped, tag = 'input window, operand 5, single buffered']
    #allocation7 [shape = 'u8[1536]{0}', space=vmem, size = 0x800, scoped, tag = 'input window, operand 6, single buffered']
    #allocation8 [shape = 's32[1]{0}', space=sflag, size = 0x4, scoped, tag = 'scoped memory for _forward_impl.1']
    #allocation9 [shape = 'u8[512]{0}', space=vmem, size = 0x400, scoped, tag = 'input window, operand 8, single buffered']
    #allocation10 [shape = 'u8[393216]{0}', space=vmem, size = 0x60000, scoped, tag = 'input window, operand 10, single buffered']
    #allocation11 [shape = 's32[1]{0}', space=sflag, size = 0x4, scoped, tag = 'scoped memory for _forward_impl.1']
    #allocation12 [shape = 'u8[1536]{0}', space=vmem, size = 0x800, scoped, tag = 'input window, operand 11, single buffered']
    #allocation13 [shape = 'u8[512]{0}', space=vmem, size = 0x400, scoped, tag = 'input window, operand 13, single buffered']
    #allocation14 [shape = 's32[1]{0}', space=sflag, size = 0x4, scoped, tag = 'scoped memory for _forward_impl.1']
    %19 = vsyncpa [#allocation3], 0
    %20 = vsyncpa [#allocation5], 0
    %21 = vsyncpa [#allocation8], 0
    %22 = vsyncpa [#allocation11], 0
    %23 = vsyncpa [#allocation14], 0
    // Predicated region
    $region2: #{_forward_impl.1} parent=1 // pred_check
      _
    $region3: #{_forward_impl.1} parent=1 // pred_check_branch
      %25 = sbr.rel (0) target = $region5
    $region4: #{_forward_impl.1} parent=1 // pred_region
      _
    $region5: #{_forward_impl.1} parent=1 // pred_fallthru
      _
    // Predicated region
    $region6: #{_forward_impl.1} parent=1 // pred_check
      _
    $region7: #{_forward_impl.1} parent=1 // pred_check_branch
      %27 = sbr.rel (0) target = $region9
    $region8: #{_forward_impl.1} parent=1 // pred_region
      %29 = vsyncadd [#allocation3], 0
      %s30 = sshll.u32 %s1, 4
      %s31 = int_to_ptr.hbm [resolvable:$true] %s30
      %s32 = sshll.u32 [#allocation2], 4
      %s33 = int_to_ptr.vmem [resolvable:$true] %s32
      %38 = dma.hbm_to_vmem [thread:$0]  %s31, 6144, %s33, [#allocation3], 64, 64, 4
    $region9: #{_forward_impl.1} parent=1 // pred_fallthru
      _
    // Predicated region
    $region10: #{_forward_impl.1} parent=1 // pred_check
      _
    $region11: #{_forward_impl.1} parent=1 // pred_check_branch
      %40 = sbr.rel (0) target = $region13
    $region12: #{_forward_impl.1} parent=1 // pred_region
      %42 = vsyncadd [#allocation5], 0
      %s43 = sshll.u32 %s2, 4
      %s44 = int_to_ptr.hbm [resolvable:$true] %s43
      %s45 = sshll.u32 [#allocation4], 4
      %s46 = int_to_ptr.vmem [resolvable:$true] %s45
      %51 = dma.hbm_to_vmem [thread:$0]  %s44, 4096, %s46, [#allocation5], 128, 128, 8
    $region13: #{_forward_impl.1} parent=1 // pred_fallthru
      _
    // Predicated region
    $region14: #{_forward_impl.1} parent=1 // pred_check
      _
    $region15: #{_forward_impl.1} parent=1 // pred_check_branch
      %53 = sbr.rel (0) target = $region17
    $region16: #{_forward_impl.1} parent=1 // pred_region
      _
    $region17: #{_forward_impl.1} parent=1 // pred_fallthru
      _
    // Predicated region
    $region18: #{_forward_impl.1} parent=1 // pred_check
      _
    $region19: #{_forward_impl.1} parent=1 // pred_check_branch
      %55 = sbr.rel (0) target = $region21
    $region20: #{_forward_impl.1} parent=1 // pred_region
      _
    $region21: #{_forward_impl.1} parent=1 // pred_fallthru
      _
    // Predicated region
    $region22: #{_forward_impl.1} parent=1 // pred_check
      _
    $region23: #{_forward_impl.1} parent=1 // pred_check_branch
      %57 = sbr.rel (0) target = $region25
    $region24: #{_forward_impl.1} parent=1 // pred_region
      %59 = vsyncadd [#allocation5], 0
      %s60 = sshll.u32 %s5, 4
      %s61 = int_to_ptr.hbm [resolvable:$true] %s60
      %s62 = sshll.u32 [#allocation6], 4
      %s63 = int_to_ptr.vmem [resolvable:$true] %s62
      %68 = dma.hbm_to_vmem [thread:$0]  %s61, 61440, %s63, [#allocation5], 192, 192, 12
    $region25: #{_forward_impl.1} parent=1 // pred_fallthru
      _
    // Predicated region
    $region26: #{_forward_impl.1} parent=1 // pred_check
      _
    $region27: #{_forward_impl.1} parent=1 // pred_check_branch
      %70 = sbr.rel (0) target = $region29
    $region28: #{_forward_impl.1} parent=1 // pred_region
      %72 = vsyncadd [#allocation8], 0
      %s74 = sshll.u32 %s6, 4
      %s75 = int_to_ptr.hbm [resolvable:$true] %s74
      %s76 = sshll.u32 [#allocation7], 4
      %s77 = int_to_ptr.vmem [resolvable:$true] %s76
      %79 = dma.hbm_to_vmem [thread:$0]  %s75, 48, %s77, [#allocation8]
    $region29: #{_forward_impl.1} parent=1 // pred_fallthru
      _
    // Predicated region
    $region30: #{_forward_impl.1} parent=1 // pred_check
      _
    $region31: #{_forward_impl.1} parent=1 // pred_check_branch
      %81 = sbr.rel (0) target = $region33
    $region32: #{_forward_impl.1} parent=1 // pred_region
      _
    $region33: #{_forward_impl.1} parent=1 // pred_fallthru
      _
    // Predicated region
    $region34: #{_forward_impl.1} parent=1 // pred_check
      _
    $region35: #{_forward_impl.1} parent=1 // pred_check_branch
      %83 = sbr.rel (0) target = $region37
    $region36: #{_forward_impl.1} parent=1 // pred_region
      %85 = vsyncadd [#allocation8], 0
      %s87 = sshll.u32 %s8, 4
      %s88 = int_to_ptr.hbm [resolvable:$true] %s87
      %s89 = sshll.u32 [#allocation9], 4
      %s90 = int_to_ptr.vmem [resolvable:$true] %s89
      %92 = dma.hbm_to_vmem [thread:$0]  %s88, 16, %s90, [#allocation8]
    $region37: #{_forward_impl.1} parent=1 // pred_fallthru
      _
    // Predicated region
    $region38: #{_forward_impl.1} parent=1 // pred_check
      _
    $region39: #{_forward_impl.1} parent=1 // pred_check_branch
      %94 = sbr.rel (0) target = $region41
    $region40: #{_forward_impl.1} parent=1 // pred_region
      _
    $region41: #{_forward_impl.1} parent=1 // pred_fallthru
      _
    // Predicated region
    $region42: #{_forward_impl.1} parent=1 // pred_check
      _
    $region43: #{_forward_impl.1} parent=1 // pred_check_branch
      %96 = sbr.rel (0) target = $region45
    $region44: #{_forward_impl.1} parent=1 // pred_region
      %98 = vsyncadd [#allocation11], 0
      %s99 = sshll.u32 %s10, 4
      %s100 = int_to_ptr.hbm [resolvable:$true] %s99
      %s101 = sshll.u32 [#allocation10], 4
      %s102 = int_to_ptr.vmem [resolvable:$true] %s101
      %107 = dma.hbm_to_vmem [thread:$0]  %s100, 12288, %s102, [#allocation11], 192, 192, 12
    $region45: #{_forward_impl.1} parent=1 // pred_fallthru
      _
    // Predicated region
    $region46: #{_forward_impl.1} parent=1 // pred_check
      _
    $region47: #{_forward_impl.1} parent=1 // pred_check_branch
      %109 = sbr.rel (0) target = $region49
    $region48: #{_forward_impl.1} parent=1 // pred_region
      %111 = vsyncadd [#allocation11], 0
      %s113 = sshll.u32 %s11, 4
      %s114 = int_to_ptr.hbm [resolvable:$true] %s113
      %s115 = sshll.u32 [#allocation12], 4
      %s116 = int_to_ptr.vmem [resolvable:$true] %s115
      %118 = dma.hbm_to_vmem [thread:$0]  %s114, 48, %s116, [#allocation11]
    $region49: #{_forward_impl.1} parent=1 // pred_fallthru
      _
    // Predicated region
    $region50: #{_forward_impl.1} parent=1 // pred_check
      _
    $region51: #{_forward_impl.1} parent=1 // pred_check_branch
      %120 = sbr.rel (0) target = $region53
    $region52: #{_forward_impl.1} parent=1 // pred_region
      _
    $region53: #{_forward_impl.1} parent=1 // pred_fallthru
      _
    // Predicated region
    $region54: #{_forward_impl.1} parent=1 // pred_check
      _
    $region55: #{_forward_impl.1} parent=1 // pred_check_branch
      %122 = sbr.rel (0) target = $region57
    $region56: #{_forward_impl.1} parent=1 // pred_region
      %124 = vsyncadd [#allocation14], 0
      %s126 = sshll.u32 %s13, 4
      %s127 = int_to_ptr.hbm [resolvable:$true] %s126
      %s128 = sshll.u32 [#allocation13], 4
      %s129 = int_to_ptr.vmem [resolvable:$true] %s128
      %131 = dma.hbm_to_vmem [thread:$0]  %s127, 16, %s129, [#allocation14]
    $region57: #{_forward_impl.1} parent=1 // pred_fallthru
      _
    // Predicated region
    $region58: #{_forward_impl.1} parent=1 // pred_check
      _
    $region59: #{_forward_impl.1} parent=1 // pred_check_branch
      %133 = sbr.rel (0) target = $region61
    $region60: #{_forward_impl.1} parent=1 // pred_region
      %135 = dma.done [#allocation3], 6144
    $region61: #{_forward_impl.1} parent=1 // pred_fallthru
      _
    // Predicated region
    $region62: #{_forward_impl.1} parent=1 // pred_check
      _
    $region63: #{_forward_impl.1} parent=1 // pred_check_branch
      %137 = sbr.rel (0) target = $region65
    $region64: #{_forward_impl.1} parent=1 // pred_region
      %139 = dma.done [#allocation5], 4096
    $region65: #{_forward_impl.1} parent=1 // pred_fallthru
      _
    // Predicated region
    $region66: #{_forward_impl.1} parent=1 // pred_check
      _
    $region67: #{_forward_impl.1} parent=1 // pred_check_branch
      %141 = sbr.rel (0) target = $region69
    $region68: #{_forward_impl.1} parent=1 // pred_region
      %143 = dma.done [#allocation5], 61440
    $region69: #{_forward_impl.1} parent=1 // pred_fallthru
      _
    // Predicated region
    $region70: #{_forward_impl.1} parent=1 // pred_check
      _
    $region71: #{_forward_impl.1} parent=1 // pred_check_branch
      %145 = sbr.rel (0) target = $region73
    $region72: #{_forward_impl.1} parent=1 // pred_region
      %147 = dma.done [#allocation8], 48
    $region73: #{_forward_impl.1} parent=1 // pred_fallthru
      _
    // Predicated region
    $region74: #{_forward_impl.1} parent=1 // pred_check
      _
    $region75: #{_forward_impl.1} parent=1 // pred_check_branch
      %149 = sbr.rel (0) target = $region77
    $region76: #{_forward_impl.1} parent=1 // pred_region
      %151 = dma.done [#allocation8], 16
    $region77: #{_forward_impl.1} parent=1 // pred_fallthru
      _
    // Predicated region
    $region78: #{_forward_impl.1} parent=1 // pred_check
      _
    $region79: #{_forward_impl.1} parent=1 // pred_check_branch
      %153 = sbr.rel (0) target = $region81
    $region80: #{_forward_impl.1} parent=1 // pred_region
      %155 = dma.done [#allocation11], 12288
    $region81: #{_forward_impl.1} parent=1 // pred_fallthru
      _
    // Predicated region
    $region82: #{_forward_impl.1} parent=1 // pred_check
      _
    $region83: #{_forward_impl.1} parent=1 // pred_check_branch
      %157 = sbr.rel (0) target = $region85
    $region84: #{_forward_impl.1} parent=1 // pred_region
      %159 = dma.done [#allocation11], 48
    $region85: #{_forward_impl.1} parent=1 // pred_fallthru
      _
    // Predicated region
    $region86: #{_forward_impl.1} parent=1 // pred_check
      _
    $region87: #{_forward_impl.1} parent=1 // pred_check_branch
      %161 = sbr.rel (0) target = $region89
    $region88: #{_forward_impl.1} parent=1 // pred_region
      %163 = dma.done [#allocation14], 16
    $region89: #{_forward_impl.1} parent=1 // pred_fallthru
      _
    %v164 = vld [vmem:[%s0] sm:$0xff]
    %v165 = vld [vmem:[%s0 + $0x8] sm:$0xff]
    %v166 = vld [vmem:[%s0 + $0x10] sm:$0xff]
    %v167 = vld [vmem:[%s0 + $0x18] sm:$0xff]
    %v168 = vld [vmem:[%s0 + $0x20] sm:$0xff]
    %v169 = vld [vmem:[%s0 + $0x28] sm:$0xff]
    %v170 = vld [vmem:[#allocation2] sm:$0xf]
    %v171 = vld [vmem:[#allocation2 + $0x4] sm:$0xf]
    %v172 = vld [vmem:[#allocation2 + $0x8] sm:$0xf]
    %v173 = vld [vmem:[#allocation2 + $0xc] sm:$0xf]
    %v174 = vld [vmem:[#allocation2 + $0x10] sm:$0xf]
    %v175 = vld [vmem:[#allocation2 + $0x14] sm:$0xf]
    %v176 = vld [vmem:[#allocation2 + $0x18] sm:$0xf]
    %v177 = vld [vmem:[#allocation2 + $0x1c] sm:$0xf]
    %v178 = vld [vmem:[#allocation2 + $0x20] sm:$0xf]
    %v179 = vld [vmem:[#allocation2 + $0x24] sm:$0xf]
    %v180 = vld [vmem:[#allocation2 + $0x28] sm:$0xf]
    %v181 = vld [vmem:[#allocation2 + $0x2c] sm:$0xf]
    %v182 = vld [vmem:[#allocation2 + $0x30] sm:$0xf]
    %v183 = vld [vmem:[#allocation2 + $0x34] sm:$0xf]
    %v184 = vld [vmem:[#allocation2 + $0x38] sm:$0xf]
    %v185 = vld [vmem:[#allocation2 + $0x3c] sm:$0xf]
    %v186 = vld [vmem:[#allocation2 + $0x40] sm:$0xf]
    %v187 = vld [vmem:[#allocation2 + $0x44] sm:$0xf]
    %v188 = vld [vmem:[#allocation2 + $0x48] sm:$0xf]
    %v189 = vld [vmem:[#allocation2 + $0x4c] sm:$0xf]
    %v190 = vld [vmem:[#allocation2 + $0x50] sm:$0xf]
    %v191 = vld [vmem:[#allocation2 + $0x54] sm:$0xf]
    %v192 = vld [vmem:[#allocation2 + $0x58] sm:$0xf]
    %v193 = vld [vmem:[#allocation2 + $0x5c] sm:$0xf]
    %v194 = vld [vmem:[#allocation2 + $0x60] sm:$0xf]
    %v195 = vld [vmem:[#allocation2 + $0x64] sm:$0xf]
    %v196 = vld [vmem:[#allocation2 + $0x68] sm:$0xf]
    %v197 = vld [vmem:[#allocation2 + $0x6c] sm:$0xf]
    %v198 = vld [vmem:[#allocation2 + $0x70] sm:$0xf]
    %v199 = vld [vmem:[#allocation2 + $0x74] sm:$0xf]
    %v200 = vld [vmem:[#allocation2 + $0x78] sm:$0xf]
    %v201 = vld [vmem:[#allocation2 + $0x7c] sm:$0xf]
    %v202 = vld [vmem:[#allocation2 + $0x80] sm:$0xf]
    %v203 = vld [vmem:[#allocation2 + $0x84] sm:$0xf]
    %v204 = vld [vmem:[#allocation2 + $0x88] sm:$0xf]
    %v205 = vld [vmem:[#allocation2 + $0x8c] sm:$0xf]
    %v206 = vld [vmem:[#allocation2 + $0x90] sm:$0xf]
    %v207 = vld [vmem:[#allocation2 + $0x94] sm:$0xf]
    %v208 = vld [vmem:[#allocation2 + $0x98] sm:$0xf]
    %v209 = vld [vmem:[#allocation2 + $0x9c] sm:$0xf]
    %v210 = vld [vmem:[#allocation2 + $0xa0] sm:$0xf]
    %v211 = vld [vmem:[#allocation2 + $0xa4] sm:$0xf]
    %v212 = vld [vmem:[#allocation2 + $0xa8] sm:$0xf]
    %v213 = vld [vmem:[#allocation2 + $0xac] sm:$0xf]
    %v214 = vld [vmem:[#allocation2 + $0xb0] sm:$0xf]
    %v215 = vld [vmem:[#allocation2 + $0xb4] sm:$0xf]
    %v216 = vld [vmem:[#allocation2 + $0xb8] sm:$0xf]
    %v217 = vld [vmem:[#allocation2 + $0xbc] sm:$0xf]
    %v218 = vld [vmem:[#allocation2 + $0xc0] sm:$0xf]
    %v219 = vld [vmem:[#allocation2 + $0xc4] sm:$0xf]
    %v220 = vld [vmem:[#allocation2 + $0xc8] sm:$0xf]
    %v221 = vld [vmem:[#allocation2 + $0xcc] sm:$0xf]
    %v222 = vld [vmem:[#allocation2 + $0xd0] sm:$0xf]
    %v223 = vld [vmem:[#allocation2 + $0xd4] sm:$0xf]
    %v224 = vld [vmem:[#allocation2 + $0xd8] sm:$0xf]
    %v225 = vld [vmem:[#allocation2 + $0xdc] sm:$0xf]
    %v226 = vld [vmem:[#allocation2 + $0xe0] sm:$0xf]
    %v227 = vld [vmem:[#allocation2 + $0xe4] sm:$0xf]
    %v228 = vld [vmem:[#allocation2 + $0xe8] sm:$0xf]
    %v229 = vld [vmem:[#allocation2 + $0xec] sm:$0xf]
    %v230 = vld [vmem:[#allocation2 + $0xf0] sm:$0xf]
    %v231 = vld [vmem:[#allocation2 + $0xf4] sm:$0xf]
    %v232 = vld [vmem:[#allocation2 + $0xf8] sm:$0xf]
    %v233 = vld [vmem:[#allocation2 + $0xfc] sm:$0xf]
    %v234 = vld [vmem:[#allocation2 + $0x100] sm:$0xf]
    %v235 = vld [vmem:[#allocation2 + $0x104] sm:$0xf]
    %v236 = vld [vmem:[#allocation2 + $0x108] sm:$0xf]
    %v237 = vld [vmem:[#allocation2 + $0x10c] sm:$0xf]
    %v238 = vld [vmem:[#allocation2 + $0x110] sm:$0xf]
    %v239 = vld [vmem:[#allocation2 + $0x114] sm:$0xf]
    %v240 = vld [vmem:[#allocation2 + $0x118] sm:$0xf]
    %v241 = vld [vmem:[#allocation2 + $0x11c] sm:$0xf]
    %v242 = vld [vmem:[#allocation2 + $0x120] sm:$0xf]
    %v243 = vld [vmem:[#allocation2 + $0x124] sm:$0xf]
    %v244 = vld [vmem:[#allocation2 + $0x128] sm:$0xf]
    %v245 = vld [vmem:[#allocation2 + $0x12c] sm:$0xf]
    %v246 = vld [vmem:[#allocation2 + $0x130] sm:$0xf]
    %v247 = vld [vmem:[#allocation2 + $0x134] sm:$0xf]
    %v248 = vld [vmem:[#allocation2 + $0x138] sm:$0xf]
    %v249 = vld [vmem:[#allocation2 + $0x13c] sm:$0xf]
    %v250 = vld [vmem:[#allocation2 + $0x140] sm:$0xf]
    %v251 = vld [vmem:[#allocation2 + $0x144] sm:$0xf]
    %v252 = vld [vmem:[#allocation2 + $0x148] sm:$0xf]
    %v253 = vld [vmem:[#allocation2 + $0x14c] sm:$0xf]
    %v254 = vld [vmem:[#allocation2 + $0x150] sm:$0xf]
    %v255 = vld [vmem:[#allocation2 + $0x154] sm:$0xf]
    %v256 = vld [vmem:[#allocation2 + $0x158] sm:$0xf]
    %v257 = vld [vmem:[#allocation2 + $0x15c] sm:$0xf]
    %v258 = vld [vmem:[#allocation2 + $0x160] sm:$0xf]
    %v259 = vld [vmem:[#allocation2 + $0x164] sm:$0xf]
    %v260 = vld [vmem:[#allocation2 + $0x168] sm:$0xf]
    %v261 = vld [vmem:[#allocation2 + $0x16c] sm:$0xf]
    %v262 = vld [vmem:[#allocation2 + $0x170] sm:$0xf]
    %v263 = vld [vmem:[#allocation2 + $0x174] sm:$0xf]
    %v264 = vld [vmem:[#allocation2 + $0x178] sm:$0xf]
    %v265 = vld [vmem:[#allocation2 + $0x17c] sm:$0xf]
    %v272 = vunpack.c.l.b16 %v164
    %v273 = vunpack.c.h.b16 %v164
    %v274 = vunpack.c.l.b16 %v165
    %v275 = vunpack.c.h.b16 %v165
    %v276 = vunpack.c.l.b16 %v166
    %v277 = vunpack.c.h.b16 %v166
    %v278 = vunpack.c.l.b16 %v167
    %v279 = vunpack.c.h.b16 %v167
    %v280 = vunpack.c.l.b16 %v168
    %v281 = vunpack.c.h.b16 %v168
    %v282 = vunpack.c.l.b16 %v169
    %v283 = vunpack.c.h.b16 %v169
    %v284 = vpack.c.b16 %v278, %v272
    %v285 = vpack.c.b16 %v279, %v273
    %v286 = vpack.c.b16 %v280, %v274
    %v287 = vpack.c.b16 %v281, %v275
    %v288 = vpack.c.b16 %v282, %v276
    %v289 = vpack.c.b16 %v283, %v277
    %v392 = vunpack.c.l.b16 %v170
    %v393 = vunpack.c.l.b16 %v171
    %v394 = vunpack.c.l.b16 %v172
    %v395 = vunpack.c.l.b16 %v173
    %v396 = vunpack.c.l.b16 %v174
    %v397 = vunpack.c.l.b16 %v175
    %v398 = vunpack.c.l.b16 %v176
    %v399 = vunpack.c.l.b16 %v177
    %v400 = vunpack.c.l.b16 %v178
    %v401 = vunpack.c.l.b16 %v179
    %v402 = vunpack.c.l.b16 %v180
    %v403 = vunpack.c.l.b16 %v181
    %v404 = vunpack.c.l.b16 %v182
    %v405 = vunpack.c.l.b16 %v183
    %v406 = vunpack.c.l.b16 %v184
    %v407 = vunpack.c.l.b16 %v185
    %v408 = vunpack.c.l.b16 %v186
    %v409 = vunpack.c.l.b16 %v187
    %v410 = vunpack.c.l.b16 %v188
    %v411 = vunpack.c.l.b16 %v189
    %v412 = vunpack.c.l.b16 %v190
    %v413 = vunpack.c.l.b16 %v191
    %v414 = vunpack.c.l.b16 %v192
    %v415 = vunpack.c.l.b16 %v193
    %v416 = vunpack.c.l.b16 %v194
    %v417 = vunpack.c.l.b16 %v195
    %v418 = vunpack.c.l.b16 %v196
    %v419 = vunpack.c.l.b16 %v197
    %v420 = vunpack.c.l.b16 %v198
    %v421 = vunpack.c.l.b16 %v199
    %v422 = vunpack.c.l.b16 %v200
    %v423 = vunpack.c.l.b16 %v201
    %v424 = vunpack.c.l.b16 %v202
    %v425 = vunpack.c.l.b16 %v203
    %v426 = vunpack.c.l.b16 %v204
    %v427 = vunpack.c.l.b16 %v205
    %v428 = vunpack.c.l.b16 %v206
    %v429 = vunpack.c.l.b16 %v207
    %v430 = vunpack.c.l.b16 %v208
    %v431 = vunpack.c.l.b16 %v209
    %v432 = vunpack.c.l.b16 %v210
    %v433 = vunpack.c.l.b16 %v211
    %v434 = vunpack.c.l.b16 %v212
    %v435 = vunpack.c.l.b16 %v213
    %v436 = vunpack.c.l.b16 %v214
    %v437 = vunpack.c.l.b16 %v215
    %v438 = vunpack.c.l.b16 %v216
    %v439 = vunpack.c.l.b16 %v217
    %v440 = vunpack.c.l.b16 %v218
    %v441 = vunpack.c.l.b16 %v219
    %v442 = vunpack.c.l.b16 %v220
    %v443 = vunpack.c.l.b16 %v221
    %v444 = vunpack.c.l.b16 %v222
    %v445 = vunpack.c.l.b16 %v223
    %v446 = vunpack.c.l.b16 %v224
    %v447 = vunpack.c.l.b16 %v225
    %v448 = vunpack.c.l.b16 %v226
    %v449 = vunpack.c.l.b16 %v227
    %v450 = vunpack.c.l.b16 %v228
    %v451 = vunpack.c.l.b16 %v229
    %v452 = vunpack.c.l.b16 %v230
    %v453 = vunpack.c.l.b16 %v231
    %v454 = vunpack.c.l.b16 %v232
    %v455 = vunpack.c.l.b16 %v233
    %v456 = vunpack.c.l.b16 %v234
    %v457 = vunpack.c.l.b16 %v235
    %v458 = vunpack.c.l.b16 %v236
    %v459 = vunpack.c.l.b16 %v237
    %v460 = vunpack.c.l.b16 %v238
    %v461 = vunpack.c.l.b16 %v239
    %v462 = vunpack.c.l.b16 %v240
    %v463 = vunpack.c.l.b16 %v241
    %v464 = vunpack.c.l.b16 %v242
    %v465 = vunpack.c.l.b16 %v243
    %v466 = vunpack.c.l.b16 %v244
    %v467 = vunpack.c.l.b16 %v245
    %v468 = vunpack.c.l.b16 %v246
    %v469 = vunpack.c.l.b16 %v247
    %v470 = vunpack.c.l.b16 %v248
    %v471 = vunpack.c.l.b16 %v249
    %v472 = vunpack.c.l.b16 %v250
    %v473 = vunpack.c.l.b16 %v251
    %v474 = vunpack.c.l.b16 %v252
    %v475 = vunpack.c.l.b16 %v253
    %v476 = vunpack.c.l.b16 %v254
    %v477 = vunpack.c.l.b16 %v255
    %v478 = vunpack.c.l.b16 %v256
    %v479 = vunpack.c.l.b16 %v257
    %v480 = vunpack.c.l.b16 %v258
    %v481 = vunpack.c.l.b16 %v259
    %v482 = vunpack.c.l.b16 %v260
    %v483 = vunpack.c.l.b16 %v261
    %v484 = vunpack.c.l.b16 %v262
    %v485 = vunpack.c.l.b16 %v263
    %v486 = vunpack.c.l.b16 %v264
    %v487 = vunpack.c.l.b16 %v265
    %v488 = vpack.c.b16 %v393, %v392
    %v489 = vpack.c.b16 %v395, %v394
    %v490 = vpack.c.b16 %v397, %v396
    %v491 = vpack.c.b16 %v399, %v398
    %v492 = vpack.c.b16 %v401, %v400
    %v493 = vpack.c.b16 %v403, %v402
    %v494 = vpack.c.b16 %v405, %v404
    %v495 = vpack.c.b16 %v407, %v406
    %v496 = vpack.c.b16 %v409, %v408
    %v497 = vpack.c.b16 %v411, %v410
    %v498 = vpack.c.b16 %v413, %v412
    %v499 = vpack.c.b16 %v415, %v414
    %v500 = vpack.c.b16 %v417, %v416
    %v501 = vpack.c.b16 %v419, %v418
    %v502 = vpack.c.b16 %v421, %v420
    %v503 = vpack.c.b16 %v423, %v422
    %v504 = vpack.c.b16 %v425, %v424
    %v505 = vpack.c.b16 %v427, %v426
    %v506 = vpack.c.b16 %v429, %v428
    %v507 = vpack.c.b16 %v431, %v430
    %v508 = vpack.c.b16 %v433, %v432
    %v509 = vpack.c.b16 %v435, %v434
    %v510 = vpack.c.b16 %v437, %v436
    %v511 = vpack.c.b16 %v439, %v438
    %v512 = vpack.c.b16 %v441, %v440
    %v513 = vpack.c.b16 %v443, %v442
    %v514 = vpack.c.b16 %v445, %v444
    %v515 = vpack.c.b16 %v447, %v446
    %v516 = vpack.c.b16 %v449, %v448
    %v517 = vpack.c.b16 %v451, %v450
    %v518 = vpack.c.b16 %v453, %v452
    %v519 = vpack.c.b16 %v455, %v454
    %v520 = vpack.c.b16 %v457, %v456
    %v521 = vpack.c.b16 %v459, %v458
    %v522 = vpack.c.b16 %v461, %v460
    %v523 = vpack.c.b16 %v463, %v462
    %v524 = vpack.c.b16 %v465, %v464
    %v525 = vpack.c.b16 %v467, %v466
    %v526 = vpack.c.b16 %v469, %v468
    %v527 = vpack.c.b16 %v471, %v470
    %v528 = vpack.c.b16 %v473, %v472
    %v529 = vpack.c.b16 %v475, %v474
    %v530 = vpack.c.b16 %v477, %v476
    %v531 = vpack.c.b16 %v479, %v478
    %v532 = vpack.c.b16 %v481, %v480
    %v533 = vpack.c.b16 %v483, %v482
    %v534 = vpack.c.b16 %v485, %v484
    %v535 = vpack.c.b16 %v487, %v486
    %584 = vmatpush.bf16.msra.mxu0 %v495
    %585 = vmatpush.bf16.msra.mxu0 %v494
    %586 = vmatpush.bf16.msra.mxu0 %v493
    %587 = vmatpush.bf16.msra.mxu0 %v492
    %588 = vmatpush.bf16.msra.mxu0 %v491
    %589 = vmatpush.bf16.msra.mxu0 %v490
    %590 = vmatpush.bf16.msra.mxu0 %v489
    %591 = vmatpush.bf16.msra.mxu0 %v488
    %592 = vmatmul.bf16.gmra.mxu0 %v284
    %v593 = vpop.f32.mrf.mxu0
    %v594 = vadd.f32 0.0, %v593
    %v595 = vpop.f32.mrf.mxu0
    %v596 = vadd.f32 0.0, %v595
    %597 = vdwg.mxu0
    %598 = vmatpush.bf16.msra.mxu0 %v503
    %599 = vmatpush.bf16.msra.mxu0 %v502
    %600 = vmatpush.bf16.msra.mxu0 %v501
    %601 = vmatpush.bf16.msra.mxu0 %v500
    %602 = vmatpush.bf16.msra.mxu0 %v499
    %603 = vmatpush.bf16.msra.mxu0 %v498
    %604 = vmatpush.bf16.msra.mxu0 %v497
    %605 = vmatpush.bf16.msra.mxu0 %v496
    %606 = vmatmul.bf16.gmra.mxu0 %v285
    %v607 = vpop.f32.mrf.mxu0
    %v608 = vadd.f32 %v594, %v607
    %v609 = vpop.f32.mrf.mxu0
    %v610 = vadd.f32 %v596, %v609
    %611 = vdwg.mxu0
    %612 = vmatpush.bf16.msra.mxu0 %v511
    %613 = vmatpush.bf16.msra.mxu0 %v510
    %614 = vmatpush.bf16.msra.mxu0 %v509
    %615 = vmatpush.bf16.msra.mxu0 %v508
    %616 = vmatpush.bf16.msra.mxu0 %v507
    %617 = vmatpush.bf16.msra.mxu0 %v506
    %618 = vmatpush.bf16.msra.mxu0 %v505
    %619 = vmatpush.bf16.msra.mxu0 %v504
    %620 = vmatmul.bf16.gmra.mxu0 %v286
    %v621 = vpop.f32.mrf.mxu0
    %v622 = vadd.f32 %v608, %v621
    %v623 = vpop.f32.mrf.mxu0
    %v624 = vadd.f32 %v610, %v623
    %625 = vdwg.mxu0
    %626 = vmatpush.bf16.msra.mxu0 %v519
    %627 = vmatpush.bf16.msra.mxu0 %v518
    %628 = vmatpush.bf16.msra.mxu0 %v517
    %629 = vmatpush.bf16.msra.mxu0 %v516
    %630 = vmatpush.bf16.msra.mxu0 %v515
    %631 = vmatpush.bf16.msra.mxu0 %v514
    %632 = vmatpush.bf16.msra.mxu0 %v513
    %633 = vmatpush.bf16.msra.mxu0 %v512
    %634 = vmatmul.bf16.gmra.mxu0 %v287
    %v635 = vpop.f32.mrf.mxu0
    %v636 = vadd.f32 %v622, %v635
    %v637 = vpop.f32.mrf.mxu0
    %v638 = vadd.f32 %v624, %v637
    %639 = vdwg.mxu0
    %640 = vmatpush.bf16.msra.mxu0 %v527
    %641 = vmatpush.bf16.msra.mxu0 %v526
    %642 = vmatpush.bf16.msra.mxu0 %v525
    %643 = vmatpush.bf16.msra.mxu0 %v524
    %644 = vmatpush.bf16.msra.mxu0 %v523
    %645 = vmatpush.bf16.msra.mxu0 %v522
    %646 = vmatpush.bf16.msra.mxu0 %v521
    %647 = vmatpush.bf16.msra.mxu0 %v520
    %648 = vmatmul.bf16.gmra.mxu0 %v288
    %v649 = vpop.f32.mrf.mxu0
    %v650 = vadd.f32 %v636, %v649
    %v651 = vpop.f32.mrf.mxu0
    %v652 = vadd.f32 %v638, %v651
    %653 = vdwg.mxu0
    %654 = vmatpush.bf16.msra.mxu0 %v535
    %655 = vmatpush.bf16.msra.mxu0 %v534
    %656 = vmatpush.bf16.msra.mxu0 %v533
    %657 = vmatpush.bf16.msra.mxu0 %v532
    %658 = vmatpush.bf16.msra.mxu0 %v531
    %659 = vmatpush.bf16.msra.mxu0 %v530
    %660 = vmatpush.bf16.msra.mxu0 %v529
    %661 = vmatpush.bf16.msra.mxu0 %v528
    %662 = vmatmul.bf16.gmra.mxu0 %v289
    %v663 = vpop.f32.mrf.mxu0
    %v664 = vadd.f32 %v650, %v663
    %v665 = vpop.f32.mrf.mxu0
    %v666 = vadd.f32 %v652, %v665
    %667 = vdwg.mxu0
    %v668 = vmul.f32 %v664, %v664
    %v669 = vmul.f32 %v666, %v666
    %670 = vadd.xlane.f32.xlu0 %v668
    %v671 = vpop.xlane.xlu0 %670
    %672 = vadd.xlane.f32.xlu0 %v669
    %v673 = vpop.xlane.xlu0 %672
    %v674 = vadd.f32 %v671, 1e-12
    %v675 = vadd.f32 %v673, 1e-12
    %v676 = vrsqrt.pop %v674
    %v677 = vmul.f32 %v676, %v674
    %v678 = vmul.f32 %v677, %v676
    %v679 = vmul.f32 0.5, %v678
    %v680 = vsub.f32 1.5, %v679
    %v681 = vmul.f32 %v676, %v680
    %vm682 = vweird.f32 %v674
    %vm683 = vweird.f32 %v676
    %vm684 = vmor %vm682, %vm683
    %v685 = vsel %vm684, %v676, %v681
    %v686 = vrsqrt.pop %v675
    %v687 = vmul.f32 %v686, %v675
    %v688 = vmul.f32 %v687, %v686
    %v689 = vmul.f32 0.5, %v688
    %v690 = vsub.f32 1.5, %v689
    %v691 = vmul.f32 %v686, %v690
    %vm692 = vweird.f32 %v675
    %vm693 = vweird.f32 %v686
    %vm694 = vmor %vm692, %vm693
    %v695 = vsel %vm694, %v686, %v691
    %v696 = vmul.f32 %v664, %v685
    %v697 = vmul.f32 %v666, %v695
    %v698 = vld [vmem:[#allocation4] sm:$0xff]
    %v699 = vld [vmem:[#allocation4 + $0x8] sm:$0xff]
    %v700 = vld [vmem:[#allocation4 + $0x10] sm:$0xff]
    %v701 = vld [vmem:[#allocation4 + $0x18] sm:$0xff]
    %v702 = vld [vmem:[#allocation4 + $0x20] sm:$0xff]
    %v703 = vld [vmem:[#allocation4 + $0x28] sm:$0xff]
    %v704 = vld [vmem:[#allocation4 + $0x30] sm:$0xff]
    %v705 = vld [vmem:[#allocation4 + $0x38] sm:$0xff]
    %v706 = vld [vmem:[#allocation4 + $0x40] sm:$0xff]
    %v707 = vld [vmem:[#allocation4 + $0x48] sm:$0xff]
    %v708 = vld [vmem:[#allocation4 + $0x50] sm:$0xff]
    %v709 = vld [vmem:[#allocation4 + $0x58] sm:$0xff]
    %v710 = vld [vmem:[#allocation4 + $0x60] sm:$0xff]
    %v711 = vld [vmem:[#allocation4 + $0x68] sm:$0xff]
    %v712 = vld [vmem:[#allocation4 + $0x70] sm:$0xff]
    %v713 = vld [vmem:[#allocation4 + $0x78] sm:$0xff]
    %v714 = vld [vmem:[#allocation4 + $0x80] sm:$0xff]
    %v715 = vld [vmem:[#allocation4 + $0x88] sm:$0xff]
    %v716 = vld [vmem:[#allocation4 + $0x90] sm:$0xff]
    %v717 = vld [vmem:[#allocation4 + $0x98] sm:$0xff]
    %v718 = vld [vmem:[#allocation4 + $0xa0] sm:$0xff]
    %v719 = vld [vmem:[#allocation4 + $0xa8] sm:$0xff]
    %v720 = vld [vmem:[#allocation4 + $0xb0] sm:$0xff]
    %v721 = vld [vmem:[#allocation4 + $0xb8] sm:$0xff]
    %v722 = vld [vmem:[#allocation4 + $0xc0] sm:$0xff]
    %v723 = vld [vmem:[#allocation4 + $0xc8] sm:$0xff]
    %v724 = vld [vmem:[#allocation4 + $0xd0] sm:$0xff]
    %v725 = vld [vmem:[#allocation4 + $0xd8] sm:$0xff]
    %v726 = vld [vmem:[#allocation4 + $0xe0] sm:$0xff]
    %v727 = vld [vmem:[#allocation4 + $0xe8] sm:$0xff]
    %v728 = vld [vmem:[#allocation4 + $0xf0] sm:$0xff]
    %v729 = vld [vmem:[#allocation4 + $0xf8] sm:$0xff]
    %730 = vmatpush.msra.mxu0 %v713
    %731 = vmatpush.msra.mxu0 %v712
    %732 = vmatpush.msra.mxu0 %v711
    %733 = vmatpush.msra.mxu0 %v710
    %734 = vmatpush.msra.mxu0 %v709
    %735 = vmatpush.msra.mxu0 %v708
    %736 = vmatpush.msra.mxu0 %v707
    %737 = vmatpush.msra.mxu0 %v706
    %738 = vmatpush.msra.mxu0 %v705
    %739 = vmatpush.msra.mxu0 %v704
    %740 = vmatpush.msra.mxu0 %v703
    %741 = vmatpush.msra.mxu0 %v702
    %742 = vmatpush.msra.mxu0 %v701
    %743 = vmatpush.msra.mxu0 %v700
    %744 = vmatpush.msra.mxu0 %v699
    %745 = vmatpush.msra.mxu0 %v698
    %746 = vmatmul.f32.gmra.mxu0 %v696
    %v747 = vpop.f32.mrf.mxu0
    %v748 = vadd.f32 0.0, %v747
    %749 = vdwg.mxu0
    %750 = vmatpush.msra.mxu0 %v729
    %751 = vmatpush.msra.mxu0 %v728
    %752 = vmatpush.msra.mxu0 %v727
    %753 = vmatpush.msra.mxu0 %v726
    %754 = vmatpush.msra.mxu0 %v725
    %755 = vmatpush.msra.mxu0 %v724
    %756 = vmatpush.msra.mxu0 %v723
    %757 = vmatpush.msra.mxu0 %v722
    %758 = vmatpush.msra.mxu0 %v721
    %759 = vmatpush.msra.mxu0 %v720
    %760 = vmatpush.msra.mxu0 %v719
    %761 = vmatpush.msra.mxu0 %v718
    %762 = vmatpush.msra.mxu0 %v717
    %763 = vmatpush.msra.mxu0 %v716
    %764 = vmatpush.msra.mxu0 %v715
    %765 = vmatpush.msra.mxu0 %v714
    %766 = vmatmul.f32.gmra.mxu0 %v697
    %v767 = vpop.f32.mrf.mxu0
    %v768 = vadd.f32 0.0, %v767
    %769 = vdwg.mxu0
    %v770 = vlaneseq
    %v771 = vand.u32 %v770, 127
    %vm772 = vcmp.lt.s32.totalorder %v771, 25
    %v773 = vsel %vm772, %v748, -1e+30
    %v774 = vsel %vm772, %v768, -1e+30
    %775 = vmax.xlane.f32.xlu0 %v773
    %v776 = vpop.xlane.xlu0 %775
    %777 = vmax.xlane.f32.xlu0 %v774
    %v778 = vpop.xlane.xlu0 %777
    %v779 = vsub.f32 %v773, %v776
    %v780 = vsub.f32 %v774, %v778
    %v781 = vmul.f32 %v779, 1.442695
    %v782 = vpow.pop %v781
    %v783 = vmul.f32 %v780, 1.442695
    %v784 = vpow.pop %v783
    %785 = vadd.xlane.f32.xlu0 %v782
    %v786 = vpop.xlane.xlu0 %785
    %787 = vadd.xlane.f32.xlu0 %v784
    %v788 = vpop.xlane.xlu0 %787
    %v789 = vrcp.pop %v786
    %v790 = vrcp.pop %v788
    %v791 = vmul.f32 %v782, %v789
    %v792 = vmul.f32 %v784, %v790
    %v793 = vld [vmem:[%s3] sm:$0xff]
    %v794 = vld [vmem:[%s3 + $0x8] sm:$0xff]
    %v795 = vld [vmem:[%s3 + $0x10] sm:$0xff]
    %v796 = vld [vmem:[%s3 + $0x18] sm:$0xff]
    %v797 = vld [vmem:[%s3 + $0x20] sm:$0xff]
    %v798 = vld [vmem:[%s3 + $0x28] sm:$0xff]
    %v799 = vld [vmem:[%s3 + $0x30] sm:$0xff]
    %v800 = vld [vmem:[%s3 + $0x38] sm:$0xff]
    %v801 = vld [vmem:[%s3 + $0x40] sm:$0xff]
    %v802 = vld [vmem:[%s3 + $0x48] sm:$0xff]
    %v803 = vld [vmem:[%s3 + $0x50] sm:$0xff]
    %v804 = vld [vmem:[%s3 + $0x58] sm:$0xff]
    %v805 = vld [vmem:[%s3 + $0x60] sm:$0xff]
    %v806 = vld [vmem:[%s3 + $0x68] sm:$0xff]
    %v807 = vld [vmem:[%s3 + $0x70] sm:$0xff]
    %v808 = vld [vmem:[%s3 + $0x78] sm:$0xff]
    %809 = vmatpush.msra.mxu0 %v808
    %810 = vmatpush.msra.mxu0 %v807
    %811 = vmatpush.msra.mxu0 %v806
    %812 = vmatpush.msra.mxu0 %v805
    %813 = vmatpush.msra.mxu0 %v804
    %814 = vmatpush.msra.mxu0 %v803
    %815 = vmatpush.msra.mxu0 %v802
    %816 = vmatpush.msra.mxu0 %v801
    %817 = vmatpush.msra.mxu0 %v800
    %818 = vmatpush.msra.mxu0 %v799
    %819 = vmatpush.msra.mxu0 %v798
    %820 = vmatpush.msra.mxu0 %v797
    %821 = vmatpush.msra.mxu0 %v796
    %822 = vmatpush.msra.mxu0 %v795
    %823 = vmatpush.msra.mxu0 %v794
    %824 = vmatpush.msra.mxu0 %v793
    %825 = vmatmul.f32.gmra.mxu0 %v791
    %v826 = vpop.f32.mrf.mxu0
    %v827 = vadd.f32 0.0, %v826
    %828 = vmatmul.f32.gmra.mxu0 %v792
    %v829 = vpop.f32.mrf.mxu0
    %v830 = vadd.f32 0.0, %v829
    %831 = vdwg.mxu0
    %832 = vadd.xlane.f32.xlu0 %v748
    %v833 = vpop.xlane.xlu0 %832
    %834 = vadd.xlane.f32.xlu0 %v768
    %v835 = vpop.xlane.xlu0 %834
    %v836 = vmul.f32 %v833, 0.04
    %v837 = vmul.f32 %v835, 0.04
    %vm838 = vcmask 15360
    %v839 = vsel %vm838, %v827, 0.0
    %v840 = vrot.slane %v839, 4
    %v841 = vadd.f32 %v839, %v840
    %v842 = vrot.slane %v841, 2
    %v843 = vadd.f32 %v841, %v842
    %v844 = vrot.slane %v843, 1
    %v845 = vadd.f32 %v843, %v844
    %v846 = vsel %vm838, %v830, 0.0
    %v847 = vrot.slane %v846, 4
    %v848 = vadd.f32 %v846, %v847
    %v849 = vrot.slane %v848, 2
    %v850 = vadd.f32 %v848, %v849
    %v851 = vrot.slane %v850, 1
    %v852 = vadd.f32 %v850, %v851
    %v853 = vrcp.pop 8.0
    %v854 = vmul.f32 8.0, %v853
    %v855 = vsub.f32 1.0, %v854
    %v856 = vmul.f32 %v853, %v855
    %v857 = vadd.f32 %v853, %v856
    %vm858 = vweird.f32 %v853
    %v859 = vsel %vm858, %v853, %v857
    %v860 = vmul.f32 %v845, %v859
    %v861 = vmul.f32 %v852, %v859
    %v864 = vperm.slane %v836, %v771
    %v865 = vperm.slane %v837, %v771
    %vm866 = vcmask 1041409
    %v867 = vsel %vm866, %v865, %v864
    %vm869 = vcmask 58368
    %v870 = vsel %vm869, %v867, 0.0
    %871 = vadd.xlane.f32.xlu0 %v870
    %v872 = vpop.xlane.xlu0 %871
    %v873 = vmul.f32 %v872, %v859
    %v876 = vsel %vm866, %v861, %v860
    %v878 = vsel %vm838, %v876, %v873
    %v879 = vld [vmem:[%s4] sm:$0xff]
    %v880 = vld [vmem:[%s4 + $0x8] sm:$0xff]
    %v881 = vld [vmem:[%s4 + $0x10] sm:$0xf]
    %v882 = vld [vmem:[#allocation6] sm:$0xff]
    %v883 = vld [vmem:[#allocation6 + $0x8] sm:$0xf]
    %v884 = vld [vmem:[#allocation6 + $0xc] sm:$0xff]
    %v885 = vld [vmem:[#allocation6 + $0x14] sm:$0xf]
    %v886 = vld [vmem:[#allocation6 + $0x18] sm:$0xff]
    %v887 = vld [vmem:[#allocation6 + $0x20] sm:$0xf]
    %v888 = vld [vmem:[#allocation6 + $0x24] sm:$0xff]
    %v889 = vld [vmem:[#allocation6 + $0x2c] sm:$0xf]
    %v890 = vld [vmem:[#allocation6 + $0x30] sm:$0xff]
    %v891 = vld [vmem:[#allocation6 + $0x38] sm:$0xf]
    %v892 = vld [vmem:[#allocation6 + $0x3c] sm:$0xff]
    %v893 = vld [vmem:[#allocation6 + $0x44] sm:$0xf]
    %v894 = vld [vmem:[#allocation6 + $0x48] sm:$0xff]
    %v895 = vld [vmem:[#allocation6 + $0x50] sm:$0xf]
    %v896 = vld [vmem:[#allocation6 + $0x54] sm:$0xff]
    %v897 = vld [vmem:[#allocation6 + $0x5c] sm:$0xf]
    %v898 = vld [vmem:[#allocation6 + $0x60] sm:$0xff]
    %v899 = vld [vmem:[#allocation6 + $0x68] sm:$0xf]
    %v900 = vld [vmem:[#allocation6 + $0x6c] sm:$0xff]
    %v901 = vld [vmem:[#allocation6 + $0x74] sm:$0xf]
    %v902 = vld [vmem:[#allocation6 + $0x78] sm:$0xff]
    %v903 = vld [vmem:[#allocation6 + $0x80] sm:$0xf]
    %v904 = vld [vmem:[#allocation6 + $0x84] sm:$0xff]
    %v905 = vld [vmem:[#allocation6 + $0x8c] sm:$0xf]
    %v906 = vld [vmem:[#allocation6 + $0x90] sm:$0xff]
    %v907 = vld [vmem:[#allocation6 + $0x98] sm:$0xf]
    %v908 = vld [vmem:[#allocation6 + $0x9c] sm:$0xff]
    %v909 = vld [vmem:[#allocation6 + $0xa4] sm:$0xf]
    %v910 = vld [vmem:[#allocation6 + $0xa8] sm:$0xff]
    %v911 = vld [vmem:[#allocation6 + $0xb0] sm:$0xf]
    %v912 = vld [vmem:[#allocation6 + $0xb4] sm:$0xff]
    %v913 = vld [vmem:[#allocation6 + $0xbc] sm:$0xf]
    %v914 = vld [vmem:[#allocation6 + $0xc0] sm:$0xff]
    %v915 = vld [vmem:[#allocation6 + $0xc8] sm:$0xf]
    %v916 = vld [vmem:[#allocation6 + $0xcc] sm:$0xff]
    %v917 = vld [vmem:[#allocation6 + $0xd4] sm:$0xf]
    %v918 = vld [vmem:[#allocation6 + $0xd8] sm:$0xff]
    %v919 = vld [vmem:[#allocation6 + $0xe0] sm:$0xf]
    %v920 = vld [vmem:[#allocation6 + $0xe4] sm:$0xff]
    %v921 = vld [vmem:[#allocation6 + $0xec] sm:$0xf]
    %v922 = vld [vmem:[#allocation6 + $0xf0] sm:$0xff]
    %v923 = vld [vmem:[#allocation6 + $0xf8] sm:$0xf]
    %v924 = vld [vmem:[#allocation6 + $0xfc] sm:$0xff]
    %v925 = vld [vmem:[#allocation6 + $0x104] sm:$0xf]
    %v926 = vld [vmem:[#allocation6 + $0x108] sm:$0xff]
    %v927 = vld [vmem:[#allocation6 + $0x110] sm:$0xf]
    %v928 = vld [vmem:[#allocation6 + $0x114] sm:$0xff]
    %v929 = vld [vmem:[#allocation6 + $0x11c] sm:$0xf]
    %v930 = vld [vmem:[#allocation6 + $0x120] sm:$0xff]
    %v931 = vld [vmem:[#allocation6 + $0x128] sm:$0xf]
    %v932 = vld [vmem:[#allocation6 + $0x12c] sm:$0xff]
    %v933 = vld [vmem:[#allocation6 + $0x134] sm:$0xf]
    %v934 = vld [vmem:[#allocation6 + $0x138] sm:$0xff]
    %v935 = vld [vmem:[#allocation6 + $0x140] sm:$0xf]
    %v936 = vld [vmem:[#allocation6 + $0x144] sm:$0xff]
    %v937 = vld [vmem:[#allocation6 + $0x14c] sm:$0xf]
    %v938 = vld [vmem:[#allocation6 + $0x150] sm:$0xff]
    %v939 = vld [vmem:[#allocation6 + $0x158] sm:$0xf]
    %v940 = vld [vmem:[#allocation6 + $0x15c] sm:$0xff]
    %v941 = vld [vmem:[#allocation6 + $0x164] sm:$0xf]
    %v942 = vld [vmem:[#allocation6 + $0x168] sm:$0xff]
    %v943 = vld [vmem:[#allocation6 + $0x170] sm:$0xf]
    %v944 = vld [vmem:[#allocation6 + $0x174] sm:$0xff]
    %v945 = vld [vmem:[#allocation6 + $0x17c] sm:$0xf]
    %v946 = vld [vmem:[#allocation6 + $0x180] sm:$0xff]
    %v947 = vld [vmem:[#allocation6 + $0x188] sm:$0xf]
    %v948 = vld [vmem:[#allocation6 + $0x18c] sm:$0xff]
    %v949 = vld [vmem:[#allocation6 + $0x194] sm:$0xf]
    %v950 = vld [vmem:[#allocation6 + $0x198] sm:$0xff]
    %v951 = vld [vmem:[#allocation6 + $0x1a0] sm:$0xf]
    %v952 = vld [vmem:[#allocation6 + $0x1a4] sm:$0xff]
    %v953 = vld [vmem:[#allocation6 + $0x1ac] sm:$0xf]
    %v954 = vld [vmem:[#allocation6 + $0x1b0] sm:$0xff]
    %v955 = vld [vmem:[#allocation6 + $0x1b8] sm:$0xf]
    %v956 = vld [vmem:[#allocation6 + $0x1bc] sm:$0xff]
    %v957 = vld [vmem:[#allocation6 + $0x1c4] sm:$0xf]
    %v958 = vld [vmem:[#allocation6 + $0x1c8] sm:$0xff]
    %v959 = vld [vmem:[#allocation6 + $0x1d0] sm:$0xf]
    %v960 = vld [vmem:[#allocation6 + $0x1d4] sm:$0xff]
    %v961 = vld [vmem:[#allocation6 + $0x1dc] sm:$0xf]
    %v962 = vld [vmem:[#allocation6 + $0x1e0] sm:$0xff]
    %v963 = vld [vmem:[#allocation6 + $0x1e8] sm:$0xf]
    %v964 = vld [vmem:[#allocation6 + $0x1ec] sm:$0xff]
    %v965 = vld [vmem:[#allocation6 + $0x1f4] sm:$0xf]
    %v966 = vld [vmem:[#allocation6 + $0x1f8] sm:$0xff]
    %v967 = vld [vmem:[#allocation6 + $0x200] sm:$0xf]
    %v968 = vld [vmem:[#allocation6 + $0x204] sm:$0xff]
    %v969 = vld [vmem:[#allocation6 + $0x20c] sm:$0xf]
    %v970 = vld [vmem:[#allocation6 + $0x210] sm:$0xff]
    %v971 = vld [vmem:[#allocation6 + $0x218] sm:$0xf]
    %v972 = vld [vmem:[#allocation6 + $0x21c] sm:$0xff]
    %v973 = vld [vmem:[#allocation6 + $0x224] sm:$0xf]
    %v974 = vld [vmem:[#allocation6 + $0x228] sm:$0xff]
    %v975 = vld [vmem:[#allocation6 + $0x230] sm:$0xf]
    %v976 = vld [vmem:[#allocation6 + $0x234] sm:$0xff]
    %v977 = vld [vmem:[#allocation6 + $0x23c] sm:$0xf]
    %v978 = vld [vmem:[#allocation6 + $0x240] sm:$0xff]
    %v979 = vld [vmem:[#allocation6 + $0x248] sm:$0xf]
    %v980 = vld [vmem:[#allocation6 + $0x24c] sm:$0xff]
    %v981 = vld [vmem:[#allocation6 + $0x254] sm:$0xf]
    %v982 = vld [vmem:[#allocation6 + $0x258] sm:$0xff]
    %v983 = vld [vmem:[#allocation6 + $0x260] sm:$0xf]
    %v984 = vld [vmem:[#allocation6 + $0x264] sm:$0xff]
    %v985 = vld [vmem:[#allocation6 + $0x26c] sm:$0xf]
    %v986 = vld [vmem:[#allocation6 + $0x270] sm:$0xff]
    %v987 = vld [vmem:[#allocation6 + $0x278] sm:$0xf]
    %v988 = vld [vmem:[#allocation6 + $0x27c] sm:$0xff]
    %v989 = vld [vmem:[#allocation6 + $0x284] sm:$0xf]
    %v990 = vld [vmem:[#allocation6 + $0x288] sm:$0xff]
    %v991 = vld [vmem:[#allocation6 + $0x290] sm:$0xf]
    %v992 = vld [vmem:[#allocation6 + $0x294] sm:$0xff]
    %v993 = vld [vmem:[#allocation6 + $0x29c] sm:$0xf]
    %v994 = vld [vmem:[#allocation6 + $0x2a0] sm:$0xff]
    %v995 = vld [vmem:[#allocation6 + $0x2a8] sm:$0xf]
    %v996 = vld [vmem:[#allocation6 + $0x2ac] sm:$0xff]
    %v997 = vld [vmem:[#allocation6 + $0x2b4] sm:$0xf]
    %v998 = vld [vmem:[#allocation6 + $0x2b8] sm:$0xff]
    %v999 = vld [vmem:[#allocation6 + $0x2c0] sm:$0xf]
    %v1000 = vld [vmem:[#allocation6 + $0x2c4] sm:$0xff]
    %v1001 = vld [vmem:[#allocation6 + $0x2cc] sm:$0xf]
    %v1002 = vld [vmem:[#allocation6 + $0x2d0] sm:$0xff]
    %v1003 = vld [vmem:[#allocation6 + $0x2d8] sm:$0xf]
    %v1004 = vld [vmem:[#allocation6 + $0x2dc] sm:$0xff]
    %v1005 = vld [vmem:[#allocation6 + $0x2e4] sm:$0xf]
    %v1006 = vld [vmem:[#allocation6 + $0x2e8] sm:$0xff]
    %v1007 = vld [vmem:[#allocation6 + $0x2f0] sm:$0xf]
    %v1008 = vld [vmem:[#allocation6 + $0x2f4] sm:$0xff]
    %v1009 = vld [vmem:[#allocation6 + $0x2fc] sm:$0xf]
    %v1010 = vld [vmem:[#allocation6 + $0x300] sm:$0xff]
    %v1011 = vld [vmem:[#allocation6 + $0x308] sm:$0xf]
    %v1012 = vld [vmem:[#allocation6 + $0x30c] sm:$0xff]
    %v1013 = vld [vmem:[#allocation6 + $0x314] sm:$0xf]
    %v1014 = vld [vmem:[#allocation6 + $0x318] sm:$0xff]
    %v1015 = vld [vmem:[#allocation6 + $0x320] sm:$0xf]
    %v1016 = vld [vmem:[#allocation6 + $0x324] sm:$0xff]
    %v1017 = vld [vmem:[#allocation6 + $0x32c] sm:$0xf]
    %v1018 = vld [vmem:[#allocation6 + $0x330] sm:$0xff]
    %v1019 = vld [vmem:[#allocation6 + $0x338] sm:$0xf]
    %v1020 = vld [vmem:[#allocation6 + $0x33c] sm:$0xff]
    %v1021 = vld [vmem:[#allocation6 + $0x344] sm:$0xf]
    %v1022 = vld [vmem:[#allocation6 + $0x348] sm:$0xff]
    %v1023 = vld [vmem:[#allocation6 + $0x350] sm:$0xf]
    %v1024 = vld [vmem:[#allocation6 + $0x354] sm:$0xff]
    %v1025 = vld [vmem:[#allocation6 + $0x35c] sm:$0xf]
    %v1026 = vld [vmem:[#allocation6 + $0x360] sm:$0xff]
    %v1027 = vld [vmem:[#allocation6 + $0x368] sm:$0xf]
    %v1028 = vld [vmem:[#allocation6 + $0x36c] sm:$0xff]
    %v1029 = vld [vmem:[#allocation6 + $0x374] sm:$0xf]
    %v1030 = vld [vmem:[#allocation6 + $0x378] sm:$0xff]
    %v1031 = vld [vmem:[#allocation6 + $0x380] sm:$0xf]
    %v1032 = vld [vmem:[#allocation6 + $0x384] sm:$0xff]
    %v1033 = vld [vmem:[#allocation6 + $0x38c] sm:$0xf]
    %v1034 = vld [vmem:[#allocation6 + $0x390] sm:$0xff]
    %v1035 = vld [vmem:[#allocation6 + $0x398] sm:$0xf]
    %v1036 = vld [vmem:[#allocation6 + $0x39c] sm:$0xff]
    %v1037 = vld [vmem:[#allocation6 + $0x3a4] sm:$0xf]
    %v1038 = vld [vmem:[#allocation6 + $0x3a8] sm:$0xff]
    %v1039 = vld [vmem:[#allocation6 + $0x3b0] sm:$0xf]
    %v1040 = vld [vmem:[#allocation6 + $0x3b4] sm:$0xff]
    %v1041 = vld [vmem:[#allocation6 + $0x3bc] sm:$0xf]
    %v1042 = vld [vmem:[#allocation6 + $0x3c0] sm:$0xff]
    %v1043 = vld [vmem:[#allocation6 + $0x3c8] sm:$0xf]
    %v1044 = vld [vmem:[#allocation6 + $0x3cc] sm:$0xff]
    %v1045 = vld [vmem:[#allocation6 + $0x3d4] sm:$0xf]
    %v1046 = vld [vmem:[#allocation6 + $0x3d8] sm:$0xff]
    %v1047 = vld [vmem:[#allocation6 + $0x3e0] sm:$0xf]
    %v1048 = vld [vmem:[#allocation6 + $0x3e4] sm:$0xff]
    %v1049 = vld [vmem:[#allocation6 + $0x3ec] sm:$0xf]
    %v1050 = vld [vmem:[#allocation6 + $0x3f0] sm:$0xff]
    %v1051 = vld [vmem:[#allocation6 + $0x3f8] sm:$0xf]
    %v1052 = vld [vmem:[#allocation6 + $0x3fc] sm:$0xff]
    %v1053 = vld [vmem:[#allocation6 + $0x404] sm:$0xf]
    %v1054 = vld [vmem:[#allocation6 + $0x408] sm:$0xff]
    %v1055 = vld [vmem:[#allocation6 + $0x410] sm:$0xf]
    %v1056 = vld [vmem:[#allocation6 + $0x414] sm:$0xff]
    %v1057 = vld [vmem:[#allocation6 + $0x41c] sm:$0xf]
    %v1058 = vld [vmem:[#allocation6 + $0x420] sm:$0xff]
    %v1059 = vld [vmem:[#allocation6 + $0x428] sm:$0xf]
    %v1060 = vld [vmem:[#allocation6 + $0x42c] sm:$0xff]
    %v1061 = vld [vmem:[#allocation6 + $0x434] sm:$0xf]
    %v1062 = vld [vmem:[#allocation6 + $0x438] sm:$0xff]
    %v1063 = vld [vmem:[#allocation6 + $0x440] sm:$0xf]
    %v1064 = vld [vmem:[#allocation6 + $0x444] sm:$0xff]
    %v1065 = vld [vmem:[#allocation6 + $0x44c] sm:$0xf]
    %v1066 = vld [vmem:[#allocation6 + $0x450] sm:$0xff]
    %v1067 = vld [vmem:[#allocation6 + $0x458] sm:$0xf]
    %v1068 = vld [vmem:[#allocation6 + $0x45c] sm:$0xff]
    %v1069 = vld [vmem:[#allocation6 + $0x464] sm:$0xf]
    %v1070 = vld [vmem:[#allocation6 + $0x468] sm:$0xff]
    %v1071 = vld [vmem:[#allocation6 + $0x470] sm:$0xf]
    %v1072 = vld [vmem:[#allocation6 + $0x474] sm:$0xff]
    %v1073 = vld [vmem:[#allocation6 + $0x47c] sm:$0xf]
    %v1074 = vld [vmem:[#allocation6 + $0x480] sm:$0xff]
    %v1075 = vld [vmem:[#allocation6 + $0x488] sm:$0xf]
    %v1076 = vld [vmem:[#allocation6 + $0x48c] sm:$0xff]
    %v1077 = vld [vmem:[#allocation6 + $0x494] sm:$0xf]
    %v1078 = vld [vmem:[#allocation6 + $0x498] sm:$0xff]
    %v1079 = vld [vmem:[#allocation6 + $0x4a0] sm:$0xf]
    %v1080 = vld [vmem:[#allocation6 + $0x4a4] sm:$0xff]
    %v1081 = vld [vmem:[#allocation6 + $0x4ac] sm:$0xf]
    %v1082 = vld [vmem:[#allocation6 + $0x4b0] sm:$0xff]
    %v1083 = vld [vmem:[#allocation6 + $0x4b8] sm:$0xf]
    %v1084 = vld [vmem:[#allocation6 + $0x4bc] sm:$0xff]
    %v1085 = vld [vmem:[#allocation6 + $0x4c4] sm:$0xf]
    %v1086 = vld [vmem:[#allocation6 + $0x4c8] sm:$0xff]
    %v1087 = vld [vmem:[#allocation6 + $0x4d0] sm:$0xf]
    %v1088 = vld [vmem:[#allocation6 + $0x4d4] sm:$0xff]
    %v1089 = vld [vmem:[#allocation6 + $0x4dc] sm:$0xf]
    %v1090 = vld [vmem:[#allocation6 + $0x4e0] sm:$0xff]
    %v1091 = vld [vmem:[#allocation6 + $0x4e8] sm:$0xf]
    %v1092 = vld [vmem:[#allocation6 + $0x4ec] sm:$0xff]
    %v1093 = vld [vmem:[#allocation6 + $0x4f4] sm:$0xf]
    %v1094 = vld [vmem:[#allocation6 + $0x4f8] sm:$0xff]
    %v1095 = vld [vmem:[#allocation6 + $0x500] sm:$0xf]
    %v1096 = vld [vmem:[#allocation6 + $0x504] sm:$0xff]
    %v1097 = vld [vmem:[#allocation6 + $0x50c] sm:$0xf]
    %v1098 = vld [vmem:[#allocation6 + $0x510] sm:$0xff]
    %v1099 = vld [vmem:[#allocation6 + $0x518] sm:$0xf]
    %v1100 = vld [vmem:[#allocation6 + $0x51c] sm:$0xff]
    %v1101 = vld [vmem:[#allocation6 + $0x524] sm:$0xf]
    %v1102 = vld [vmem:[#allocation6 + $0x528] sm:$0xff]
    %v1103 = vld [vmem:[#allocation6 + $0x530] sm:$0xf]
    %v1104 = vld [vmem:[#allocation6 + $0x534] sm:$0xff]
    %v1105 = vld [vmem:[#allocation6 + $0x53c] sm:$0xf]
    %v1106 = vld [vmem:[#allocation6 + $0x540] sm:$0xff]
    %v1107 = vld [vmem:[#allocation6 + $0x548] sm:$0xf]
    %v1108 = vld [vmem:[#allocation6 + $0x54c] sm:$0xff]
    %v1109 = vld [vmem:[#allocation6 + $0x554] sm:$0xf]
    %v1110 = vld [vmem:[#allocation6 + $0x558] sm:$0xff]
    %v1111 = vld [vmem:[#allocation6 + $0x560] sm:$0xf]
    %v1112 = vld [vmem:[#allocation6 + $0x564] sm:$0xff]
    %v1113 = vld [vmem:[#allocation6 + $0x56c] sm:$0xf]
    %v1114 = vld [vmem:[#allocation6 + $0x570] sm:$0xff]
    %v1115 = vld [vmem:[#allocation6 + $0x578] sm:$0xf]
    %v1116 = vld [vmem:[#allocation6 + $0x57c] sm:$0xff]
    %v1117 = vld [vmem:[#allocation6 + $0x584] sm:$0xf]
    %v1118 = vld [vmem:[#allocation6 + $0x588] sm:$0xff]
    %v1119 = vld [vmem:[#allocation6 + $0x590] sm:$0xf]
    %v1120 = vld [vmem:[#allocation6 + $0x594] sm:$0xff]
    %v1121 = vld [vmem:[#allocation6 + $0x59c] sm:$0xf]
    %v1122 = vld [vmem:[#allocation6 + $0x5a0] sm:$0xff]
    %v1123 = vld [vmem:[#allocation6 + $0x5a8] sm:$0xf]
    %v1124 = vld [vmem:[#allocation6 + $0x5ac] sm:$0xff]
    %v1125 = vld [vmem:[#allocation6 + $0x5b4] sm:$0xf]
    %v1126 = vld [vmem:[#allocation6 + $0x5b8] sm:$0xff]
    %v1127 = vld [vmem:[#allocation6 + $0x5c0] sm:$0xf]
    %v1128 = vld [vmem:[#allocation6 + $0x5c4] sm:$0xff]
    %v1129 = vld [vmem:[#allocation6 + $0x5cc] sm:$0xf]
    %v1130 = vld [vmem:[#allocation6 + $0x5d0] sm:$0xff]
    %v1131 = vld [vmem:[#allocation6 + $0x5d8] sm:$0xf]
    %v1132 = vld [vmem:[#allocation6 + $0x5dc] sm:$0xff]
    %v1133 = vld [vmem:[#allocation6 + $0x5e4] sm:$0xf]
    %v1134 = vld [vmem:[#allocation6 + $0x5e8] sm:$0xff]
    %v1135 = vld [vmem:[#allocation6 + $0x5f0] sm:$0xf]
    %v1136 = vld [vmem:[#allocation6 + $0x5f4] sm:$0xff]
    %v1137 = vld [vmem:[#allocation6 + $0x5fc] sm:$0xf]
    %v1138 = vld [vmem:[#allocation6 + $0x600] sm:$0xff]
    %v1139 = vld [vmem:[#allocation6 + $0x608] sm:$0xf]
    %v1140 = vld [vmem:[#allocation6 + $0x60c] sm:$0xff]
    %v1141 = vld [vmem:[#allocation6 + $0x614] sm:$0xf]
    %v1142 = vld [vmem:[#allocation6 + $0x618] sm:$0xff]
    %v1143 = vld [vmem:[#allocation6 + $0x620] sm:$0xf]
    %v1144 = vld [vmem:[#allocation6 + $0x624] sm:$0xff]
    %v1145 = vld [vmem:[#allocation6 + $0x62c] sm:$0xf]
    %v1146 = vld [vmem:[#allocation6 + $0x630] sm:$0xff]
    %v1147 = vld [vmem:[#allocation6 + $0x638] sm:$0xf]
    %v1148 = vld [vmem:[#allocation6 + $0x63c] sm:$0xff]
    %v1149 = vld [vmem:[#allocation6 + $0x644] sm:$0xf]
    %v1150 = vld [vmem:[#allocation6 + $0x648] sm:$0xff]
    %v1151 = vld [vmem:[#allocation6 + $0x650] sm:$0xf]
    %v1152 = vld [vmem:[#allocation6 + $0x654] sm:$0xff]
    %v1153 = vld [vmem:[#allocation6 + $0x65c] sm:$0xf]
    %v1154 = vld [vmem:[#allocation6 + $0x660] sm:$0xff]
    %v1155 = vld [vmem:[#allocation6 + $0x668] sm:$0xf]
    %v1156 = vld [vmem:[#allocation6 + $0x66c] sm:$0xff]
    %v1157 = vld [vmem:[#allocation6 + $0x674] sm:$0xf]
    %v1158 = vld [vmem:[#allocation6 + $0x678] sm:$0xff]
    %v1159 = vld [vmem:[#allocation6 + $0x680] sm:$0xf]
    %v1160 = vld [vmem:[#allocation6 + $0x684] sm:$0xff]
    %v1161 = vld [vmem:[#allocation6 + $0x68c] sm:$0xf]
    %v1162 = vld [vmem:[#allocation6 + $0x690] sm:$0xff]
    %v1163 = vld [vmem:[#allocation6 + $0x698] sm:$0xf]
    %v1164 = vld [vmem:[#allocation6 + $0x69c] sm:$0xff]
    %v1165 = vld [vmem:[#allocation6 + $0x6a4] sm:$0xf]
    %v1166 = vld [vmem:[#allocation6 + $0x6a8] sm:$0xff]
    %v1167 = vld [vmem:[#allocation6 + $0x6b0] sm:$0xf]
    %v1168 = vld [vmem:[#allocation6 + $0x6b4] sm:$0xff]
    %v1169 = vld [vmem:[#allocation6 + $0x6bc] sm:$0xf]
    %v1170 = vld [vmem:[#allocation6 + $0x6c0] sm:$0xff]
    %v1171 = vld [vmem:[#allocation6 + $0x6c8] sm:$0xf]
    %v1172 = vld [vmem:[#allocation6 + $0x6cc] sm:$0xff]
    %v1173 = vld [vmem:[#allocation6 + $0x6d4] sm:$0xf]
    %v1174 = vld [vmem:[#allocation6 + $0x6d8] sm:$0xff]
    %v1175 = vld [vmem:[#allocation6 + $0x6e0] sm:$0xf]
    %v1176 = vld [vmem:[#allocation6 + $0x6e4] sm:$0xff]
    %v1177 = vld [vmem:[#allocation6 + $0x6ec] sm:$0xf]
    %v1178 = vld [vmem:[#allocation6 + $0x6f0] sm:$0xff]
    %v1179 = vld [vmem:[#allocation6 + $0x6f8] sm:$0xf]
    %v1180 = vld [vmem:[#allocation6 + $0x6fc] sm:$0xff]
    %v1181 = vld [vmem:[#allocation6 + $0x704] sm:$0xf]
    %v1182 = vld [vmem:[#allocation6 + $0x708] sm:$0xff]
    %v1183 = vld [vmem:[#allocation6 + $0x710] sm:$0xf]
    %v1184 = vld [vmem:[#allocation6 + $0x714] sm:$0xff]
    %v1185 = vld [vmem:[#allocation6 + $0x71c] sm:$0xf]
    %v1186 = vld [vmem:[#allocation6 + $0x720] sm:$0xff]
    %v1187 = vld [vmem:[#allocation6 + $0x728] sm:$0xf]
    %v1188 = vld [vmem:[#allocation6 + $0x72c] sm:$0xff]
    %v1189 = vld [vmem:[#allocation6 + $0x734] sm:$0xf]
    %v1190 = vld [vmem:[#allocation6 + $0x738] sm:$0xff]
    %v1191 = vld [vmem:[#allocation6 + $0x740] sm:$0xf]
    %v1192 = vld [vmem:[#allocation6 + $0x744] sm:$0xff]
    %v1193 = vld [vmem:[#allocation6 + $0x74c] sm:$0xf]
    %v1194 = vld [vmem:[#allocation6 + $0x750] sm:$0xff]
    %v1195 = vld [vmem:[#allocation6 + $0x758] sm:$0xf]
    %v1196 = vld [vmem:[#allocation6 + $0x75c] sm:$0xff]
    %v1197 = vld [vmem:[#allocation6 + $0x764] sm:$0xf]
    %v1198 = vld [vmem:[#allocation6 + $0x768] sm:$0xff]
    %v1199 = vld [vmem:[#allocation6 + $0x770] sm:$0xf]
    %v1200 = vld [vmem:[#allocation6 + $0x774] sm:$0xff]
    %v1201 = vld [vmem:[#allocation6 + $0x77c] sm:$0xf]
    %v1202 = vld [vmem:[#allocation6 + $0x780] sm:$0xff]
    %v1203 = vld [vmem:[#allocation6 + $0x788] sm:$0xf]
    %v1204 = vld [vmem:[#allocation6 + $0x78c] sm:$0xff]
    %v1205 = vld [vmem:[#allocation6 + $0x794] sm:$0xf]
    %v1206 = vld [vmem:[#allocation6 + $0x798] sm:$0xff]
    %v1207 = vld [vmem:[#allocation6 + $0x7a0] sm:$0xf]
    %v1208 = vld [vmem:[#allocation6 + $0x7a4] sm:$0xff]
    %v1209 = vld [vmem:[#allocation6 + $0x7ac] sm:$0xf]
    %v1210 = vld [vmem:[#allocation6 + $0x7b0] sm:$0xff]
    %v1211 = vld [vmem:[#allocation6 + $0x7b8] sm:$0xf]
    %v1212 = vld [vmem:[#allocation6 + $0x7bc] sm:$0xff]
    %v1213 = vld [vmem:[#allocation6 + $0x7c4] sm:$0xf]
    %v1214 = vld [vmem:[#allocation6 + $0x7c8] sm:$0xff]
    %v1215 = vld [vmem:[#allocation6 + $0x7d0] sm:$0xf]
    %v1216 = vld [vmem:[#allocation6 + $0x7d4] sm:$0xff]
    %v1217 = vld [vmem:[#allocation6 + $0x7dc] sm:$0xf]
    %v1218 = vld [vmem:[#allocation6 + $0x7e0] sm:$0xff]
    %v1219 = vld [vmem:[#allocation6 + $0x7e8] sm:$0xf]
    %v1220 = vld [vmem:[#allocation6 + $0x7ec] sm:$0xff]
    %v1221 = vld [vmem:[#allocation6 + $0x7f4] sm:$0xf]
    %v1222 = vld [vmem:[#allocation6 + $0x7f8] sm:$0xff]
    %v1223 = vld [vmem:[#allocation6 + $0x800] sm:$0xf]
    %v1224 = vld [vmem:[#allocation6 + $0x804] sm:$0xff]
    %v1225 = vld [vmem:[#allocation6 + $0x80c] sm:$0xf]
    %v1226 = vld [vmem:[#allocation6 + $0x810] sm:$0xff]
    %v1227 = vld [vmem:[#allocation6 + $0x818] sm:$0xf]
    %v1228 = vld [vmem:[#allocation6 + $0x81c] sm:$0xff]
    %v1229 = vld [vmem:[#allocation6 + $0x824] sm:$0xf]
    %v1230 = vld [vmem:[#allocation6 + $0x828] sm:$0xff]
    %v1231 = vld [vmem:[#allocation6 + $0x830] sm:$0xf]
    %v1232 = vld [vmem:[#allocation6 + $0x834] sm:$0xff]
    %v1233 = vld [vmem:[#allocation6 + $0x83c] sm:$0xf]
    %v1234 = vld [vmem:[#allocation6 + $0x840] sm:$0xff]
    %v1235 = vld [vmem:[#allocation6 + $0x848] sm:$0xf]
    %v1236 = vld [vmem:[#allocation6 + $0x84c] sm:$0xff]
    %v1237 = vld [vmem:[#allocation6 + $0x854] sm:$0xf]
    %v1238 = vld [vmem:[#allocation6 + $0x858] sm:$0xff]
    %v1239 = vld [vmem:[#allocation6 + $0x860] sm:$0xf]
    %v1240 = vld [vmem:[#allocation6 + $0x864] sm:$0xff]
    %v1241 = vld [vmem:[#allocation6 + $0x86c] sm:$0xf]
    %v1242 = vld [vmem:[#allocation6 + $0x870] sm:$0xff]
    %v1243 = vld [vmem:[#allocation6 + $0x878] sm:$0xf]
    %v1244 = vld [vmem:[#allocation6 + $0x87c] sm:$0xff]
    %v1245 = vld [vmem:[#allocation6 + $0x884] sm:$0xf]
    %v1246 = vld [vmem:[#allocation6 + $0x888] sm:$0xff]
    %v1247 = vld [vmem:[#allocation6 + $0x890] sm:$0xf]
    %v1248 = vld [vmem:[#allocation6 + $0x894] sm:$0xff]
    %v1249 = vld [vmem:[#allocation6 + $0x89c] sm:$0xf]
    %v1250 = vld [vmem:[#allocation6 + $0x8a0] sm:$0xff]
    %v1251 = vld [vmem:[#allocation6 + $0x8a8] sm:$0xf]
    %v1252 = vld [vmem:[#allocation6 + $0x8ac] sm:$0xff]
    %v1253 = vld [vmem:[#allocation6 + $0x8b4] sm:$0xf]
    %v1254 = vld [vmem:[#allocation6 + $0x8b8] sm:$0xff]
    %v1255 = vld [vmem:[#allocation6 + $0x8c0] sm:$0xf]
    %v1256 = vld [vmem:[#allocation6 + $0x8c4] sm:$0xff]
    %v1257 = vld [vmem:[#allocation6 + $0x8cc] sm:$0xf]
    %v1258 = vld [vmem:[#allocation6 + $0x8d0] sm:$0xff]
    %v1259 = vld [vmem:[#allocation6 + $0x8d8] sm:$0xf]
    %v1260 = vld [vmem:[#allocation6 + $0x8dc] sm:$0xff]
    %v1261 = vld [vmem:[#allocation6 + $0x8e4] sm:$0xf]
    %v1262 = vld [vmem:[#allocation6 + $0x8e8] sm:$0xff]
    %v1263 = vld [vmem:[#allocation6 + $0x8f0] sm:$0xf]
    %v1264 = vld [vmem:[#allocation6 + $0x8f4] sm:$0xff]
    %v1265 = vld [vmem:[#allocation6 + $0x8fc] sm:$0xf]
    %v1266 = vld [vmem:[#allocation6 + $0x900] sm:$0xff]
    %v1267 = vld [vmem:[#allocation6 + $0x908] sm:$0xf]
    %v1268 = vld [vmem:[#allocation6 + $0x90c] sm:$0xff]
    %v1269 = vld [vmem:[#allocation6 + $0x914] sm:$0xf]
    %v1270 = vld [vmem:[#allocation6 + $0x918] sm:$0xff]
    %v1271 = vld [vmem:[#allocation6 + $0x920] sm:$0xf]
    %v1272 = vld [vmem:[#allocation6 + $0x924] sm:$0xff]
    %v1273 = vld [vmem:[#allocation6 + $0x92c] sm:$0xf]
    %v1274 = vld [vmem:[#allocation6 + $0x930] sm:$0xff]
    %v1275 = vld [vmem:[#allocation6 + $0x938] sm:$0xf]
    %v1276 = vld [vmem:[#allocation6 + $0x93c] sm:$0xff]
    %v1277 = vld [vmem:[#allocation6 + $0x944] sm:$0xf]
    %v1278 = vld [vmem:[#allocation6 + $0x948] sm:$0xff]
    %v1279 = vld [vmem:[#allocation6 + $0x950] sm:$0xf]
    %v1280 = vld [vmem:[#allocation6 + $0x954] sm:$0xff]
    %v1281 = vld [vmem:[#allocation6 + $0x95c] sm:$0xf]
    %v1282 = vld [vmem:[#allocation6 + $0x960] sm:$0xff]
    %v1283 = vld [vmem:[#allocation6 + $0x968] sm:$0xf]
    %v1284 = vld [vmem:[#allocation6 + $0x96c] sm:$0xff]
    %v1285 = vld [vmem:[#allocation6 + $0x974] sm:$0xf]
    %v1286 = vld [vmem:[#allocation6 + $0x978] sm:$0xff]
    %v1287 = vld [vmem:[#allocation6 + $0x980] sm:$0xf]
    %v1288 = vld [vmem:[#allocation6 + $0x984] sm:$0xff]
    %v1289 = vld [vmem:[#allocation6 + $0x98c] sm:$0xf]
    %v1290 = vld [vmem:[#allocation6 + $0x990] sm:$0xff]
    %v1291 = vld [vmem:[#allocation6 + $0x998] sm:$0xf]
    %v1292 = vld [vmem:[#allocation6 + $0x99c] sm:$0xff]
    %v1293 = vld [vmem:[#allocation6 + $0x9a4] sm:$0xf]
    %v1294 = vld [vmem:[#allocation6 + $0x9a8] sm:$0xff]
    %v1295 = vld [vmem:[#allocation6 + $0x9b0] sm:$0xf]
    %v1296 = vld [vmem:[#allocation6 + $0x9b4] sm:$0xff]
    %v1297 = vld [vmem:[#allocation6 + $0x9bc] sm:$0xf]
    %v1298 = vld [vmem:[#allocation6 + $0x9c0] sm:$0xff]
    %v1299 = vld [vmem:[#allocation6 + $0x9c8] sm:$0xf]
    %v1300 = vld [vmem:[#allocation6 + $0x9cc] sm:$0xff]
    %v1301 = vld [vmem:[#allocation6 + $0x9d4] sm:$0xf]
    %v1302 = vld [vmem:[#allocation6 + $0x9d8] sm:$0xff]
    %v1303 = vld [vmem:[#allocation6 + $0x9e0] sm:$0xf]
    %v1304 = vld [vmem:[#allocation6 + $0x9e4] sm:$0xff]
    %v1305 = vld [vmem:[#allocation6 + $0x9ec] sm:$0xf]
    %v1306 = vld [vmem:[#allocation6 + $0x9f0] sm:$0xff]
    %v1307 = vld [vmem:[#allocation6 + $0x9f8] sm:$0xf]
    %v1308 = vld [vmem:[#allocation6 + $0x9fc] sm:$0xff]
    %v1309 = vld [vmem:[#allocation6 + $0xa04] sm:$0xf]
    %v1310 = vld [vmem:[#allocation6 + $0xa08] sm:$0xff]
    %v1311 = vld [vmem:[#allocation6 + $0xa10] sm:$0xf]
    %v1312 = vld [vmem:[#allocation6 + $0xa14] sm:$0xff]
    %v1313 = vld [vmem:[#allocation6 + $0xa1c] sm:$0xf]
    %v1314 = vld [vmem:[#allocation6 + $0xa20] sm:$0xff]
    %v1315 = vld [vmem:[#allocation6 + $0xa28] sm:$0xf]
    %v1316 = vld [vmem:[#allocation6 + $0xa2c] sm:$0xff]
    %v1317 = vld [vmem:[#allocation6 + $0xa34] sm:$0xf]
    %v1318 = vld [vmem:[#allocation6 + $0xa38] sm:$0xff]
    %v1319 = vld [vmem:[#allocation6 + $0xa40] sm:$0xf]
    %v1320 = vld [vmem:[#allocation6 + $0xa44] sm:$0xff]
    %v1321 = vld [vmem:[#allocation6 + $0xa4c] sm:$0xf]
    %v1322 = vld [vmem:[#allocation6 + $0xa50] sm:$0xff]
    %v1323 = vld [vmem:[#allocation6 + $0xa58] sm:$0xf]
    %v1324 = vld [vmem:[#allocation6 + $0xa5c] sm:$0xff]
    %v1325 = vld [vmem:[#allocation6 + $0xa64] sm:$0xf]
    %v1326 = vld [vmem:[#allocation6 + $0xa68] sm:$0xff]
    %v1327 = vld [vmem:[#allocation6 + $0xa70] sm:$0xf]
    %v1328 = vld [vmem:[#allocation6 + $0xa74] sm:$0xff]
    %v1329 = vld [vmem:[#allocation6 + $0xa7c] sm:$0xf]
    %v1330 = vld [vmem:[#allocation6 + $0xa80] sm:$0xff]
    %v1331 = vld [vmem:[#allocation6 + $0xa88] sm:$0xf]
    %v1332 = vld [vmem:[#allocation6 + $0xa8c] sm:$0xff]
    %v1333 = vld [vmem:[#allocation6 + $0xa94] sm:$0xf]
    %v1334 = vld [vmem:[#allocation6 + $0xa98] sm:$0xff]
    %v1335 = vld [vmem:[#allocation6 + $0xaa0] sm:$0xf]
    %v1336 = vld [vmem:[#allocation6 + $0xaa4] sm:$0xff]
    %v1337 = vld [vmem:[#allocation6 + $0xaac] sm:$0xf]
    %v1338 = vld [vmem:[#allocation6 + $0xab0] sm:$0xff]
    %v1339 = vld [vmem:[#allocation6 + $0xab8] sm:$0xf]
    %v1340 = vld [vmem:[#allocation6 + $0xabc] sm:$0xff]
    %v1341 = vld [vmem:[#allocation6 + $0xac4] sm:$0xf]
    %v1342 = vld [vmem:[#allocation6 + $0xac8] sm:$0xff]
    %v1343 = vld [vmem:[#allocation6 + $0xad0] sm:$0xf]
    %v1344 = vld [vmem:[#allocation6 + $0xad4] sm:$0xff]
    %v1345 = vld [vmem:[#allocation6 + $0xadc] sm:$0xf]
    %v1346 = vld [vmem:[#allocation6 + $0xae0] sm:$0xff]
    %v1347 = vld [vmem:[#allocation6 + $0xae8] sm:$0xf]
    %v1348 = vld [vmem:[#allocation6 + $0xaec] sm:$0xff]
    %v1349 = vld [vmem:[#allocation6 + $0xaf4] sm:$0xf]
    %v1350 = vld [vmem:[#allocation6 + $0xaf8] sm:$0xff]
    %v1351 = vld [vmem:[#allocation6 + $0xb00] sm:$0xf]
    %v1352 = vld [vmem:[#allocation6 + $0xb04] sm:$0xff]
    %v1353 = vld [vmem:[#allocation6 + $0xb0c] sm:$0xf]
    %v1354 = vld [vmem:[#allocation6 + $0xb10] sm:$0xff]
    %v1355 = vld [vmem:[#allocation6 + $0xb18] sm:$0xf]
    %v1356 = vld [vmem:[#allocation6 + $0xb1c] sm:$0xff]
    %v1357 = vld [vmem:[#allocation6 + $0xb24] sm:$0xf]
    %v1358 = vld [vmem:[#allocation6 + $0xb28] sm:$0xff]
    %v1359 = vld [vmem:[#allocation6 + $0xb30] sm:$0xf]
    %v1360 = vld [vmem:[#allocation6 + $0xb34] sm:$0xff]
    %v1361 = vld [vmem:[#allocation6 + $0xb3c] sm:$0xf]
    %v1362 = vld [vmem:[#allocation6 + $0xb40] sm:$0xff]
    %v1363 = vld [vmem:[#allocation6 + $0xb48] sm:$0xf]
    %v1364 = vld [vmem:[#allocation6 + $0xb4c] sm:$0xff]
    %v1365 = vld [vmem:[#allocation6 + $0xb54] sm:$0xf]
    %v1366 = vld [vmem:[#allocation6 + $0xb58] sm:$0xff]
    %v1367 = vld [vmem:[#allocation6 + $0xb60] sm:$0xf]
    %v1368 = vld [vmem:[#allocation6 + $0xb64] sm:$0xff]
    %v1369 = vld [vmem:[#allocation6 + $0xb6c] sm:$0xf]
    %v1370 = vld [vmem:[#allocation6 + $0xb70] sm:$0xff]
    %v1371 = vld [vmem:[#allocation6 + $0xb78] sm:$0xf]
    %v1372 = vld [vmem:[#allocation6 + $0xb7c] sm:$0xff]
    %v1373 = vld [vmem:[#allocation6 + $0xb84] sm:$0xf]
    %v1374 = vld [vmem:[#allocation6 + $0xb88] sm:$0xff]
    %v1375 = vld [vmem:[#allocation6 + $0xb90] sm:$0xf]
    %v1376 = vld [vmem:[#allocation6 + $0xb94] sm:$0xff]
    %v1377 = vld [vmem:[#allocation6 + $0xb9c] sm:$0xf]
    %v1378 = vld [vmem:[#allocation6 + $0xba0] sm:$0xff]
    %v1379 = vld [vmem:[#allocation6 + $0xba8] sm:$0xf]
    %v1380 = vld [vmem:[#allocation6 + $0xbac] sm:$0xff]
    %v1381 = vld [vmem:[#allocation6 + $0xbb4] sm:$0xf]
    %v1382 = vld [vmem:[#allocation6 + $0xbb8] sm:$0xff]
    %v1383 = vld [vmem:[#allocation6 + $0xbc0] sm:$0xf]
    %v1384 = vld [vmem:[#allocation6 + $0xbc4] sm:$0xff]
    %v1385 = vld [vmem:[#allocation6 + $0xbcc] sm:$0xf]
    %v1386 = vld [vmem:[#allocation6 + $0xbd0] sm:$0xff]
    %v1387 = vld [vmem:[#allocation6 + $0xbd8] sm:$0xf]
    %v1388 = vld [vmem:[#allocation6 + $0xbdc] sm:$0xff]
    %v1389 = vld [vmem:[#allocation6 + $0xbe4] sm:$0xf]
    %v1390 = vld [vmem:[#allocation6 + $0xbe8] sm:$0xff]
    %v1391 = vld [vmem:[#allocation6 + $0xbf0] sm:$0xf]
    %v1392 = vld [vmem:[#allocation6 + $0xbf4] sm:$0xff]
    %v1393 = vld [vmem:[#allocation6 + $0xbfc] sm:$0xf]
    %v1394 = vld [vmem:[#allocation6 + $0xc00] sm:$0xff]
    %v1395 = vld [vmem:[#allocation6 + $0xc08] sm:$0xf]
    %v1396 = vld [vmem:[#allocation6 + $0xc0c] sm:$0xff]
    %v1397 = vld [vmem:[#allocation6 + $0xc14] sm:$0xf]
    %v1398 = vld [vmem:[#allocation6 + $0xc18] sm:$0xff]
    %v1399 = vld [vmem:[#allocation6 + $0xc20] sm:$0xf]
    %v1400 = vld [vmem:[#allocation6 + $0xc24] sm:$0xff]
    %v1401 = vld [vmem:[#allocation6 + $0xc2c] sm:$0xf]
    %v1402 = vld [vmem:[#allocation6 + $0xc30] sm:$0xff]
    %v1403 = vld [vmem:[#allocation6 + $0xc38] sm:$0xf]
    %v1404 = vld [vmem:[#allocation6 + $0xc3c] sm:$0xff]
    %v1405 = vld [vmem:[#allocation6 + $0xc44] sm:$0xf]
    %v1406 = vld [vmem:[#allocation6 + $0xc48] sm:$0xff]
    %v1407 = vld [vmem:[#allocation6 + $0xc50] sm:$0xf]
    %v1408 = vld [vmem:[#allocation6 + $0xc54] sm:$0xff]
    %v1409 = vld [vmem:[#allocation6 + $0xc5c] sm:$0xf]
    %v1410 = vld [vmem:[#allocation6 + $0xc60] sm:$0xff]
    %v1411 = vld [vmem:[#allocation6 + $0xc68] sm:$0xf]
    %v1412 = vld [vmem:[#allocation6 + $0xc6c] sm:$0xff]
    %v1413 = vld [vmem:[#allocation6 + $0xc74] sm:$0xf]
    %v1414 = vld [vmem:[#allocation6 + $0xc78] sm:$0xff]
    %v1415 = vld [vmem:[#allocation6 + $0xc80] sm:$0xf]
    %v1416 = vld [vmem:[#allocation6 + $0xc84] sm:$0xff]
    %v1417 = vld [vmem:[#allocation6 + $0xc8c] sm:$0xf]
    %v1418 = vld [vmem:[#allocation6 + $0xc90] sm:$0xff]
    %v1419 = vld [vmem:[#allocation6 + $0xc98] sm:$0xf]
    %v1420 = vld [vmem:[#allocation6 + $0xc9c] sm:$0xff]
    %v1421 = vld [vmem:[#allocation6 + $0xca4] sm:$0xf]
    %v1422 = vld [vmem:[#allocation6 + $0xca8] sm:$0xff]
    %v1423 = vld [vmem:[#allocation6 + $0xcb0] sm:$0xf]
    %v1424 = vld [vmem:[#allocation6 + $0xcb4] sm:$0xff]
    %v1425 = vld [vmem:[#allocation6 + $0xcbc] sm:$0xf]
    %v1426 = vld [vmem:[#allocation6 + $0xcc0] sm:$0xff]
    %v1427 = vld [vmem:[#allocation6 + $0xcc8] sm:$0xf]
    %v1428 = vld [vmem:[#allocation6 + $0xccc] sm:$0xff]
    %v1429 = vld [vmem:[#allocation6 + $0xcd4] sm:$0xf]
    %v1430 = vld [vmem:[#allocation6 + $0xcd8] sm:$0xff]
    %v1431 = vld [vmem:[#allocation6 + $0xce0] sm:$0xf]
    %v1432 = vld [vmem:[#allocation6 + $0xce4] sm:$0xff]
    %v1433 = vld [vmem:[#allocation6 + $0xcec] sm:$0xf]
    %v1434 = vld [vmem:[#allocation6 + $0xcf0] sm:$0xff]
    %v1435 = vld [vmem:[#allocation6 + $0xcf8] sm:$0xf]
    %v1436 = vld [vmem:[#allocation6 + $0xcfc] sm:$0xff]
    %v1437 = vld [vmem:[#allocation6 + $0xd04] sm:$0xf]
    %v1438 = vld [vmem:[#allocation6 + $0xd08] sm:$0xff]
    %v1439 = vld [vmem:[#allocation6 + $0xd10] sm:$0xf]
    %v1440 = vld [vmem:[#allocation6 + $0xd14] sm:$0xff]
    %v1441 = vld [vmem:[#allocation6 + $0xd1c] sm:$0xf]
    %v1442 = vld [vmem:[#allocation6 + $0xd20] sm:$0xff]
    %v1443 = vld [vmem:[#allocation6 + $0xd28] sm:$0xf]
    %v1444 = vld [vmem:[#allocation6 + $0xd2c] sm:$0xff]
    %v1445 = vld [vmem:[#allocation6 + $0xd34] sm:$0xf]
    %v1446 = vld [vmem:[#allocation6 + $0xd38] sm:$0xff]
    %v1447 = vld [vmem:[#allocation6 + $0xd40] sm:$0xf]
    %v1448 = vld [vmem:[#allocation6 + $0xd44] sm:$0xff]
    %v1449 = vld [vmem:[#allocation6 + $0xd4c] sm:$0xf]
    %v1450 = vld [vmem:[#allocation6 + $0xd50] sm:$0xff]
    %v1451 = vld [vmem:[#allocation6 + $0xd58] sm:$0xf]
    %v1452 = vld [vmem:[#allocation6 + $0xd5c] sm:$0xff]
    %v1453 = vld [vmem:[#allocation6 + $0xd64] sm:$0xf]
    %v1454 = vld [vmem:[#allocation6 + $0xd68] sm:$0xff]
    %v1455 = vld [vmem:[#allocation6 + $0xd70] sm:$0xf]
    %v1456 = vld [vmem:[#allocation6 + $0xd74] sm:$0xff]
    %v1457 = vld [vmem:[#allocation6 + $0xd7c] sm:$0xf]
    %v1458 = vld [vmem:[#allocation6 + $0xd80] sm:$0xff]
    %v1459 = vld [vmem:[#allocation6 + $0xd88] sm:$0xf]
    %v1460 = vld [vmem:[#allocation6 + $0xd8c] sm:$0xff]
    %v1461 = vld [vmem:[#allocation6 + $0xd94] sm:$0xf]
    %v1462 = vld [vmem:[#allocation6 + $0xd98] sm:$0xff]
    %v1463 = vld [vmem:[#allocation6 + $0xda0] sm:$0xf]
    %v1464 = vld [vmem:[#allocation6 + $0xda4] sm:$0xff]
    %v1465 = vld [vmem:[#allocation6 + $0xdac] sm:$0xf]
    %v1466 = vld [vmem:[#allocation6 + $0xdb0] sm:$0xff]
    %v1467 = vld [vmem:[#allocation6 + $0xdb8] sm:$0xf]
    %v1468 = vld [vmem:[#allocation6 + $0xdbc] sm:$0xff]
    %v1469 = vld [vmem:[#allocation6 + $0xdc4] sm:$0xf]
    %v1470 = vld [vmem:[#allocation6 + $0xdc8] sm:$0xff]
    %v1471 = vld [vmem:[#allocation6 + $0xdd0] sm:$0xf]
    %v1472 = vld [vmem:[#allocation6 + $0xdd4] sm:$0xff]
    %v1473 = vld [vmem:[#allocation6 + $0xddc] sm:$0xf]
    %v1474 = vld [vmem:[#allocation6 + $0xde0] sm:$0xff]
    %v1475 = vld [vmem:[#allocation6 + $0xde8] sm:$0xf]
    %v1476 = vld [vmem:[#allocation6 + $0xdec] sm:$0xff]
    %v1477 = vld [vmem:[#allocation6 + $0xdf4] sm:$0xf]
    %v1478 = vld [vmem:[#allocation6 + $0xdf8] sm:$0xff]
    %v1479 = vld [vmem:[#allocation6 + $0xe00] sm:$0xf]
    %v1480 = vld [vmem:[#allocation6 + $0xe04] sm:$0xff]
    %v1481 = vld [vmem:[#allocation6 + $0xe0c] sm:$0xf]
    %v1482 = vld [vmem:[#allocation6 + $0xe10] sm:$0xff]
    %v1483 = vld [vmem:[#allocation6 + $0xe18] sm:$0xf]
    %v1484 = vld [vmem:[#allocation6 + $0xe1c] sm:$0xff]
    %v1485 = vld [vmem:[#allocation6 + $0xe24] sm:$0xf]
    %v1486 = vld [vmem:[#allocation6 + $0xe28] sm:$0xff]
    %v1487 = vld [vmem:[#allocation6 + $0xe30] sm:$0xf]
    %v1488 = vld [vmem:[#allocation6 + $0xe34] sm:$0xff]
    %v1489 = vld [vmem:[#allocation6 + $0xe3c] sm:$0xf]
    %v1490 = vld [vmem:[#allocation6 + $0xe40] sm:$0xff]
    %v1491 = vld [vmem:[#allocation6 + $0xe48] sm:$0xf]
    %v1492 = vld [vmem:[#allocation6 + $0xe4c] sm:$0xff]
    %v1493 = vld [vmem:[#allocation6 + $0xe54] sm:$0xf]
    %v1494 = vld [vmem:[#allocation6 + $0xe58] sm:$0xff]
    %v1495 = vld [vmem:[#allocation6 + $0xe60] sm:$0xf]
    %v1496 = vld [vmem:[#allocation6 + $0xe64] sm:$0xff]
    %v1497 = vld [vmem:[#allocation6 + $0xe6c] sm:$0xf]
    %v1498 = vld [vmem:[#allocation6 + $0xe70] sm:$0xff]
    %v1499 = vld [vmem:[#allocation6 + $0xe78] sm:$0xf]
    %v1500 = vld [vmem:[#allocation6 + $0xe7c] sm:$0xff]
    %v1501 = vld [vmem:[#allocation6 + $0xe84] sm:$0xf]
    %v1502 = vld [vmem:[#allocation6 + $0xe88] sm:$0xff]
    %v1503 = vld [vmem:[#allocation6 + $0xe90] sm:$0xf]
    %v1504 = vld [vmem:[#allocation6 + $0xe94] sm:$0xff]
    %v1505 = vld [vmem:[#allocation6 + $0xe9c] sm:$0xf]
    %v1506 = vld [vmem:[#allocation6 + $0xea0] sm:$0xff]
    %v1507 = vld [vmem:[#allocation6 + $0xea8] sm:$0xf]
    %v1508 = vld [vmem:[#allocation6 + $0xeac] sm:$0xff]
    %v1509 = vld [vmem:[#allocation6 + $0xeb4] sm:$0xf]
    %v1510 = vld [vmem:[#allocation6 + $0xeb8] sm:$0xff]
    %v1511 = vld [vmem:[#allocation6 + $0xec0] sm:$0xf]
    %v1512 = vld [vmem:[#allocation6 + $0xec4] sm:$0xff]
    %v1513 = vld [vmem:[#allocation6 + $0xecc] sm:$0xf]
    %v1514 = vld [vmem:[#allocation6 + $0xed0] sm:$0xff]
    %v1515 = vld [vmem:[#allocation6 + $0xed8] sm:$0xf]
    %v1516 = vld [vmem:[#allocation6 + $0xedc] sm:$0xff]
    %v1517 = vld [vmem:[#allocation6 + $0xee4] sm:$0xf]
    %v1518 = vld [vmem:[#allocation6 + $0xee8] sm:$0xff]
    %v1519 = vld [vmem:[#allocation6 + $0xef0] sm:$0xf]
    %v1520 = vld [vmem:[#allocation6 + $0xef4] sm:$0xff]
    %v1521 = vld [vmem:[#allocation6 + $0xefc] sm:$0xf]
    %v1522 = vld [vmem:[#allocation7] sm:$0x7]
    %v1524 = vperm.slane %v1522, 0
    %v1525 = vperm.slane %v1522, 1
    %v1526 = vperm.slane %v1522, 2
    %1531 = vst [vmem:[#allocation1] ss:$9 sm:$0xff] %v879
    %v1532 = vld [vmem:[#allocation1] sm:$0xff]
    %v1533 = vld [vmem:[#allocation1 + $0x9] sm:$0xff]
    %v1534 = vld [vmem:[#allocation1 + $0x12] sm:$0xff]
    %v1535 = vld [vmem:[#allocation1 + $0x1b] sm:$0xff]
    %v1536 = vld [vmem:[#allocation1 + $0x24] sm:$0xff]
    %v1537 = vld [vmem:[#allocation1 + $0x2d] sm:$0xff]
    %v1538 = vld [vmem:[#allocation1 + $0x36] sm:$0xff]
    %v1539 = vld [vmem:[#allocation1 + $0x3f] sm:$0xff]
    %1541 = vst [vmem:[#allocation1] ss:$9 sm:$0xff] %v880
    %v1542 = vld [vmem:[#allocation1] sm:$0xff]
    %v1543 = vld [vmem:[#allocation1 + $0x9] sm:$0xff]
    %v1544 = vld [vmem:[#allocation1 + $0x12] sm:$0xff]
    %v1545 = vld [vmem:[#allocation1 + $0x1b] sm:$0xff]
    %v1546 = vld [vmem:[#allocation1 + $0x24] sm:$0xff]
    %v1547 = vld [vmem:[#allocation1 + $0x2d] sm:$0xff]
    %v1548 = vld [vmem:[#allocation1 + $0x36] sm:$0xff]
    %v1549 = vld [vmem:[#allocation1 + $0x3f] sm:$0xff]
    %1551 = vst [vmem:[#allocation1] ss:$9 sm:$0xff] %v881
    %v1552 = vld [vmem:[#allocation1] sm:$0xff]
    %v1553 = vld [vmem:[#allocation1 + $0x9] sm:$0xff]
    %v1554 = vld [vmem:[#allocation1 + $0x12] sm:$0xff]
    %v1555 = vld [vmem:[#allocation1 + $0x1b] sm:$0xff]
    %v2216 = vunpack.c.l.b16 %v882
    %v2217 = vunpack.c.h.b16 %v882
    %v2218 = vunpack.c.l.b16 %v883
    %v2219 = vunpack.c.l.b16 %v884
    %v2220 = vunpack.c.h.b16 %v884
    %v2221 = vunpack.c.l.b16 %v885
    %v2222 = vunpack.c.l.b16 %v886
    %v2223 = vunpack.c.h.b16 %v886
    %v2224 = vunpack.c.l.b16 %v887
    %v2225 = vunpack.c.l.b16 %v888
    %v2226 = vunpack.c.h.b16 %v888
    %v2227 = vunpack.c.l.b16 %v889
    %v2228 = vunpack.c.l.b16 %v890
    %v2229 = vunpack.c.h.b16 %v890
    %v2230 = vunpack.c.l.b16 %v891
    %v2231 = vunpack.c.l.b16 %v892
    %v2232 = vunpack.c.h.b16 %v892
    %v2233 = vunpack.c.l.b16 %v893
    %v2234 = vunpack.c.l.b16 %v894
    %v2235 = vunpack.c.h.b16 %v894
    %v2236 = vunpack.c.l.b16 %v895
    %v2237 = vunpack.c.l.b16 %v896
    %v2238 = vunpack.c.h.b16 %v896
    %v2239 = vunpack.c.l.b16 %v897
    %v2240 = vunpack.c.l.b16 %v898
    %v2241 = vunpack.c.h.b16 %v898
    %v2242 = vunpack.c.l.b16 %v899
    %v2243 = vunpack.c.l.b16 %v900
    %v2244 = vunpack.c.h.b16 %v900
    %v2245 = vunpack.c.l.b16 %v901
    %v2246 = vunpack.c.l.b16 %v902
    %v2247 = vunpack.c.h.b16 %v902
    %v2248 = vunpack.c.l.b16 %v903
    %v2249 = vunpack.c.l.b16 %v904
    %v2250 = vunpack.c.h.b16 %v904
    %v2251 = vunpack.c.l.b16 %v905
    %v2252 = vunpack.c.l.b16 %v906
    %v2253 = vunpack.c.h.b16 %v906
    %v2254 = vunpack.c.l.b16 %v907
    %v2255 = vunpack.c.l.b16 %v908
    %v2256 = vunpack.c.h.b16 %v908
    %v2257 = vunpack.c.l.b16 %v909
    %v2258 = vunpack.c.l.b16 %v910
    %v2259 = vunpack.c.h.b16 %v910
    %v2260 = vunpack.c.l.b16 %v911
    %v2261 = vunpack.c.l.b16 %v912
    %v2262 = vunpack.c.h.b16 %v912
    %v2263 = vunpack.c.l.b16 %v913
    %v2264 = vunpack.c.l.b16 %v914
    %v2265 = vunpack.c.h.b16 %v914
    %v2266 = vunpack.c.l.b16 %v915
    %v2267 = vunpack.c.l.b16 %v916
    %v2268 = vunpack.c.h.b16 %v916
    %v2269 = vunpack.c.l.b16 %v917
    %v2270 = vunpack.c.l.b16 %v918
    %v2271 = vunpack.c.h.b16 %v918
    %v2272 = vunpack.c.l.b16 %v919
    %v2273 = vunpack.c.l.b16 %v920
    %v2274 = vunpack.c.h.b16 %v920
    %v2275 = vunpack.c.l.b16 %v921
    %v2276 = vunpack.c.l.b16 %v922
    %v2277 = vunpack.c.h.b16 %v922
    %v2278 = vunpack.c.l.b16 %v923
    %v2279 = vunpack.c.l.b16 %v924
    %v2280 = vunpack.c.h.b16 %v924
    %v2281 = vunpack.c.l.b16 %v925
    %v2282 = vunpack.c.l.b16 %v926
    %v2283 = vunpack.c.h.b16 %v926
    %v2284 = vunpack.c.l.b16 %v927
    %v2285 = vunpack.c.l.b16 %v928
    %v2286 = vunpack.c.h.b16 %v928
    %v2287 = vunpack.c.l.b16 %v929
    %v2288 = vunpack.c.l.b16 %v930
    %v2289 = vunpack.c.h.b16 %v930
    %v2290 = vunpack.c.l.b16 %v931
    %v2291 = vunpack.c.l.b16 %v932
    %v2292 = vunpack.c.h.b16 %v932
    %v2293 = vunpack.c.l.b16 %v933
    %v2294 = vunpack.c.l.b16 %v934
    %v2295 = vunpack.c.h.b16 %v934
    %v2296 = vunpack.c.l.b16 %v935
    %v2297 = vunpack.c.l.b16 %v936
    %v2298 = vunpack.c.h.b16 %v936
    %v2299 = vunpack.c.l.b16 %v937
    %v2300 = vunpack.c.l.b16 %v938
    %v2301 = vunpack.c.h.b16 %v938
    %v2302 = vunpack.c.l.b16 %v939
    %v2303 = vunpack.c.l.b16 %v940
    %v2304 = vunpack.c.h.b16 %v940
    %v2305 = vunpack.c.l.b16 %v941
    %v2306 = vunpack.c.l.b16 %v942
    %v2307 = vunpack.c.h.b16 %v942
    %v2308 = vunpack.c.l.b16 %v943
    %v2309 = vunpack.c.l.b16 %v944
    %v2310 = vunpack.c.h.b16 %v944
    %v2311 = vunpack.c.l.b16 %v945
    %v2312 = vunpack.c.l.b16 %v946
    %v2313 = vunpack.c.h.b16 %v946
    %v2314 = vunpack.c.l.b16 %v947
    %v2315 = vunpack.c.l.b16 %v948
    %v2316 = vunpack.c.h.b16 %v948
    %v2317 = vunpack.c.l.b16 %v949
    %v2318 = vunpack.c.l.b16 %v950
    %v2319 = vunpack.c.h.b16 %v950
    %v2320 = vunpack.c.l.b16 %v951
    %v2321 = vunpack.c.l.b16 %v952
    %v2322 = vunpack.c.h.b16 %v952
    %v2323 = vunpack.c.l.b16 %v953
    %v2324 = vunpack.c.l.b16 %v954
    %v2325 = vunpack.c.h.b16 %v954
    %v2326 = vunpack.c.l.b16 %v955
    %v2327 = vunpack.c.l.b16 %v956
    %v2328 = vunpack.c.h.b16 %v956
    %v2329 = vunpack.c.l.b16 %v957
    %v2330 = vunpack.c.l.b16 %v958
    %v2331 = vunpack.c.h.b16 %v958
    %v2332 = vunpack.c.l.b16 %v959
    %v2333 = vunpack.c.l.b16 %v960
    %v2334 = vunpack.c.h.b16 %v960
    %v2335 = vunpack.c.l.b16 %v961
    %v2336 = vunpack.c.l.b16 %v962
    %v2337 = vunpack.c.h.b16 %v962
    %v2338 = vunpack.c.l.b16 %v963
    %v2339 = vunpack.c.l.b16 %v964
    %v2340 = vunpack.c.h.b16 %v964
    %v2341 = vunpack.c.l.b16 %v965
    %v2342 = vunpack.c.l.b16 %v966
    %v2343 = vunpack.c.h.b16 %v966
    %v2344 = vunpack.c.l.b16 %v967
    %v2345 = vunpack.c.l.b16 %v968
    %v2346 = vunpack.c.h.b16 %v968
    %v2347 = vunpack.c.l.b16 %v969
    %v2348 = vunpack.c.l.b16 %v970
    %v2349 = vunpack.c.h.b16 %v970
    %v2350 = vunpack.c.l.b16 %v971
    %v2351 = vunpack.c.l.b16 %v972
    %v2352 = vunpack.c.h.b16 %v972
    %v2353 = vunpack.c.l.b16 %v973
    %v2354 = vunpack.c.l.b16 %v974
    %v2355 = vunpack.c.h.b16 %v974
    %v2356 = vunpack.c.l.b16 %v975
    %v2357 = vunpack.c.l.b16 %v976
    %v2358 = vunpack.c.h.b16 %v976
    %v2359 = vunpack.c.l.b16 %v977
    %v2360 = vunpack.c.l.b16 %v978
    %v2361 = vunpack.c.h.b16 %v978
    %v2362 = vunpack.c.l.b16 %v979
    %v2363 = vunpack.c.l.b16 %v980
    %v2364 = vunpack.c.h.b16 %v980
    %v2365 = vunpack.c.l.b16 %v981
    %v2366 = vunpack.c.l.b16 %v982
    %v2367 = vunpack.c.h.b16 %v982
    %v2368 = vunpack.c.l.b16 %v983
    %v2369 = vunpack.c.l.b16 %v984
    %v2370 = vunpack.c.h.b16 %v984
    %v2371 = vunpack.c.l.b16 %v985
    %v2372 = vunpack.c.l.b16 %v986
    %v2373 = vunpack.c.h.b16 %v986
    %v2374 = vunpack.c.l.b16 %v987
    %v2375 = vunpack.c.l.b16 %v988
    %v2376 = vunpack.c.h.b16 %v988
    %v2377 = vunpack.c.l.b16 %v989
    %v2378 = vunpack.c.l.b16 %v990
    %v2379 = vunpack.c.h.b16 %v990
    %v2380 = vunpack.c.l.b16 %v991
    %v2381 = vunpack.c.l.b16 %v992
    %v2382 = vunpack.c.h.b16 %v992
    %v2383 = vunpack.c.l.b16 %v993
    %v2384 = vunpack.c.l.b16 %v994
    %v2385 = vunpack.c.h.b16 %v994
    %v2386 = vunpack.c.l.b16 %v995
    %v2387 = vunpack.c.l.b16 %v996
    %v2388 = vunpack.c.h.b16 %v996
    %v2389 = vunpack.c.l.b16 %v997
    %v2390 = vunpack.c.l.b16 %v998
    %v2391 = vunpack.c.h.b16 %v998
    %v2392 = vunpack.c.l.b16 %v999
    %v2393 = vunpack.c.l.b16 %v1000
    %v2394 = vunpack.c.h.b16 %v1000
    %v2395 = vunpack.c.l.b16 %v1001
    %v2396 = vunpack.c.l.b16 %v1002
    %v2397 = vunpack.c.h.b16 %v1002
    %v2398 = vunpack.c.l.b16 %v1003
    %v2399 = vunpack.c.l.b16 %v1004
    %v2400 = vunpack.c.h.b16 %v1004
    %v2401 = vunpack.c.l.b16 %v1005
    %v2402 = vunpack.c.l.b16 %v1006
    %v2403 = vunpack.c.h.b16 %v1006
    %v2404 = vunpack.c.l.b16 %v1007
    %v2405 = vunpack.c.l.b16 %v1008
    %v2406 = vunpack.c.h.b16 %v1008
    %v2407 = vunpack.c.l.b16 %v1009
    %v2408 = vunpack.c.l.b16 %v1010
    %v2409 = vunpack.c.h.b16 %v1010
    %v2410 = vunpack.c.l.b16 %v1011
    %v2411 = vunpack.c.l.b16 %v1012
    %v2412 = vunpack.c.h.b16 %v1012
    %v2413 = vunpack.c.l.b16 %v1013
    %v2414 = vunpack.c.l.b16 %v1014
    %v2415 = vunpack.c.h.b16 %v1014
    %v2416 = vunpack.c.l.b16 %v1015
    %v2417 = vunpack.c.l.b16 %v1016
    %v2418 = vunpack.c.h.b16 %v1016
    %v2419 = vunpack.c.l.b16 %v1017
    %v2420 = vunpack.c.l.b16 %v1018
    %v2421 = vunpack.c.h.b16 %v1018
    %v2422 = vunpack.c.l.b16 %v1019
    %v2423 = vunpack.c.l.b16 %v1020
    %v2424 = vunpack.c.h.b16 %v1020
    %v2425 = vunpack.c.l.b16 %v1021
    %v2426 = vunpack.c.l.b16 %v1022
    %v2427 = vunpack.c.h.b16 %v1022
    %v2428 = vunpack.c.l.b16 %v1023
    %v2429 = vunpack.c.l.b16 %v1024
    %v2430 = vunpack.c.h.b16 %v1024
    %v2431 = vunpack.c.l.b16 %v1025
    %v2432 = vunpack.c.l.b16 %v1026
    %v2433 = vunpack.c.h.b16 %v1026
    %v2434 = vunpack.c.l.b16 %v1027
    %v2435 = vunpack.c.l.b16 %v1028
    %v2436 = vunpack.c.h.b16 %v1028
    %v2437 = vunpack.c.l.b16 %v1029
    %v2438 = vunpack.c.l.b16 %v1030
    %v2439 = vunpack.c.h.b16 %v1030
    %v2440 = vunpack.c.l.b16 %v1031
    %v2441 = vunpack.c.l.b16 %v1032
    %v2442 = vunpack.c.h.b16 %v1032
    %v2443 = vunpack.c.l.b16 %v1033
    %v2444 = vunpack.c.l.b16 %v1034
    %v2445 = vunpack.c.h.b16 %v1034
    %v2446 = vunpack.c.l.b16 %v1035
    %v2447 = vunpack.c.l.b16 %v1036
    %v2448 = vunpack.c.h.b16 %v1036
    %v2449 = vunpack.c.l.b16 %v1037
    %v2450 = vunpack.c.l.b16 %v1038
    %v2451 = vunpack.c.h.b16 %v1038
    %v2452 = vunpack.c.l.b16 %v1039
    %v2453 = vunpack.c.l.b16 %v1040
    %v2454 = vunpack.c.h.b16 %v1040
    %v2455 = vunpack.c.l.b16 %v1041
    %v2456 = vunpack.c.l.b16 %v1042
    %v2457 = vunpack.c.h.b16 %v1042
    %v2458 = vunpack.c.l.b16 %v1043
    %v2459 = vunpack.c.l.b16 %v1044
    %v2460 = vunpack.c.h.b16 %v1044
    %v2461 = vunpack.c.l.b16 %v1045
    %v2462 = vunpack.c.l.b16 %v1046
    %v2463 = vunpack.c.h.b16 %v1046
    %v2464 = vunpack.c.l.b16 %v1047
    %v2465 = vunpack.c.l.b16 %v1048
    %v2466 = vunpack.c.h.b16 %v1048
    %v2467 = vunpack.c.l.b16 %v1049
    %v2468 = vunpack.c.l.b16 %v1050
    %v2469 = vunpack.c.h.b16 %v1050
    %v2470 = vunpack.c.l.b16 %v1051
    %v2471 = vunpack.c.l.b16 %v1052
    %v2472 = vunpack.c.h.b16 %v1052
    %v2473 = vunpack.c.l.b16 %v1053
    %v2474 = vunpack.c.l.b16 %v1054
    %v2475 = vunpack.c.h.b16 %v1054
    %v2476 = vunpack.c.l.b16 %v1055
    %v2477 = vunpack.c.l.b16 %v1056
    %v2478 = vunpack.c.h.b16 %v1056
    %v2479 = vunpack.c.l.b16 %v1057
    %v2480 = vunpack.c.l.b16 %v1058
    %v2481 = vunpack.c.h.b16 %v1058
    %v2482 = vunpack.c.l.b16 %v1059
    %v2483 = vunpack.c.l.b16 %v1060
    %v2484 = vunpack.c.h.b16 %v1060
    %v2485 = vunpack.c.l.b16 %v1061
    %v2486 = vunpack.c.l.b16 %v1062
    %v2487 = vunpack.c.h.b16 %v1062
    %v2488 = vunpack.c.l.b16 %v1063
    %v2489 = vunpack.c.l.b16 %v1064
    %v2490 = vunpack.c.h.b16 %v1064
    %v2491 = vunpack.c.l.b16 %v1065
    %v2492 = vunpack.c.l.b16 %v1066
    %v2493 = vunpack.c.h.b16 %v1066
    %v2494 = vunpack.c.l.b16 %v1067
    %v2495 = vunpack.c.l.b16 %v1068
    %v2496 = vunpack.c.h.b16 %v1068
    %v2497 = vunpack.c.l.b16 %v1069
    %v2498 = vunpack.c.l.b16 %v1070
    %v2499 = vunpack.c.h.b16 %v1070
    %v2500 = vunpack.c.l.b16 %v1071
    %v2501 = vunpack.c.l.b16 %v1072
    %v2502 = vunpack.c.h.b16 %v1072
    %v2503 = vunpack.c.l.b16 %v1073
    %v2504 = vunpack.c.l.b16 %v1074
    %v2505 = vunpack.c.h.b16 %v1074
    %v2506 = vunpack.c.l.b16 %v1075
    %v2507 = vunpack.c.l.b16 %v1076
    %v2508 = vunpack.c.h.b16 %v1076
    %v2509 = vunpack.c.l.b16 %v1077
    %v2510 = vunpack.c.l.b16 %v1078
    %v2511 = vunpack.c.h.b16 %v1078
    %v2512 = vunpack.c.l.b16 %v1079
    %v2513 = vunpack.c.l.b16 %v1080
    %v2514 = vunpack.c.h.b16 %v1080
    %v2515 = vunpack.c.l.b16 %v1081
    %v2516 = vunpack.c.l.b16 %v1082
    %v2517 = vunpack.c.h.b16 %v1082
    %v2518 = vunpack.c.l.b16 %v1083
    %v2519 = vunpack.c.l.b16 %v1084
    %v2520 = vunpack.c.h.b16 %v1084
    %v2521 = vunpack.c.l.b16 %v1085
    %v2522 = vunpack.c.l.b16 %v1086
    %v2523 = vunpack.c.h.b16 %v1086
    %v2524 = vunpack.c.l.b16 %v1087
    %v2525 = vunpack.c.l.b16 %v1088
    %v2526 = vunpack.c.h.b16 %v1088
    %v2527 = vunpack.c.l.b16 %v1089
    %v2528 = vunpack.c.l.b16 %v1090
    %v2529 = vunpack.c.h.b16 %v1090
    %v2530 = vunpack.c.l.b16 %v1091
    %v2531 = vunpack.c.l.b16 %v1092
    %v2532 = vunpack.c.h.b16 %v1092
    %v2533 = vunpack.c.l.b16 %v1093
    %v2534 = vunpack.c.l.b16 %v1094
    %v2535 = vunpack.c.h.b16 %v1094
    %v2536 = vunpack.c.l.b16 %v1095
    %v2537 = vunpack.c.l.b16 %v1096
    %v2538 = vunpack.c.h.b16 %v1096
    %v2539 = vunpack.c.l.b16 %v1097
    %v2540 = vunpack.c.l.b16 %v1098
    %v2541 = vunpack.c.h.b16 %v1098
    %v2542 = vunpack.c.l.b16 %v1099
    %v2543 = vunpack.c.l.b16 %v1100
    %v2544 = vunpack.c.h.b16 %v1100
    %v2545 = vunpack.c.l.b16 %v1101
    %v2546 = vunpack.c.l.b16 %v1102
    %v2547 = vunpack.c.h.b16 %v1102
    %v2548 = vunpack.c.l.b16 %v1103
    %v2549 = vunpack.c.l.b16 %v1104
    %v2550 = vunpack.c.h.b16 %v1104
    %v2551 = vunpack.c.l.b16 %v1105
    %v2552 = vunpack.c.l.b16 %v1106
    %v2553 = vunpack.c.h.b16 %v1106
    %v2554 = vunpack.c.l.b16 %v1107
    %v2555 = vunpack.c.l.b16 %v1108
    %v2556 = vunpack.c.h.b16 %v1108
    %v2557 = vunpack.c.l.b16 %v1109
    %v2558 = vunpack.c.l.b16 %v1110
    %v2559 = vunpack.c.h.b16 %v1110
    %v2560 = vunpack.c.l.b16 %v1111
    %v2561 = vunpack.c.l.b16 %v1112
    %v2562 = vunpack.c.h.b16 %v1112
    %v2563 = vunpack.c.l.b16 %v1113
    %v2564 = vunpack.c.l.b16 %v1114
    %v2565 = vunpack.c.h.b16 %v1114
    %v2566 = vunpack.c.l.b16 %v1115
    %v2567 = vunpack.c.l.b16 %v1116
    %v2568 = vunpack.c.h.b16 %v1116
    %v2569 = vunpack.c.l.b16 %v1117
    %v2570 = vunpack.c.l.b16 %v1118
    %v2571 = vunpack.c.h.b16 %v1118
    %v2572 = vunpack.c.l.b16 %v1119
    %v2573 = vunpack.c.l.b16 %v1120
    %v2574 = vunpack.c.h.b16 %v1120
    %v2575 = vunpack.c.l.b16 %v1121
    %v2576 = vunpack.c.l.b16 %v1122
    %v2577 = vunpack.c.h.b16 %v1122
    %v2578 = vunpack.c.l.b16 %v1123
    %v2579 = vunpack.c.l.b16 %v1124
    %v2580 = vunpack.c.h.b16 %v1124
    %v2581 = vunpack.c.l.b16 %v1125
    %v2582 = vunpack.c.l.b16 %v1126
    %v2583 = vunpack.c.h.b16 %v1126
    %v2584 = vunpack.c.l.b16 %v1127
    %v2585 = vunpack.c.l.b16 %v1128
    %v2586 = vunpack.c.h.b16 %v1128
    %v2587 = vunpack.c.l.b16 %v1129
    %v2588 = vunpack.c.l.b16 %v1130
    %v2589 = vunpack.c.h.b16 %v1130
    %v2590 = vunpack.c.l.b16 %v1131
    %v2591 = vunpack.c.l.b16 %v1132
    %v2592 = vunpack.c.h.b16 %v1132
    %v2593 = vunpack.c.l.b16 %v1133
    %v2594 = vunpack.c.l.b16 %v1134
    %v2595 = vunpack.c.h.b16 %v1134
    %v2596 = vunpack.c.l.b16 %v1135
    %v2597 = vunpack.c.l.b16 %v1136
    %v2598 = vunpack.c.h.b16 %v1136
    %v2599 = vunpack.c.l.b16 %v1137
    %v2600 = vunpack.c.l.b16 %v1138
    %v2601 = vunpack.c.h.b16 %v1138
    %v2602 = vunpack.c.l.b16 %v1139
    %v2603 = vunpack.c.l.b16 %v1140
    %v2604 = vunpack.c.h.b16 %v1140
    %v2605 = vunpack.c.l.b16 %v1141
    %v2606 = vunpack.c.l.b16 %v1142
    %v2607 = vunpack.c.h.b16 %v1142
    %v2608 = vunpack.c.l.b16 %v1143
    %v2609 = vunpack.c.l.b16 %v1144
    %v2610 = vunpack.c.h.b16 %v1144
    %v2611 = vunpack.c.l.b16 %v1145
    %v2612 = vunpack.c.l.b16 %v1146
    %v2613 = vunpack.c.h.b16 %v1146
    %v2614 = vunpack.c.l.b16 %v1147
    %v2615 = vunpack.c.l.b16 %v1148
    %v2616 = vunpack.c.h.b16 %v1148
    %v2617 = vunpack.c.l.b16 %v1149
    %v2618 = vunpack.c.l.b16 %v1150
    %v2619 = vunpack.c.h.b16 %v1150
    %v2620 = vunpack.c.l.b16 %v1151
    %v2621 = vunpack.c.l.b16 %v1152
    %v2622 = vunpack.c.h.b16 %v1152
    %v2623 = vunpack.c.l.b16 %v1153
    %v2624 = vunpack.c.l.b16 %v1154
    %v2625 = vunpack.c.h.b16 %v1154
    %v2626 = vunpack.c.l.b16 %v1155
    %v2627 = vunpack.c.l.b16 %v1156
    %v2628 = vunpack.c.h.b16 %v1156
    %v2629 = vunpack.c.l.b16 %v1157
    %v2630 = vunpack.c.l.b16 %v1158
    %v2631 = vunpack.c.h.b16 %v1158
    %v2632 = vunpack.c.l.b16 %v1159
    %v2633 = vunpack.c.l.b16 %v1160
    %v2634 = vunpack.c.h.b16 %v1160
    %v2635 = vunpack.c.l.b16 %v1161
    %v2636 = vunpack.c.l.b16 %v1162
    %v2637 = vunpack.c.h.b16 %v1162
    %v2638 = vunpack.c.l.b16 %v1163
    %v2639 = vunpack.c.l.b16 %v1164
    %v2640 = vunpack.c.h.b16 %v1164
    %v2641 = vunpack.c.l.b16 %v1165
    %v2642 = vunpack.c.l.b16 %v1166
    %v2643 = vunpack.c.h.b16 %v1166
    %v2644 = vunpack.c.l.b16 %v1167
    %v2645 = vunpack.c.l.b16 %v1168
    %v2646 = vunpack.c.h.b16 %v1168
    %v2647 = vunpack.c.l.b16 %v1169
    %v2648 = vunpack.c.l.b16 %v1170
    %v2649 = vunpack.c.h.b16 %v1170
    %v2650 = vunpack.c.l.b16 %v1171
    %v2651 = vunpack.c.l.b16 %v1172
    %v2652 = vunpack.c.h.b16 %v1172
    %v2653 = vunpack.c.l.b16 %v1173
    %v2654 = vunpack.c.l.b16 %v1174
    %v2655 = vunpack.c.h.b16 %v1174
    %v2656 = vunpack.c.l.b16 %v1175
    %v2657 = vunpack.c.l.b16 %v1176
    %v2658 = vunpack.c.h.b16 %v1176
    %v2659 = vunpack.c.l.b16 %v1177
    %v2660 = vunpack.c.l.b16 %v1178
    %v2661 = vunpack.c.h.b16 %v1178
    %v2662 = vunpack.c.l.b16 %v1179
    %v2663 = vunpack.c.l.b16 %v1180
    %v2664 = vunpack.c.h.b16 %v1180
    %v2665 = vunpack.c.l.b16 %v1181
    %v2666 = vunpack.c.l.b16 %v1182
    %v2667 = vunpack.c.h.b16 %v1182
    %v2668 = vunpack.c.l.b16 %v1183
    %v2669 = vunpack.c.l.b16 %v1184
    %v2670 = vunpack.c.h.b16 %v1184
    %v2671 = vunpack.c.l.b16 %v1185
    %v2672 = vunpack.c.l.b16 %v1186
    %v2673 = vunpack.c.h.b16 %v1186
    %v2674 = vunpack.c.l.b16 %v1187
    %v2675 = vunpack.c.l.b16 %v1188
    %v2676 = vunpack.c.h.b16 %v1188
    %v2677 = vunpack.c.l.b16 %v1189
    %v2678 = vunpack.c.l.b16 %v1190
    %v2679 = vunpack.c.h.b16 %v1190
    %v2680 = vunpack.c.l.b16 %v1191
    %v2681 = vunpack.c.l.b16 %v1192
    %v2682 = vunpack.c.h.b16 %v1192
    %v2683 = vunpack.c.l.b16 %v1193
    %v2684 = vunpack.c.l.b16 %v1194
    %v2685 = vunpack.c.h.b16 %v1194
    %v2686 = vunpack.c.l.b16 %v1195
    %v2687 = vunpack.c.l.b16 %v1196
    %v2688 = vunpack.c.h.b16 %v1196
    %v2689 = vunpack.c.l.b16 %v1197
    %v2690 = vunpack.c.l.b16 %v1198
    %v2691 = vunpack.c.h.b16 %v1198
    %v2692 = vunpack.c.l.b16 %v1199
    %v2693 = vunpack.c.l.b16 %v1200
    %v2694 = vunpack.c.h.b16 %v1200
    %v2695 = vunpack.c.l.b16 %v1201
    %v2696 = vunpack.c.l.b16 %v1202
    %v2697 = vunpack.c.h.b16 %v1202
    %v2698 = vunpack.c.l.b16 %v1203
    %v2699 = vunpack.c.l.b16 %v1204
    %v2700 = vunpack.c.h.b16 %v1204
    %v2701 = vunpack.c.l.b16 %v1205
    %v2702 = vunpack.c.l.b16 %v1206
    %v2703 = vunpack.c.h.b16 %v1206
    %v2704 = vunpack.c.l.b16 %v1207
    %v2705 = vunpack.c.l.b16 %v1208
    %v2706 = vunpack.c.h.b16 %v1208
    %v2707 = vunpack.c.l.b16 %v1209
    %v2708 = vunpack.c.l.b16 %v1210
    %v2709 = vunpack.c.h.b16 %v1210
    %v2710 = vunpack.c.l.b16 %v1211
    %v2711 = vunpack.c.l.b16 %v1212
    %v2712 = vunpack.c.h.b16 %v1212
    %v2713 = vunpack.c.l.b16 %v1213
    %v2714 = vunpack.c.l.b16 %v1214
    %v2715 = vunpack.c.h.b16 %v1214
    %v2716 = vunpack.c.l.b16 %v1215
    %v2717 = vunpack.c.l.b16 %v1216
    %v2718 = vunpack.c.h.b16 %v1216
    %v2719 = vunpack.c.l.b16 %v1217
    %v2720 = vunpack.c.l.b16 %v1218
    %v2721 = vunpack.c.h.b16 %v1218
    %v2722 = vunpack.c.l.b16 %v1219
    %v2723 = vunpack.c.l.b16 %v1220
    %v2724 = vunpack.c.h.b16 %v1220
    %v2725 = vunpack.c.l.b16 %v1221
    %v2726 = vunpack.c.l.b16 %v1222
    %v2727 = vunpack.c.h.b16 %v1222
    %v2728 = vunpack.c.l.b16 %v1223
    %v2729 = vunpack.c.l.b16 %v1224
    %v2730 = vunpack.c.h.b16 %v1224
    %v2731 = vunpack.c.l.b16 %v1225
    %v2732 = vunpack.c.l.b16 %v1226
    %v2733 = vunpack.c.h.b16 %v1226
    %v2734 = vunpack.c.l.b16 %v1227
    %v2735 = vunpack.c.l.b16 %v1228
    %v2736 = vunpack.c.h.b16 %v1228
    %v2737 = vunpack.c.l.b16 %v1229
    %v2738 = vunpack.c.l.b16 %v1230
    %v2739 = vunpack.c.h.b16 %v1230
    %v2740 = vunpack.c.l.b16 %v1231
    %v2741 = vunpack.c.l.b16 %v1232
    %v2742 = vunpack.c.h.b16 %v1232
    %v2743 = vunpack.c.l.b16 %v1233
    %v2744 = vunpack.c.l.b16 %v1234
    %v2745 = vunpack.c.h.b16 %v1234
    %v2746 = vunpack.c.l.b16 %v1235
    %v2747 = vunpack.c.l.b16 %v1236
    %v2748 = vunpack.c.h.b16 %v1236
    %v2749 = vunpack.c.l.b16 %v1237
    %v2750 = vunpack.c.l.b16 %v1238
    %v2751 = vunpack.c.h.b16 %v1238
    %v2752 = vunpack.c.l.b16 %v1239
    %v2753 = vunpack.c.l.b16 %v1240
    %v2754 = vunpack.c.h.b16 %v1240
    %v2755 = vunpack.c.l.b16 %v1241
    %v2756 = vunpack.c.l.b16 %v1242
    %v2757 = vunpack.c.h.b16 %v1242
    %v2758 = vunpack.c.l.b16 %v1243
    %v2759 = vunpack.c.l.b16 %v1244
    %v2760 = vunpack.c.h.b16 %v1244
    %v2761 = vunpack.c.l.b16 %v1245
    %v2762 = vunpack.c.l.b16 %v1246
    %v2763 = vunpack.c.h.b16 %v1246
    %v2764 = vunpack.c.l.b16 %v1247
    %v2765 = vunpack.c.l.b16 %v1248
    %v2766 = vunpack.c.h.b16 %v1248
    %v2767 = vunpack.c.l.b16 %v1249
    %v2768 = vunpack.c.l.b16 %v1250
    %v2769 = vunpack.c.h.b16 %v1250
    %v2770 = vunpack.c.l.b16 %v1251
    %v2771 = vunpack.c.l.b16 %v1252
    %v2772 = vunpack.c.h.b16 %v1252
    %v2773 = vunpack.c.l.b16 %v1253
    %v2774 = vunpack.c.l.b16 %v1254
    %v2775 = vunpack.c.h.b16 %v1254
    %v2776 = vunpack.c.l.b16 %v1255
    %v2777 = vunpack.c.l.b16 %v1256
    %v2778 = vunpack.c.h.b16 %v1256
    %v2779 = vunpack.c.l.b16 %v1257
    %v2780 = vunpack.c.l.b16 %v1258
    %v2781 = vunpack.c.h.b16 %v1258
    %v2782 = vunpack.c.l.b16 %v1259
    %v2783 = vunpack.c.l.b16 %v1260
    %v2784 = vunpack.c.h.b16 %v1260
    %v2785 = vunpack.c.l.b16 %v1261
    %v2786 = vunpack.c.l.b16 %v1262
    %v2787 = vunpack.c.h.b16 %v1262
    %v2788 = vunpack.c.l.b16 %v1263
    %v2789 = vunpack.c.l.b16 %v1264
    %v2790 = vunpack.c.h.b16 %v1264
    %v2791 = vunpack.c.l.b16 %v1265
    %v2792 = vunpack.c.l.b16 %v1266
    %v2793 = vunpack.c.h.b16 %v1266
    %v2794 = vunpack.c.l.b16 %v1267
    %v2795 = vunpack.c.l.b16 %v1268
    %v2796 = vunpack.c.h.b16 %v1268
    %v2797 = vunpack.c.l.b16 %v1269
    %v2798 = vunpack.c.l.b16 %v1270
    %v2799 = vunpack.c.h.b16 %v1270
    %v2800 = vunpack.c.l.b16 %v1271
    %v2801 = vunpack.c.l.b16 %v1272
    %v2802 = vunpack.c.h.b16 %v1272
    %v2803 = vunpack.c.l.b16 %v1273
    %v2804 = vunpack.c.l.b16 %v1274
    %v2805 = vunpack.c.h.b16 %v1274
    %v2806 = vunpack.c.l.b16 %v1275
    %v2807 = vunpack.c.l.b16 %v1276
    %v2808 = vunpack.c.h.b16 %v1276
    %v2809 = vunpack.c.l.b16 %v1277
    %v2810 = vunpack.c.l.b16 %v1278
    %v2811 = vunpack.c.h.b16 %v1278
    %v2812 = vunpack.c.l.b16 %v1279
    %v2813 = vunpack.c.l.b16 %v1280
    %v2814 = vunpack.c.h.b16 %v1280
    %v2815 = vunpack.c.l.b16 %v1281
    %v2816 = vunpack.c.l.b16 %v1282
    %v2817 = vunpack.c.h.b16 %v1282
    %v2818 = vunpack.c.l.b16 %v1283
    %v2819 = vunpack.c.l.b16 %v1284
    %v2820 = vunpack.c.h.b16 %v1284
    %v2821 = vunpack.c.l.b16 %v1285
    %v2822 = vunpack.c.l.b16 %v1286
    %v2823 = vunpack.c.h.b16 %v1286
    %v2824 = vunpack.c.l.b16 %v1287
    %v2825 = vunpack.c.l.b16 %v1288
    %v2826 = vunpack.c.h.b16 %v1288
    %v2827 = vunpack.c.l.b16 %v1289
    %v2828 = vunpack.c.l.b16 %v1290
    %v2829 = vunpack.c.h.b16 %v1290
    %v2830 = vunpack.c.l.b16 %v1291
    %v2831 = vunpack.c.l.b16 %v1292
    %v2832 = vunpack.c.h.b16 %v1292
    %v2833 = vunpack.c.l.b16 %v1293
    %v2834 = vunpack.c.l.b16 %v1294
    %v2835 = vunpack.c.h.b16 %v1294
    %v2836 = vunpack.c.l.b16 %v1295
    %v2837 = vunpack.c.l.b16 %v1296
    %v2838 = vunpack.c.h.b16 %v1296
    %v2839 = vunpack.c.l.b16 %v1297
    %v2840 = vunpack.c.l.b16 %v1298
    %v2841 = vunpack.c.h.b16 %v1298
    %v2842 = vunpack.c.l.b16 %v1299
    %v2843 = vunpack.c.l.b16 %v1300
    %v2844 = vunpack.c.h.b16 %v1300
    %v2845 = vunpack.c.l.b16 %v1301
    %v2846 = vunpack.c.l.b16 %v1302
    %v2847 = vunpack.c.h.b16 %v1302
    %v2848 = vunpack.c.l.b16 %v1303
    %v2849 = vunpack.c.l.b16 %v1304
    %v2850 = vunpack.c.h.b16 %v1304
    %v2851 = vunpack.c.l.b16 %v1305
    %v2852 = vunpack.c.l.b16 %v1306
    %v2853 = vunpack.c.h.b16 %v1306
    %v2854 = vunpack.c.l.b16 %v1307
    %v2855 = vunpack.c.l.b16 %v1308
    %v2856 = vunpack.c.h.b16 %v1308
    %v2857 = vunpack.c.l.b16 %v1309
    %v2858 = vunpack.c.l.b16 %v1310
    %v2859 = vunpack.c.h.b16 %v1310
    %v2860 = vunpack.c.l.b16 %v1311
    %v2861 = vunpack.c.l.b16 %v1312
    %v2862 = vunpack.c.h.b16 %v1312
    %v2863 = vunpack.c.l.b16 %v1313
    %v2864 = vunpack.c.l.b16 %v1314
    %v2865 = vunpack.c.h.b16 %v1314
    %v2866 = vunpack.c.l.b16 %v1315
    %v2867 = vunpack.c.l.b16 %v1316
    %v2868 = vunpack.c.h.b16 %v1316
    %v2869 = vunpack.c.l.b16 %v1317
    %v2870 = vunpack.c.l.b16 %v1318
    %v2871 = vunpack.c.h.b16 %v1318
    %v2872 = vunpack.c.l.b16 %v1319
    %v2873 = vunpack.c.l.b16 %v1320
    %v2874 = vunpack.c.h.b16 %v1320
    %v2875 = vunpack.c.l.b16 %v1321
    %v2876 = vunpack.c.l.b16 %v1322
    %v2877 = vunpack.c.h.b16 %v1322
    %v2878 = vunpack.c.l.b16 %v1323
    %v2879 = vunpack.c.l.b16 %v1324
    %v2880 = vunpack.c.h.b16 %v1324
    %v2881 = vunpack.c.l.b16 %v1325
    %v2882 = vunpack.c.l.b16 %v1326
    %v2883 = vunpack.c.h.b16 %v1326
    %v2884 = vunpack.c.l.b16 %v1327
    %v2885 = vunpack.c.l.b16 %v1328
    %v2886 = vunpack.c.h.b16 %v1328
    %v2887 = vunpack.c.l.b16 %v1329
    %v2888 = vunpack.c.l.b16 %v1330
    %v2889 = vunpack.c.h.b16 %v1330
    %v2890 = vunpack.c.l.b16 %v1331
    %v2891 = vunpack.c.l.b16 %v1332
    %v2892 = vunpack.c.h.b16 %v1332
    %v2893 = vunpack.c.l.b16 %v1333
    %v2894 = vunpack.c.l.b16 %v1334
    %v2895 = vunpack.c.h.b16 %v1334
    %v2896 = vunpack.c.l.b16 %v1335
    %v2897 = vunpack.c.l.b16 %v1336
    %v2898 = vunpack.c.h.b16 %v1336
    %v2899 = vunpack.c.l.b16 %v1337
    %v2900 = vunpack.c.l.b16 %v1338
    %v2901 = vunpack.c.h.b16 %v1338
    %v2902 = vunpack.c.l.b16 %v1339
    %v2903 = vunpack.c.l.b16 %v1340
    %v2904 = vunpack.c.h.b16 %v1340
    %v2905 = vunpack.c.l.b16 %v1341
    %v2906 = vunpack.c.l.b16 %v1342
    %v2907 = vunpack.c.h.b16 %v1342
    %v2908 = vunpack.c.l.b16 %v1343
    %v2909 = vunpack.c.l.b16 %v1344
    %v2910 = vunpack.c.h.b16 %v1344
    %v2911 = vunpack.c.l.b16 %v1345
    %v2912 = vunpack.c.l.b16 %v1346
    %v2913 = vunpack.c.h.b16 %v1346
    %v2914 = vunpack.c.l.b16 %v1347
    %v2915 = vunpack.c.l.b16 %v1348
    %v2916 = vunpack.c.h.b16 %v1348
    %v2917 = vunpack.c.l.b16 %v1349
    %v2918 = vunpack.c.l.b16 %v1350
    %v2919 = vunpack.c.h.b16 %v1350
    %v2920 = vunpack.c.l.b16 %v1351
    %v2921 = vunpack.c.l.b16 %v1352
    %v2922 = vunpack.c.h.b16 %v1352
    %v2923 = vunpack.c.l.b16 %v1353
    %v2924 = vunpack.c.l.b16 %v1354
    %v2925 = vunpack.c.h.b16 %v1354
    %v2926 = vunpack.c.l.b16 %v1355
    %v2927 = vunpack.c.l.b16 %v1356
    %v2928 = vunpack.c.h.b16 %v1356
    %v2929 = vunpack.c.l.b16 %v1357
    %v2930 = vunpack.c.l.b16 %v1358
    %v2931 = vunpack.c.h.b16 %v1358
    %v2932 = vunpack.c.l.b16 %v1359
    %v2933 = vunpack.c.l.b16 %v1360
    %v2934 = vunpack.c.h.b16 %v1360
    %v2935 = vunpack.c.l.b16 %v1361
    %v2936 = vunpack.c.l.b16 %v1362
    %v2937 = vunpack.c.h.b16 %v1362
    %v2938 = vunpack.c.l.b16 %v1363
    %v2939 = vunpack.c.l.b16 %v1364
    %v2940 = vunpack.c.h.b16 %v1364
    %v2941 = vunpack.c.l.b16 %v1365
    %v2942 = vunpack.c.l.b16 %v1366
    %v2943 = vunpack.c.h.b16 %v1366
    %v2944 = vunpack.c.l.b16 %v1367
    %v2945 = vunpack.c.l.b16 %v1368
    %v2946 = vunpack.c.h.b16 %v1368
    %v2947 = vunpack.c.l.b16 %v1369
    %v2948 = vunpack.c.l.b16 %v1370
    %v2949 = vunpack.c.h.b16 %v1370
    %v2950 = vunpack.c.l.b16 %v1371
    %v2951 = vunpack.c.l.b16 %v1372
    %v2952 = vunpack.c.h.b16 %v1372
    %v2953 = vunpack.c.l.b16 %v1373
    %v2954 = vunpack.c.l.b16 %v1374
    %v2955 = vunpack.c.h.b16 %v1374
    %v2956 = vunpack.c.l.b16 %v1375
    %v2957 = vunpack.c.l.b16 %v1376
    %v2958 = vunpack.c.h.b16 %v1376
    %v2959 = vunpack.c.l.b16 %v1377
    %v2960 = vunpack.c.l.b16 %v1378
    %v2961 = vunpack.c.h.b16 %v1378
    %v2962 = vunpack.c.l.b16 %v1379
    %v2963 = vunpack.c.l.b16 %v1380
    %v2964 = vunpack.c.h.b16 %v1380
    %v2965 = vunpack.c.l.b16 %v1381
    %v2966 = vunpack.c.l.b16 %v1382
    %v2967 = vunpack.c.h.b16 %v1382
    %v2968 = vunpack.c.l.b16 %v1383
    %v2969 = vunpack.c.l.b16 %v1384
    %v2970 = vunpack.c.h.b16 %v1384
    %v2971 = vunpack.c.l.b16 %v1385
    %v2972 = vunpack.c.l.b16 %v1386
    %v2973 = vunpack.c.h.b16 %v1386
    %v2974 = vunpack.c.l.b16 %v1387
    %v2975 = vunpack.c.l.b16 %v1388
    %v2976 = vunpack.c.h.b16 %v1388
    %v2977 = vunpack.c.l.b16 %v1389
    %v2978 = vunpack.c.l.b16 %v1390
    %v2979 = vunpack.c.h.b16 %v1390
    %v2980 = vunpack.c.l.b16 %v1391
    %v2981 = vunpack.c.l.b16 %v1392
    %v2982 = vunpack.c.h.b16 %v1392
    %v2983 = vunpack.c.l.b16 %v1393
    %v2984 = vunpack.c.l.b16 %v1394
    %v2985 = vunpack.c.h.b16 %v1394
    %v2986 = vunpack.c.l.b16 %v1395
    %v2987 = vunpack.c.l.b16 %v1396
    %v2988 = vunpack.c.h.b16 %v1396
    %v2989 = vunpack.c.l.b16 %v1397
    %v2990 = vunpack.c.l.b16 %v1398
    %v2991 = vunpack.c.h.b16 %v1398
    %v2992 = vunpack.c.l.b16 %v1399
    %v2993 = vunpack.c.l.b16 %v1400
    %v2994 = vunpack.c.h.b16 %v1400
    %v2995 = vunpack.c.l.b16 %v1401
    %v2996 = vunpack.c.l.b16 %v1402
    %v2997 = vunpack.c.h.b16 %v1402
    %v2998 = vunpack.c.l.b16 %v1403
    %v2999 = vunpack.c.l.b16 %v1404
    %v3000 = vunpack.c.h.b16 %v1404
    %v3001 = vunpack.c.l.b16 %v1405
    %v3002 = vunpack.c.l.b16 %v1406
    %v3003 = vunpack.c.h.b16 %v1406
    %v3004 = vunpack.c.l.b16 %v1407
    %v3005 = vunpack.c.l.b16 %v1408
    %v3006 = vunpack.c.h.b16 %v1408
    %v3007 = vunpack.c.l.b16 %v1409
    %v3008 = vunpack.c.l.b16 %v1410
    %v3009 = vunpack.c.h.b16 %v1410
    %v3010 = vunpack.c.l.b16 %v1411
    %v3011 = vunpack.c.l.b16 %v1412
    %v3012 = vunpack.c.h.b16 %v1412
    %v3013 = vunpack.c.l.b16 %v1413
    %v3014 = vunpack.c.l.b16 %v1414
    %v3015 = vunpack.c.h.b16 %v1414
    %v3016 = vunpack.c.l.b16 %v1415
    %v3017 = vunpack.c.l.b16 %v1416
    %v3018 = vunpack.c.h.b16 %v1416
    %v3019 = vunpack.c.l.b16 %v1417
    %v3020 = vunpack.c.l.b16 %v1418
    %v3021 = vunpack.c.h.b16 %v1418
    %v3022 = vunpack.c.l.b16 %v1419
    %v3023 = vunpack.c.l.b16 %v1420
    %v3024 = vunpack.c.h.b16 %v1420
    %v3025 = vunpack.c.l.b16 %v1421
    %v3026 = vunpack.c.l.b16 %v1422
    %v3027 = vunpack.c.h.b16 %v1422
    %v3028 = vunpack.c.l.b16 %v1423
    %v3029 = vunpack.c.l.b16 %v1424
    %v3030 = vunpack.c.h.b16 %v1424
    %v3031 = vunpack.c.l.b16 %v1425
    %v3032 = vunpack.c.l.b16 %v1426
    %v3033 = vunpack.c.h.b16 %v1426
    %v3034 = vunpack.c.l.b16 %v1427
    %v3035 = vunpack.c.l.b16 %v1428
    %v3036 = vunpack.c.h.b16 %v1428
    %v3037 = vunpack.c.l.b16 %v1429
    %v3038 = vunpack.c.l.b16 %v1430
    %v3039 = vunpack.c.h.b16 %v1430
    %v3040 = vunpack.c.l.b16 %v1431
    %v3041 = vunpack.c.l.b16 %v1432
    %v3042 = vunpack.c.h.b16 %v1432
    %v3043 = vunpack.c.l.b16 %v1433
    %v3044 = vunpack.c.l.b16 %v1434
    %v3045 = vunpack.c.h.b16 %v1434
    %v3046 = vunpack.c.l.b16 %v1435
    %v3047 = vunpack.c.l.b16 %v1436
    %v3048 = vunpack.c.h.b16 %v1436
    %v3049 = vunpack.c.l.b16 %v1437
    %v3050 = vunpack.c.l.b16 %v1438
    %v3051 = vunpack.c.h.b16 %v1438
    %v3052 = vunpack.c.l.b16 %v1439
    %v3053 = vunpack.c.l.b16 %v1440
    %v3054 = vunpack.c.h.b16 %v1440
    %v3055 = vunpack.c.l.b16 %v1441
    %v3056 = vunpack.c.l.b16 %v1442
    %v3057 = vunpack.c.h.b16 %v1442
    %v3058 = vunpack.c.l.b16 %v1443
    %v3059 = vunpack.c.l.b16 %v1444
    %v3060 = vunpack.c.h.b16 %v1444
    %v3061 = vunpack.c.l.b16 %v1445
    %v3062 = vunpack.c.l.b16 %v1446
    %v3063 = vunpack.c.h.b16 %v1446
    %v3064 = vunpack.c.l.b16 %v1447
    %v3065 = vunpack.c.l.b16 %v1448
    %v3066 = vunpack.c.h.b16 %v1448
    %v3067 = vunpack.c.l.b16 %v1449
    %v3068 = vunpack.c.l.b16 %v1450
    %v3069 = vunpack.c.h.b16 %v1450
    %v3070 = vunpack.c.l.b16 %v1451
    %v3071 = vunpack.c.l.b16 %v1452
    %v3072 = vunpack.c.h.b16 %v1452
    %v3073 = vunpack.c.l.b16 %v1453
    %v3074 = vunpack.c.l.b16 %v1454
    %v3075 = vunpack.c.h.b16 %v1454
    %v3076 = vunpack.c.l.b16 %v1455
    %v3077 = vunpack.c.l.b16 %v1456
    %v3078 = vunpack.c.h.b16 %v1456
    %v3079 = vunpack.c.l.b16 %v1457
    %v3080 = vunpack.c.l.b16 %v1458
    %v3081 = vunpack.c.h.b16 %v1458
    %v3082 = vunpack.c.l.b16 %v1459
    %v3083 = vunpack.c.l.b16 %v1460
    %v3084 = vunpack.c.h.b16 %v1460
    %v3085 = vunpack.c.l.b16 %v1461
    %v3086 = vunpack.c.l.b16 %v1462
    %v3087 = vunpack.c.h.b16 %v1462
    %v3088 = vunpack.c.l.b16 %v1463
    %v3089 = vunpack.c.l.b16 %v1464
    %v3090 = vunpack.c.h.b16 %v1464
    %v3091 = vunpack.c.l.b16 %v1465
    %v3092 = vunpack.c.l.b16 %v1466
    %v3093 = vunpack.c.h.b16 %v1466
    %v3094 = vunpack.c.l.b16 %v1467
    %v3095 = vunpack.c.l.b16 %v1468
    %v3096 = vunpack.c.h.b16 %v1468
    %v3097 = vunpack.c.l.b16 %v1469
    %v3098 = vunpack.c.l.b16 %v1470
    %v3099 = vunpack.c.h.b16 %v1470
    %v3100 = vunpack.c.l.b16 %v1471
    %v3101 = vunpack.c.l.b16 %v1472
    %v3102 = vunpack.c.h.b16 %v1472
    %v3103 = vunpack.c.l.b16 %v1473
    %v3104 = vunpack.c.l.b16 %v1474
    %v3105 = vunpack.c.h.b16 %v1474
    %v3106 = vunpack.c.l.b16 %v1475
    %v3107 = vunpack.c.l.b16 %v1476
    %v3108 = vunpack.c.h.b16 %v1476
    %v3109 = vunpack.c.l.b16 %v1477
    %v3110 = vunpack.c.l.b16 %v1478
    %v3111 = vunpack.c.h.b16 %v1478
    %v3112 = vunpack.c.l.b16 %v1479
    %v3113 = vunpack.c.l.b16 %v1480
    %v3114 = vunpack.c.h.b16 %v1480
    %v3115 = vunpack.c.l.b16 %v1481
    %v3116 = vunpack.c.l.b16 %v1482
    %v3117 = vunpack.c.h.b16 %v1482
    %v3118 = vunpack.c.l.b16 %v1483
    %v3119 = vunpack.c.l.b16 %v1484
    %v3120 = vunpack.c.h.b16 %v1484
    %v3121 = vunpack.c.l.b16 %v1485
    %v3122 = vunpack.c.l.b16 %v1486
    %v3123 = vunpack.c.h.b16 %v1486
    %v3124 = vunpack.c.l.b16 %v1487
    %v3125 = vunpack.c.l.b16 %v1488
    %v3126 = vunpack.c.h.b16 %v1488
    %v3127 = vunpack.c.l.b16 %v1489
    %v3128 = vunpack.c.l.b16 %v1490
    %v3129 = vunpack.c.h.b16 %v1490
    %v3130 = vunpack.c.l.b16 %v1491
    %v3131 = vunpack.c.l.b16 %v1492
    %v3132 = vunpack.c.h.b16 %v1492
    %v3133 = vunpack.c.l.b16 %v1493
    %v3134 = vunpack.c.l.b16 %v1494
    %v3135 = vunpack.c.h.b16 %v1494
    %v3136 = vunpack.c.l.b16 %v1495
    %v3137 = vunpack.c.l.b16 %v1496
    %v3138 = vunpack.c.h.b16 %v1496
    %v3139 = vunpack.c.l.b16 %v1497
    %v3140 = vunpack.c.l.b16 %v1498
    %v3141 = vunpack.c.h.b16 %v1498
    %v3142 = vunpack.c.l.b16 %v1499
    %v3143 = vunpack.c.l.b16 %v1500
    %v3144 = vunpack.c.h.b16 %v1500
    %v3145 = vunpack.c.l.b16 %v1501
    %v3146 = vunpack.c.l.b16 %v1502
    %v3147 = vunpack.c.h.b16 %v1502
    %v3148 = vunpack.c.l.b16 %v1503
    %v3149 = vunpack.c.l.b16 %v1504
    %v3150 = vunpack.c.h.b16 %v1504
    %v3151 = vunpack.c.l.b16 %v1505
    %v3152 = vunpack.c.l.b16 %v1506
    %v3153 = vunpack.c.h.b16 %v1506
    %v3154 = vunpack.c.l.b16 %v1507
    %v3155 = vunpack.c.l.b16 %v1508
    %v3156 = vunpack.c.h.b16 %v1508
    %v3157 = vunpack.c.l.b16 %v1509
    %v3158 = vunpack.c.l.b16 %v1510
    %v3159 = vunpack.c.h.b16 %v1510
    %v3160 = vunpack.c.l.b16 %v1511
    %v3161 = vunpack.c.l.b16 %v1512
    %v3162 = vunpack.c.h.b16 %v1512
    %v3163 = vunpack.c.l.b16 %v1513
    %v3164 = vunpack.c.l.b16 %v1514
    %v3165 = vunpack.c.h.b16 %v1514
    %v3166 = vunpack.c.l.b16 %v1515
    %v3167 = vunpack.c.l.b16 %v1516
    %v3168 = vunpack.c.h.b16 %v1516
    %v3169 = vunpack.c.l.b16 %v1517
    %v3170 = vunpack.c.l.b16 %v1518
    %v3171 = vunpack.c.h.b16 %v1518
    %v3172 = vunpack.c.l.b16 %v1519
    %v3173 = vunpack.c.l.b16 %v1520
    %v3174 = vunpack.c.h.b16 %v1520
    %v3175 = vunpack.c.l.b16 %v1521
    %v3176 = vpack.c.b16 %v2219, %v2216
    %v3177 = vpack.c.b16 %v2220, %v2217
    %v3178 = vpack.c.b16 %v2221, %v2218
    %v3179 = vpack.c.b16 %v2225, %v2222
    %v3180 = vpack.c.b16 %v2226, %v2223
    %v3181 = vpack.c.b16 %v2227, %v2224
    %v3182 = vpack.c.b16 %v2231, %v2228
    %v3183 = vpack.c.b16 %v2232, %v2229
    %v3184 = vpack.c.b16 %v2233, %v2230
    %v3185 = vpack.c.b16 %v2237, %v2234
    %v3186 = vpack.c.b16 %v2238, %v2235
    %v3187 = vpack.c.b16 %v2239, %v2236
    %v3188 = vpack.c.b16 %v2243, %v2240
    %v3189 = vpack.c.b16 %v2244, %v2241
    %v3190 = vpack.c.b16 %v2245, %v2242
    %v3191 = vpack.c.b16 %v2249, %v2246
    %v3192 = vpack.c.b16 %v2250, %v2247
    %v3193 = vpack.c.b16 %v2251, %v2248
    %v3194 = vpack.c.b16 %v2255, %v2252
    %v3195 = vpack.c.b16 %v2256, %v2253
    %v3196 = vpack.c.b16 %v2257, %v2254
    %v3197 = vpack.c.b16 %v2261, %v2258
    %v3198 = vpack.c.b16 %v2262, %v2259
    %v3199 = vpack.c.b16 %v2263, %v2260
    %v3200 = vpack.c.b16 %v2267, %v2264
    %v3201 = vpack.c.b16 %v2268, %v2265
    %v3202 = vpack.c.b16 %v2269, %v2266
    %v3203 = vpack.c.b16 %v2273, %v2270
    %v3204 = vpack.c.b16 %v2274, %v2271
    %v3205 = vpack.c.b16 %v2275, %v2272
    %v3206 = vpack.c.b16 %v2279, %v2276
    %v3207 = vpack.c.b16 %v2280, %v2277
    %v3208 = vpack.c.b16 %v2281, %v2278
    %v3209 = vpack.c.b16 %v2285, %v2282
    %v3210 = vpack.c.b16 %v2286, %v2283
    %v3211 = vpack.c.b16 %v2287, %v2284
    %v3212 = vpack.c.b16 %v2291, %v2288
    %v3213 = vpack.c.b16 %v2292, %v2289
    %v3214 = vpack.c.b16 %v2293, %v2290
    %v3215 = vpack.c.b16 %v2297, %v2294
    %v3216 = vpack.c.b16 %v2298, %v2295
    %v3217 = vpack.c.b16 %v2299, %v2296
    %v3218 = vpack.c.b16 %v2303, %v2300
    %v3219 = vpack.c.b16 %v2304, %v2301
    %v3220 = vpack.c.b16 %v2305, %v2302
    %v3221 = vpack.c.b16 %v2309, %v2306
    %v3222 = vpack.c.b16 %v2310, %v2307
    %v3223 = vpack.c.b16 %v2311, %v2308
    %v3224 = vpack.c.b16 %v2315, %v2312
    %v3225 = vpack.c.b16 %v2316, %v2313
    %v3226 = vpack.c.b16 %v2317, %v2314
    %v3227 = vpack.c.b16 %v2321, %v2318
    %v3228 = vpack.c.b16 %v2322, %v2319
    %v3229 = vpack.c.b16 %v2323, %v2320
    %v3230 = vpack.c.b16 %v2327, %v2324
    %v3231 = vpack.c.b16 %v2328, %v2325
    %v3232 = vpack.c.b16 %v2329, %v2326
    %v3233 = vpack.c.b16 %v2333, %v2330
    %v3234 = vpack.c.b16 %v2334, %v2331
    %v3235 = vpack.c.b16 %v2335, %v2332
    %v3236 = vpack.c.b16 %v2339, %v2336
    %v3237 = vpack.c.b16 %v2340, %v2337
    %v3238 = vpack.c.b16 %v2341, %v2338
    %v3239 = vpack.c.b16 %v2345, %v2342
    %v3240 = vpack.c.b16 %v2346, %v2343
    %v3241 = vpack.c.b16 %v2347, %v2344
    %v3242 = vpack.c.b16 %v2351, %v2348
    %v3243 = vpack.c.b16 %v2352, %v2349
    %v3244 = vpack.c.b16 %v2353, %v2350
    %v3245 = vpack.c.b16 %v2357, %v2354
    %v3246 = vpack.c.b16 %v2358, %v2355
    %v3247 = vpack.c.b16 %v2359, %v2356
    %v3248 = vpack.c.b16 %v2363, %v2360
    %v3249 = vpack.c.b16 %v2364, %v2361
    %v3250 = vpack.c.b16 %v2365, %v2362
    %v3251 = vpack.c.b16 %v2369, %v2366
    %v3252 = vpack.c.b16 %v2370, %v2367
    %v3253 = vpack.c.b16 %v2371, %v2368
    %v3254 = vpack.c.b16 %v2375, %v2372
    %v3255 = vpack.c.b16 %v2376, %v2373
    %v3256 = vpack.c.b16 %v2377, %v2374
    %v3257 = vpack.c.b16 %v2381, %v2378
    %v3258 = vpack.c.b16 %v2382, %v2379
    %v3259 = vpack.c.b16 %v2383, %v2380
    %v3260 = vpack.c.b16 %v2387, %v2384
    %v3261 = vpack.c.b16 %v2388, %v2385
    %v3262 = vpack.c.b16 %v2389, %v2386
    %v3263 = vpack.c.b16 %v2393, %v2390
    %v3264 = vpack.c.b16 %v2394, %v2391
    %v3265 = vpack.c.b16 %v2395, %v2392
    %v3266 = vpack.c.b16 %v2399, %v2396
    %v3267 = vpack.c.b16 %v2400, %v2397
    %v3268 = vpack.c.b16 %v2401, %v2398
    %v3269 = vpack.c.b16 %v2405, %v2402
    %v3270 = vpack.c.b16 %v2406, %v2403
    %v3271 = vpack.c.b16 %v2407, %v2404
    %v3272 = vpack.c.b16 %v2411, %v2408
    %v3273 = vpack.c.b16 %v2412, %v2409
    %v3274 = vpack.c.b16 %v2413, %v2410
    %v3275 = vpack.c.b16 %v2417, %v2414
    %v3276 = vpack.c.b16 %v2418, %v2415
    %v3277 = vpack.c.b16 %v2419, %v2416
    %v3278 = vpack.c.b16 %v2423, %v2420
    %v3279 = vpack.c.b16 %v2424, %v2421
    %v3280 = vpack.c.b16 %v2425, %v2422
    %v3281 = vpack.c.b16 %v2429, %v2426
    %v3282 = vpack.c.b16 %v2430, %v2427
    %v3283 = vpack.c.b16 %v2431, %v2428
    %v3284 = vpack.c.b16 %v2435, %v2432
    %v3285 = vpack.c.b16 %v2436, %v2433
    %v3286 = vpack.c.b16 %v2437, %v2434
    %v3287 = vpack.c.b16 %v2441, %v2438
    %v3288 = vpack.c.b16 %v2442, %v2439
    %v3289 = vpack.c.b16 %v2443, %v2440
    %v3290 = vpack.c.b16 %v2447, %v2444
    %v3291 = vpack.c.b16 %v2448, %v2445
    %v3292 = vpack.c.b16 %v2449, %v2446
    %v3293 = vpack.c.b16 %v2453, %v2450
    %v3294 = vpack.c.b16 %v2454, %v2451
    %v3295 = vpack.c.b16 %v2455, %v2452
    %v3296 = vpack.c.b16 %v2459, %v2456
    %v3297 = vpack.c.b16 %v2460, %v2457
    %v3298 = vpack.c.b16 %v2461, %v2458
    %v3299 = vpack.c.b16 %v2465, %v2462
    %v3300 = vpack.c.b16 %v2466, %v2463
    %v3301 = vpack.c.b16 %v2467, %v2464
    %v3302 = vpack.c.b16 %v2471, %v2468
    %v3303 = vpack.c.b16 %v2472, %v2469
    %v3304 = vpack.c.b16 %v2473, %v2470
    %v3305 = vpack.c.b16 %v2477, %v2474
    %v3306 = vpack.c.b16 %v2478, %v2475
    %v3307 = vpack.c.b16 %v2479, %v2476
    %v3308 = vpack.c.b16 %v2483, %v2480
    %v3309 = vpack.c.b16 %v2484, %v2481
    %v3310 = vpack.c.b16 %v2485, %v2482
    %v3311 = vpack.c.b16 %v2489, %v2486
    %v3312 = vpack.c.b16 %v2490, %v2487
    %v3313 = vpack.c.b16 %v2491, %v2488
    %v3314 = vpack.c.b16 %v2495, %v2492
    %v3315 = vpack.c.b16 %v2496, %v2493
    %v3316 = vpack.c.b16 %v2497, %v2494
    %v3317 = vpack.c.b16 %v2501, %v2498
    %v3318 = vpack.c.b16 %v2502, %v2499
    %v3319 = vpack.c.b16 %v2503, %v2500
    %v3320 = vpack.c.b16 %v2507, %v2504
    %v3321 = vpack.c.b16 %v2508, %v2505
    %v3322 = vpack.c.b16 %v2509, %v2506
    %v3323 = vpack.c.b16 %v2513, %v2510
    %v3324 = vpack.c.b16 %v2514, %v2511
    %v3325 = vpack.c.b16 %v2515, %v2512
    %v3326 = vpack.c.b16 %v2519, %v2516
    %v3327 = vpack.c.b16 %v2520, %v2517
    %v3328 = vpack.c.b16 %v2521, %v2518
    %v3329 = vpack.c.b16 %v2525, %v2522
    %v3330 = vpack.c.b16 %v2526, %v2523
    %v3331 = vpack.c.b16 %v2527, %v2524
    %v3332 = vpack.c.b16 %v2531, %v2528
    %v3333 = vpack.c.b16 %v2532, %v2529
    %v3334 = vpack.c.b16 %v2533, %v2530
    %v3335 = vpack.c.b16 %v2537, %v2534
    %v3336 = vpack.c.b16 %v2538, %v2535
    %v3337 = vpack.c.b16 %v2539, %v2536
    %v3338 = vpack.c.b16 %v2543, %v2540
    %v3339 = vpack.c.b16 %v2544, %v2541
    %v3340 = vpack.c.b16 %v2545, %v2542
    %v3341 = vpack.c.b16 %v2549, %v2546
    %v3342 = vpack.c.b16 %v2550, %v2547
    %v3343 = vpack.c.b16 %v2551, %v2548
    %v3344 = vpack.c.b16 %v2555, %v2552
    %v3345 = vpack.c.b16 %v2556, %v2553
    %v3346 = vpack.c.b16 %v2557, %v2554
    %v3347 = vpack.c.b16 %v2561, %v2558
    %v3348 = vpack.c.b16 %v2562, %v2559
    %v3349 = vpack.c.b16 %v2563, %v2560
    %v3350 = vpack.c.b16 %v2567, %v2564
    %v3351 = vpack.c.b16 %v2568, %v2565
    %v3352 = vpack.c.b16 %v2569, %v2566
    %v3353 = vpack.c.b16 %v2573, %v2570
    %v3354 = vpack.c.b16 %v2574, %v2571
    %v3355 = vpack.c.b16 %v2575, %v2572
    %v3356 = vpack.c.b16 %v2579, %v2576
    %v3357 = vpack.c.b16 %v2580, %v2577
    %v3358 = vpack.c.b16 %v2581, %v2578
    %v3359 = vpack.c.b16 %v2585, %v2582
    %v3360 = vpack.c.b16 %v2586, %v2583
    %v3361 = vpack.c.b16 %v2587, %v2584
    %v3362 = vpack.c.b16 %v2591, %v2588
    %v3363 = vpack.c.b16 %v2592, %v2589
    %v3364 = vpack.c.b16 %v2593, %v2590
    %v3365 = vpack.c.b16 %v2597, %v2594
    %v3366 = vpack.c.b16 %v2598, %v2595
    %v3367 = vpack.c.b16 %v2599, %v2596
    %v3368 = vpack.c.b16 %v2603, %v2600
    %v3369 = vpack.c.b16 %v2604, %v2601
    %v3370 = vpack.c.b16 %v2605, %v2602
    %v3371 = vpack.c.b16 %v2609, %v2606
    %v3372 = vpack.c.b16 %v2610, %v2607
    %v3373 = vpack.c.b16 %v2611, %v2608
    %v3374 = vpack.c.b16 %v2615, %v2612
    %v3375 = vpack.c.b16 %v2616, %v2613
    %v3376 = vpack.c.b16 %v2617, %v2614
    %v3377 = vpack.c.b16 %v2621, %v2618
    %v3378 = vpack.c.b16 %v2622, %v2619
    %v3379 = vpack.c.b16 %v2623, %v2620
    %v3380 = vpack.c.b16 %v2627, %v2624
    %v3381 = vpack.c.b16 %v2628, %v2625
    %v3382 = vpack.c.b16 %v2629, %v2626
    %v3383 = vpack.c.b16 %v2633, %v2630
    %v3384 = vpack.c.b16 %v2634, %v2631
    %v3385 = vpack.c.b16 %v2635, %v2632
    %v3386 = vpack.c.b16 %v2639, %v2636
    %v3387 = vpack.c.b16 %v2640, %v2637
    %v3388 = vpack.c.b16 %v2641, %v2638
    %v3389 = vpack.c.b16 %v2645, %v2642
    %v3390 = vpack.c.b16 %v2646, %v2643
    %v3391 = vpack.c.b16 %v2647, %v2644
    %v3392 = vpack.c.b16 %v2651, %v2648
    %v3393 = vpack.c.b16 %v2652, %v2649
    %v3394 = vpack.c.b16 %v2653, %v2650
    %v3395 = vpack.c.b16 %v2657, %v2654
    %v3396 = vpack.c.b16 %v2658, %v2655
    %v3397 = vpack.c.b16 %v2659, %v2656
    %v3398 = vpack.c.b16 %v2663, %v2660
    %v3399 = vpack.c.b16 %v2664, %v2661
    %v3400 = vpack.c.b16 %v2665, %v2662
    %v3401 = vpack.c.b16 %v2669, %v2666
    %v3402 = vpack.c.b16 %v2670, %v2667
    %v3403 = vpack.c.b16 %v2671, %v2668
    %v3404 = vpack.c.b16 %v2675, %v2672
    %v3405 = vpack.c.b16 %v2676, %v2673
    %v3406 = vpack.c.b16 %v2677, %v2674
    %v3407 = vpack.c.b16 %v2681, %v2678
    %v3408 = vpack.c.b16 %v2682, %v2679
    %v3409 = vpack.c.b16 %v2683, %v2680
    %v3410 = vpack.c.b16 %v2687, %v2684
    %v3411 = vpack.c.b16 %v2688, %v2685
    %v3412 = vpack.c.b16 %v2689, %v2686
    %v3413 = vpack.c.b16 %v2693, %v2690
    %v3414 = vpack.c.b16 %v2694, %v2691
    %v3415 = vpack.c.b16 %v2695, %v2692
    %v3416 = vpack.c.b16 %v2699, %v2696
    %v3417 = vpack.c.b16 %v2700, %v2697
    %v3418 = vpack.c.b16 %v2701, %v2698
    %v3419 = vpack.c.b16 %v2705, %v2702
    %v3420 = vpack.c.b16 %v2706, %v2703
    %v3421 = vpack.c.b16 %v2707, %v2704
    %v3422 = vpack.c.b16 %v2711, %v2708
    %v3423 = vpack.c.b16 %v2712, %v2709
    %v3424 = vpack.c.b16 %v2713, %v2710
    %v3425 = vpack.c.b16 %v2717, %v2714
    %v3426 = vpack.c.b16 %v2718, %v2715
    %v3427 = vpack.c.b16 %v2719, %v2716
    %v3428 = vpack.c.b16 %v2723, %v2720
    %v3429 = vpack.c.b16 %v2724, %v2721
    %v3430 = vpack.c.b16 %v2725, %v2722
    %v3431 = vpack.c.b16 %v2729, %v2726
    %v3432 = vpack.c.b16 %v2730, %v2727
    %v3433 = vpack.c.b16 %v2731, %v2728
    %v3434 = vpack.c.b16 %v2735, %v2732
    %v3435 = vpack.c.b16 %v2736, %v2733
    %v3436 = vpack.c.b16 %v2737, %v2734
    %v3437 = vpack.c.b16 %v2741, %v2738
    %v3438 = vpack.c.b16 %v2742, %v2739
    %v3439 = vpack.c.b16 %v2743, %v2740
    %v3440 = vpack.c.b16 %v2747, %v2744
    %v3441 = vpack.c.b16 %v2748, %v2745
    %v3442 = vpack.c.b16 %v2749, %v2746
    %v3443 = vpack.c.b16 %v2753, %v2750
    %v3444 = vpack.c.b16 %v2754, %v2751
    %v3445 = vpack.c.b16 %v2755, %v2752
    %v3446 = vpack.c.b16 %v2759, %v2756
    %v3447 = vpack.c.b16 %v2760, %v2757
    %v3448 = vpack.c.b16 %v2761, %v2758
    %v3449 = vpack.c.b16 %v2765, %v2762
    %v3450 = vpack.c.b16 %v2766, %v2763
    %v3451 = vpack.c.b16 %v2767, %v2764
    %v3452 = vpack.c.b16 %v2771, %v2768
    %v3453 = vpack.c.b16 %v2772, %v2769
    %v3454 = vpack.c.b16 %v2773, %v2770
    %v3455 = vpack.c.b16 %v2777, %v2774
    %v3456 = vpack.c.b16 %v2778, %v2775
    %v3457 = vpack.c.b16 %v2779, %v2776
    %v3458 = vpack.c.b16 %v2783, %v2780
    %v3459 = vpack.c.b16 %v2784, %v2781
    %v3460 = vpack.c.b16 %v2785, %v2782
    %v3461 = vpack.c.b16 %v2789, %v2786
    %v3462 = vpack.c.b16 %v2790, %v2787
    %v3463 = vpack.c.b16 %v2791, %v2788
    %v3464 = vpack.c.b16 %v2795, %v2792
    %v3465 = vpack.c.b16 %v2796, %v2793
    %v3466 = vpack.c.b16 %v2797, %v2794
    %v3467 = vpack.c.b16 %v2801, %v2798
    %v3468 = vpack.c.b16 %v2802, %v2799
    %v3469 = vpack.c.b16 %v2803, %v2800
    %v3470 = vpack.c.b16 %v2807, %v2804
    %v3471 = vpack.c.b16 %v2808, %v2805
    %v3472 = vpack.c.b16 %v2809, %v2806
    %v3473 = vpack.c.b16 %v2813, %v2810
    %v3474 = vpack.c.b16 %v2814, %v2811
    %v3475 = vpack.c.b16 %v2815, %v2812
    %v3476 = vpack.c.b16 %v2819, %v2816
    %v3477 = vpack.c.b16 %v2820, %v2817
    %v3478 = vpack.c.b16 %v2821, %v2818
    %v3479 = vpack.c.b16 %v2825, %v2822
    %v3480 = vpack.c.b16 %v2826, %v2823
    %v3481 = vpack.c.b16 %v2827, %v2824
    %v3482 = vpack.c.b16 %v2831, %v2828
    %v3483 = vpack.c.b16 %v2832, %v2829
    %v3484 = vpack.c.b16 %v2833, %v2830
    %v3485 = vpack.c.b16 %v2837, %v2834
    %v3486 = vpack.c.b16 %v2838, %v2835
    %v3487 = vpack.c.b16 %v2839, %v2836
    %v3488 = vpack.c.b16 %v2843, %v2840
    %v3489 = vpack.c.b16 %v2844, %v2841
    %v3490 = vpack.c.b16 %v2845, %v2842
    %v3491 = vpack.c.b16 %v2849, %v2846
    %v3492 = vpack.c.b16 %v2850, %v2847
    %v3493 = vpack.c.b16 %v2851, %v2848
    %v3494 = vpack.c.b16 %v2855, %v2852
    %v3495 = vpack.c.b16 %v2856, %v2853
    %v3496 = vpack.c.b16 %v2857, %v2854
    %v3497 = vpack.c.b16 %v2861, %v2858
    %v3498 = vpack.c.b16 %v2862, %v2859
    %v3499 = vpack.c.b16 %v2863, %v2860
    %v3500 = vpack.c.b16 %v2867, %v2864
    %v3501 = vpack.c.b16 %v2868, %v2865
    %v3502 = vpack.c.b16 %v2869, %v2866
    %v3503 = vpack.c.b16 %v2873, %v2870
    %v3504 = vpack.c.b16 %v2874, %v2871
    %v3505 = vpack.c.b16 %v2875, %v2872
    %v3506 = vpack.c.b16 %v2879, %v2876
    %v3507 = vpack.c.b16 %v2880, %v2877
    %v3508 = vpack.c.b16 %v2881, %v2878
    %v3509 = vpack.c.b16 %v2885, %v2882
    %v3510 = vpack.c.b16 %v2886, %v2883
    %v3511 = vpack.c.b16 %v2887, %v2884
    %v3512 = vpack.c.b16 %v2891, %v2888
    %v3513 = vpack.c.b16 %v2892, %v2889
    %v3514 = vpack.c.b16 %v2893, %v2890
    %v3515 = vpack.c.b16 %v2897, %v2894
    %v3516 = vpack.c.b16 %v2898, %v2895
    %v3517 = vpack.c.b16 %v2899, %v2896
    %v3518 = vpack.c.b16 %v2903, %v2900
    %v3519 = vpack.c.b16 %v2904, %v2901
    %v3520 = vpack.c.b16 %v2905, %v2902
    %v3521 = vpack.c.b16 %v2909, %v2906
    %v3522 = vpack.c.b16 %v2910, %v2907
    %v3523 = vpack.c.b16 %v2911, %v2908
    %v3524 = vpack.c.b16 %v2915, %v2912
    %v3525 = vpack.c.b16 %v2916, %v2913
    %v3526 = vpack.c.b16 %v2917, %v2914
    %v3527 = vpack.c.b16 %v2921, %v2918
    %v3528 = vpack.c.b16 %v2922, %v2919
    %v3529 = vpack.c.b16 %v2923, %v2920
    %v3530 = vpack.c.b16 %v2927, %v2924
    %v3531 = vpack.c.b16 %v2928, %v2925
    %v3532 = vpack.c.b16 %v2929, %v2926
    %v3533 = vpack.c.b16 %v2933, %v2930
    %v3534 = vpack.c.b16 %v2934, %v2931
    %v3535 = vpack.c.b16 %v2935, %v2932
    %v3536 = vpack.c.b16 %v2939, %v2936
    %v3537 = vpack.c.b16 %v2940, %v2937
    %v3538 = vpack.c.b16 %v2941, %v2938
    %v3539 = vpack.c.b16 %v2945, %v2942
    %v3540 = vpack.c.b16 %v2946, %v2943
    %v3541 = vpack.c.b16 %v2947, %v2944
    %v3542 = vpack.c.b16 %v2951, %v2948
    %v3543 = vpack.c.b16 %v2952, %v2949
    %v3544 = vpack.c.b16 %v2953, %v2950
    %v3545 = vpack.c.b16 %v2957, %v2954
    %v3546 = vpack.c.b16 %v2958, %v2955
    %v3547 = vpack.c.b16 %v2959, %v2956
    %v3548 = vpack.c.b16 %v2963, %v2960
    %v3549 = vpack.c.b16 %v2964, %v2961
    %v3550 = vpack.c.b16 %v2965, %v2962
    %v3551 = vpack.c.b16 %v2969, %v2966
    %v3552 = vpack.c.b16 %v2970, %v2967
    %v3553 = vpack.c.b16 %v2971, %v2968
    %v3554 = vpack.c.b16 %v2975, %v2972
    %v3555 = vpack.c.b16 %v2976, %v2973
    %v3556 = vpack.c.b16 %v2977, %v2974
    %v3557 = vpack.c.b16 %v2981, %v2978
    %v3558 = vpack.c.b16 %v2982, %v2979
    %v3559 = vpack.c.b16 %v2983, %v2980
    %v3560 = vpack.c.b16 %v2987, %v2984
    %v3561 = vpack.c.b16 %v2988, %v2985
    %v3562 = vpack.c.b16 %v2989, %v2986
    %v3563 = vpack.c.b16 %v2993, %v2990
    %v3564 = vpack.c.b16 %v2994, %v2991
    %v3565 = vpack.c.b16 %v2995, %v2992
    %v3566 = vpack.c.b16 %v2999, %v2996
    %v3567 = vpack.c.b16 %v3000, %v2997
    %v3568 = vpack.c.b16 %v3001, %v2998
    %v3569 = vpack.c.b16 %v3005, %v3002
    %v3570 = vpack.c.b16 %v3006, %v3003
    %v3571 = vpack.c.b16 %v3007, %v3004
    %v3572 = vpack.c.b16 %v3011, %v3008
    %v3573 = vpack.c.b16 %v3012, %v3009
    %v3574 = vpack.c.b16 %v3013, %v3010
    %v3575 = vpack.c.b16 %v3017, %v3014
    %v3576 = vpack.c.b16 %v3018, %v3015
    %v3577 = vpack.c.b16 %v3019, %v3016
    %v3578 = vpack.c.b16 %v3023, %v3020
    %v3579 = vpack.c.b16 %v3024, %v3021
    %v3580 = vpack.c.b16 %v3025, %v3022
    %v3581 = vpack.c.b16 %v3029, %v3026
    %v3582 = vpack.c.b16 %v3030, %v3027
    %v3583 = vpack.c.b16 %v3031, %v3028
    %v3584 = vpack.c.b16 %v3035, %v3032
    %v3585 = vpack.c.b16 %v3036, %v3033
    %v3586 = vpack.c.b16 %v3037, %v3034
    %v3587 = vpack.c.b16 %v3041, %v3038
    %v3588 = vpack.c.b16 %v3042, %v3039
    %v3589 = vpack.c.b16 %v3043, %v3040
    %v3590 = vpack.c.b16 %v3047, %v3044
    %v3591 = vpack.c.b16 %v3048, %v3045
    %v3592 = vpack.c.b16 %v3049, %v3046
    %v3593 = vpack.c.b16 %v3053, %v3050
    %v3594 = vpack.c.b16 %v3054, %v3051
    %v3595 = vpack.c.b16 %v3055, %v3052
    %v3596 = vpack.c.b16 %v3059, %v3056
    %v3597 = vpack.c.b16 %v3060, %v3057
    %v3598 = vpack.c.b16 %v3061, %v3058
    %v3599 = vpack.c.b16 %v3065, %v3062
    %v3600 = vpack.c.b16 %v3066, %v3063
    %v3601 = vpack.c.b16 %v3067, %v3064
    %v3602 = vpack.c.b16 %v3071, %v3068
    %v3603 = vpack.c.b16 %v3072, %v3069
    %v3604 = vpack.c.b16 %v3073, %v3070
    %v3605 = vpack.c.b16 %v3077, %v3074
    %v3606 = vpack.c.b16 %v3078, %v3075
    %v3607 = vpack.c.b16 %v3079, %v3076
    %v3608 = vpack.c.b16 %v3083, %v3080
    %v3609 = vpack.c.b16 %v3084, %v3081
    %v3610 = vpack.c.b16 %v3085, %v3082
    %v3611 = vpack.c.b16 %v3089, %v3086
    %v3612 = vpack.c.b16 %v3090, %v3087
    %v3613 = vpack.c.b16 %v3091, %v3088
    %v3614 = vpack.c.b16 %v3095, %v3092
    %v3615 = vpack.c.b16 %v3096, %v3093
    %v3616 = vpack.c.b16 %v3097, %v3094
    %v3617 = vpack.c.b16 %v3101, %v3098
    %v3618 = vpack.c.b16 %v3102, %v3099
    %v3619 = vpack.c.b16 %v3103, %v3100
    %v3620 = vpack.c.b16 %v3107, %v3104
    %v3621 = vpack.c.b16 %v3108, %v3105
    %v3622 = vpack.c.b16 %v3109, %v3106
    %v3623 = vpack.c.b16 %v3113, %v3110
    %v3624 = vpack.c.b16 %v3114, %v3111
    %v3625 = vpack.c.b16 %v3115, %v3112
    %v3626 = vpack.c.b16 %v3119, %v3116
    %v3627 = vpack.c.b16 %v3120, %v3117
    %v3628 = vpack.c.b16 %v3121, %v3118
    %v3629 = vpack.c.b16 %v3125, %v3122
    %v3630 = vpack.c.b16 %v3126, %v3123
    %v3631 = vpack.c.b16 %v3127, %v3124
    %v3632 = vpack.c.b16 %v3131, %v3128
    %v3633 = vpack.c.b16 %v3132, %v3129
    %v3634 = vpack.c.b16 %v3133, %v3130
    %v3635 = vpack.c.b16 %v3137, %v3134
    %v3636 = vpack.c.b16 %v3138, %v3135
    %v3637 = vpack.c.b16 %v3139, %v3136
    %v3638 = vpack.c.b16 %v3143, %v3140
    %v3639 = vpack.c.b16 %v3144, %v3141
    %v3640 = vpack.c.b16 %v3145, %v3142
    %v3641 = vpack.c.b16 %v3149, %v3146
    %v3642 = vpack.c.b16 %v3150, %v3147
    %v3643 = vpack.c.b16 %v3151, %v3148
    %v3644 = vpack.c.b16 %v3155, %v3152
    %v3645 = vpack.c.b16 %v3156, %v3153
    %v3646 = vpack.c.b16 %v3157, %v3154
    %v3647 = vpack.c.b16 %v3161, %v3158
    %v3648 = vpack.c.b16 %v3162, %v3159
    %v3649 = vpack.c.b16 %v3163, %v3160
    %v3650 = vpack.c.b16 %v3167, %v3164
    %v3651 = vpack.c.b16 %v3168, %v3165
    %v3652 = vpack.c.b16 %v3169, %v3166
    %v3653 = vpack.c.b16 %v3173, %v3170
    %v3654 = vpack.c.b16 %v3174, %v3171
    %v3655 = vpack.c.b16 %v3175, %v3172
    %4136 = vmatpush.bf16.msra.mxu0 %v3197
    %4137 = vmatpush.bf16.msra.mxu0 %v3194
    %4138 = vmatpush.bf16.msra.mxu0 %v3191
    %4139 = vmatpush.bf16.msra.mxu0 %v3188
    %4140 = vmatpush.bf16.msra.mxu0 %v3185
    %4141 = vmatpush.bf16.msra.mxu0 %v3182
    %4142 = vmatpush.bf16.msra.mxu0 %v3179
    %4143 = vmatpush.bf16.msra.mxu0 %v3176
    %4144 = vmatmul.bf16.gmra.mxu0 %v1532
    %v4145 = vpop.f32.mrf.mxu0
    %v4146 = vadd.f32 %v1524, %v4145
    %v4147 = vpop.f32.mrf.mxu0
    %4148 = vdwg.mxu0
    %4149 = vmatpush.bf16.msra.mxu0 %v3221
    %4150 = vmatpush.bf16.msra.mxu0 %v3218
    %4151 = vmatpush.bf16.msra.mxu0 %v3215
    %4152 = vmatpush.bf16.msra.mxu0 %v3212
    %4153 = vmatpush.bf16.msra.mxu0 %v3209
    %4154 = vmatpush.bf16.msra.mxu0 %v3206
    %4155 = vmatpush.bf16.msra.mxu0 %v3203
    %4156 = vmatpush.bf16.msra.mxu0 %v3200
    %4157 = vmatmul.bf16.gmra.mxu0 %v1533
    %v4158 = vpop.f32.mrf.mxu0
    %v4159 = vadd.f32 %v4146, %v4158
    %v4160 = vpop.f32.mrf.mxu0
    %4161 = vdwg.mxu0
    %4162 = vmatpush.bf16.msra.mxu0 %v3245
    %4163 = vmatpush.bf16.msra.mxu0 %v3242
    %4164 = vmatpush.bf16.msra.mxu0 %v3239
    %4165 = vmatpush.bf16.msra.mxu0 %v3236
    %4166 = vmatpush.bf16.msra.mxu0 %v3233
    %4167 = vmatpush.bf16.msra.mxu0 %v3230
    %4168 = vmatpush.bf16.msra.mxu0 %v3227
    %4169 = vmatpush.bf16.msra.mxu0 %v3224
    %4170 = vmatmul.bf16.gmra.mxu0 %v1534
    %v4171 = vpop.f32.mrf.mxu0
    %v4172 = vadd.f32 %v4159, %v4171
    %v4173 = vpop.f32.mrf.mxu0
    %4174 = vdwg.mxu0
    %4175 = vmatpush.bf16.msra.mxu0 %v3269
    %4176 = vmatpush.bf16.msra.mxu0 %v3266
    %4177 = vmatpush.bf16.msra.mxu0 %v3263
    %4178 = vmatpush.bf16.msra.mxu0 %v3260
    %4179 = vmatpush.bf16.msra.mxu0 %v3257
    %4180 = vmatpush.bf16.msra.mxu0 %v3254
    %4181 = vmatpush.bf16.msra.mxu0 %v3251
    %4182 = vmatpush.bf16.msra.mxu0 %v3248
    %4183 = vmatmul.bf16.gmra.mxu0 %v1535
    %v4184 = vpop.f32.mrf.mxu0
    %v4185 = vadd.f32 %v4172, %v4184
    %v4186 = vpop.f32.mrf.mxu0
    %4187 = vdwg.mxu0
    %4188 = vmatpush.bf16.msra.mxu0 %v3293
    %4189 = vmatpush.bf16.msra.mxu0 %v3290
    %4190 = vmatpush.bf16.msra.mxu0 %v3287
    %4191 = vmatpush.bf16.msra.mxu0 %v3284
    %4192 = vmatpush.bf16.msra.mxu0 %v3281
    %4193 = vmatpush.bf16.msra.mxu0 %v3278
    %4194 = vmatpush.bf16.msra.mxu0 %v3275
    %4195 = vmatpush.bf16.msra.mxu0 %v3272
    %4196 = vmatmul.bf16.gmra.mxu0 %v1536
    %v4197 = vpop.f32.mrf.mxu0
    %v4198 = vadd.f32 %v4185, %v4197
    %v4199 = vpop.f32.mrf.mxu0
    %4200 = vdwg.mxu0
    %4201 = vmatpush.bf16.msra.mxu0 %v3317
    %4202 = vmatpush.bf16.msra.mxu0 %v3314
    %4203 = vmatpush.bf16.msra.mxu0 %v3311
    %4204 = vmatpush.bf16.msra.mxu0 %v3308
    %4205 = vmatpush.bf16.msra.mxu0 %v3305
    %4206 = vmatpush.bf16.msra.mxu0 %v3302
    %4207 = vmatpush.bf16.msra.mxu0 %v3299
    %4208 = vmatpush.bf16.msra.mxu0 %v3296
    %4209 = vmatmul.bf16.gmra.mxu0 %v1537
    %v4210 = vpop.f32.mrf.mxu0
    %v4211 = vadd.f32 %v4198, %v4210
    %v4212 = vpop.f32.mrf.mxu0
    %4213 = vdwg.mxu0
    %4214 = vmatpush.bf16.msra.mxu0 %v3341
    %4215 = vmatpush.bf16.msra.mxu0 %v3338
    %4216 = vmatpush.bf16.msra.mxu0 %v3335
    %4217 = vmatpush.bf16.msra.mxu0 %v3332
    %4218 = vmatpush.bf16.msra.mxu0 %v3329
    %4219 = vmatpush.bf16.msra.mxu0 %v3326
    %4220 = vmatpush.bf16.msra.mxu0 %v3323
    %4221 = vmatpush.bf16.msra.mxu0 %v3320
    %4222 = vmatmul.bf16.gmra.mxu0 %v1538
    %v4223 = vpop.f32.mrf.mxu0
    %v4224 = vadd.f32 %v4211, %v4223
    %v4225 = vpop.f32.mrf.mxu0
    %4226 = vdwg.mxu0
    %4227 = vmatpush.bf16.msra.mxu0 %v3365
    %4228 = vmatpush.bf16.msra.mxu0 %v3362
    %4229 = vmatpush.bf16.msra.mxu0 %v3359
    %4230 = vmatpush.bf16.msra.mxu0 %v3356
    %4231 = vmatpush.bf16.msra.mxu0 %v3353
    %4232 = vmatpush.bf16.msra.mxu0 %v3350
    %4233 = vmatpush.bf16.msra.mxu0 %v3347
    %4234 = vmatpush.bf16.msra.mxu0 %v3344
    %4235 = vmatmul.bf16.gmra.mxu0 %v1539
    %v4236 = vpop.f32.mrf.mxu0
    %v4237 = vadd.f32 %v4224, %v4236
    %v4238 = vpop.f32.mrf.mxu0
    %4239 = vdwg.mxu0
    %4240 = vmatpush.bf16.msra.mxu0 %v3389
    %4241 = vmatpush.bf16.msra.mxu0 %v3386
    %4242 = vmatpush.bf16.msra.mxu0 %v3383
    %4243 = vmatpush.bf16.msra.mxu0 %v3380
    %4244 = vmatpush.bf16.msra.mxu0 %v3377
    %4245 = vmatpush.bf16.msra.mxu0 %v3374
    %4246 = vmatpush.bf16.msra.mxu0 %v3371
    %4247 = vmatpush.bf16.msra.mxu0 %v3368
    %4248 = vmatmul.bf16.gmra.mxu0 %v1542
    %v4249 = vpop.f32.mrf.mxu0
    %v4250 = vadd.f32 %v4237, %v4249
    %v4251 = vpop.f32.mrf.mxu0
    %4252 = vdwg.mxu0
    %4253 = vmatpush.bf16.msra.mxu0 %v3413
    %4254 = vmatpush.bf16.msra.mxu0 %v3410
    %4255 = vmatpush.bf16.msra.mxu0 %v3407
    %4256 = vmatpush.bf16.msra.mxu0 %v3404
    %4257 = vmatpush.bf16.msra.mxu0 %v3401
    %4258 = vmatpush.bf16.msra.mxu0 %v3398
    %4259 = vmatpush.bf16.msra.mxu0 %v3395
    %4260 = vmatpush.bf16.msra.mxu0 %v3392
    %4261 = vmatmul.bf16.gmra.mxu0 %v1543
    %v4262 = vpop.f32.mrf.mxu0
    %v4263 = vadd.f32 %v4250, %v4262
    %v4264 = vpop.f32.mrf.mxu0
    %4265 = vdwg.mxu0
    %4266 = vmatpush.bf16.msra.mxu0 %v3437
    %4267 = vmatpush.bf16.msra.mxu0 %v3434
    %4268 = vmatpush.bf16.msra.mxu0 %v3431
    %4269 = vmatpush.bf16.msra.mxu0 %v3428
    %4270 = vmatpush.bf16.msra.mxu0 %v3425
    %4271 = vmatpush.bf16.msra.mxu0 %v3422
    %4272 = vmatpush.bf16.msra.mxu0 %v3419
    %4273 = vmatpush.bf16.msra.mxu0 %v3416
    %4274 = vmatmul.bf16.gmra.mxu0 %v1544
    %v4275 = vpop.f32.mrf.mxu0
    %v4276 = vadd.f32 %v4263, %v4275
    %v4277 = vpop.f32.mrf.mxu0
    %4278 = vdwg.mxu0
    %4279 = vmatpush.bf16.msra.mxu0 %v3461
    %4280 = vmatpush.bf16.msra.mxu0 %v3458
    %4281 = vmatpush.bf16.msra.mxu0 %v3455
    %4282 = vmatpush.bf16.msra.mxu0 %v3452
    %4283 = vmatpush.bf16.msra.mxu0 %v3449
    %4284 = vmatpush.bf16.msra.mxu0 %v3446
    %4285 = vmatpush.bf16.msra.mxu0 %v3443
    %4286 = vmatpush.bf16.msra.mxu0 %v3440
    %4287 = vmatmul.bf16.gmra.mxu0 %v1545
    %v4288 = vpop.f32.mrf.mxu0
    %v4289 = vadd.f32 %v4276, %v4288
    %v4290 = vpop.f32.mrf.mxu0
    %4291 = vdwg.mxu0
    %4292 = vmatpush.bf16.msra.mxu0 %v3485
    %4293 = vmatpush.bf16.msra.mxu0 %v3482
    %4294 = vmatpush.bf16.msra.mxu0 %v3479
    %4295 = vmatpush.bf16.msra.mxu0 %v3476
    %4296 = vmatpush.bf16.msra.mxu0 %v3473
    %4297 = vmatpush.bf16.msra.mxu0 %v3470
    %4298 = vmatpush.bf16.msra.mxu0 %v3467
    %4299 = vmatpush.bf16.msra.mxu0 %v3464
    %4300 = vmatmul.bf16.gmra.mxu0 %v1546
    %v4301 = vpop.f32.mrf.mxu0
    %v4302 = vadd.f32 %v4289, %v4301
    %v4303 = vpop.f32.mrf.mxu0
    %4304 = vdwg.mxu0
    %4305 = vmatpush.bf16.msra.mxu0 %v3509
    %4306 = vmatpush.bf16.msra.mxu0 %v3506
    %4307 = vmatpush.bf16.msra.mxu0 %v3503
    %4308 = vmatpush.bf16.msra.mxu0 %v3500
    %4309 = vmatpush.bf16.msra.mxu0 %v3497
    %4310 = vmatpush.bf16.msra.mxu0 %v3494
    %4311 = vmatpush.bf16.msra.mxu0 %v3491
    %4312 = vmatpush.bf16.msra.mxu0 %v3488
    %4313 = vmatmul.bf16.gmra.mxu0 %v1547
    %v4314 = vpop.f32.mrf.mxu0
    %v4315 = vadd.f32 %v4302, %v4314
    %v4316 = vpop.f32.mrf.mxu0
    %4317 = vdwg.mxu0
    %4318 = vmatpush.bf16.msra.mxu0 %v3533
    %4319 = vmatpush.bf16.msra.mxu0 %v3530
    %4320 = vmatpush.bf16.msra.mxu0 %v3527
    %4321 = vmatpush.bf16.msra.mxu0 %v3524
    %4322 = vmatpush.bf16.msra.mxu0 %v3521
    %4323 = vmatpush.bf16.msra.mxu0 %v3518
    %4324 = vmatpush.bf16.msra.mxu0 %v3515
    %4325 = vmatpush.bf16.msra.mxu0 %v3512
    %4326 = vmatmul.bf16.gmra.mxu0 %v1548
    %v4327 = vpop.f32.mrf.mxu0
    %v4328 = vadd.f32 %v4315, %v4327
    %v4329 = vpop.f32.mrf.mxu0
    %4330 = vdwg.mxu0
    %4331 = vmatpush.bf16.msra.mxu0 %v3557
    %4332 = vmatpush.bf16.msra.mxu0 %v3554
    %4333 = vmatpush.bf16.msra.mxu0 %v3551
    %4334 = vmatpush.bf16.msra.mxu0 %v3548
    %4335 = vmatpush.bf16.msra.mxu0 %v3545
    %4336 = vmatpush.bf16.msra.mxu0 %v3542
    %4337 = vmatpush.bf16.msra.mxu0 %v3539
    %4338 = vmatpush.bf16.msra.mxu0 %v3536
    %4339 = vmatmul.bf16.gmra.mxu0 %v1549
    %v4340 = vpop.f32.mrf.mxu0
    %v4341 = vadd.f32 %v4328, %v4340
    %v4342 = vpop.f32.mrf.mxu0
    %4343 = vdwg.mxu0
    %4344 = vmatpush.bf16.msra.mxu0 %v3581
    %4345 = vmatpush.bf16.msra.mxu0 %v3578
    %4346 = vmatpush.bf16.msra.mxu0 %v3575
    %4347 = vmatpush.bf16.msra.mxu0 %v3572
    %4348 = vmatpush.bf16.msra.mxu0 %v3569
    %4349 = vmatpush.bf16.msra.mxu0 %v3566
    %4350 = vmatpush.bf16.msra.mxu0 %v3563
    %4351 = vmatpush.bf16.msra.mxu0 %v3560
    %4352 = vmatmul.bf16.gmra.mxu0 %v1552
    %v4353 = vpop.f32.mrf.mxu0
    %v4354 = vadd.f32 %v4341, %v4353
    %v4355 = vpop.f32.mrf.mxu0
    %4356 = vdwg.mxu0
    %4357 = vmatpush.bf16.msra.mxu0 %v3605
    %4358 = vmatpush.bf16.msra.mxu0 %v3602
    %4359 = vmatpush.bf16.msra.mxu0 %v3599
    %4360 = vmatpush.bf16.msra.mxu0 %v3596
    %4361 = vmatpush.bf16.msra.mxu0 %v3593
    %4362 = vmatpush.bf16.msra.mxu0 %v3590
    %4363 = vmatpush.bf16.msra.mxu0 %v3587
    %4364 = vmatpush.bf16.msra.mxu0 %v3584
    %4365 = vmatmul.bf16.gmra.mxu0 %v1553
    %v4366 = vpop.f32.mrf.mxu0
    %v4367 = vadd.f32 %v4354, %v4366
    %v4368 = vpop.f32.mrf.mxu0
    %4369 = vdwg.mxu0
    %4370 = vmatpush.bf16.msra.mxu0 %v3629
    %4371 = vmatpush.bf16.msra.mxu0 %v3626
    %4372 = vmatpush.bf16.msra.mxu0 %v3623
    %4373 = vmatpush.bf16.msra.mxu0 %v3620
    %4374 = vmatpush.bf16.msra.mxu0 %v3617
    %4375 = vmatpush.bf16.msra.mxu0 %v3614
    %4376 = vmatpush.bf16.msra.mxu0 %v3611
    %4377 = vmatpush.bf16.msra.mxu0 %v3608
    %4378 = vmatmul.bf16.gmra.mxu0 %v1554
    %v4379 = vpop.f32.mrf.mxu0
    %v4380 = vadd.f32 %v4367, %v4379
    %v4381 = vpop.f32.mrf.mxu0
    %4382 = vdwg.mxu0
    %4383 = vmatpush.bf16.msra.mxu0 %v3653
    %4384 = vmatpush.bf16.msra.mxu0 %v3650
    %4385 = vmatpush.bf16.msra.mxu0 %v3647
    %4386 = vmatpush.bf16.msra.mxu0 %v3644
    %4387 = vmatpush.bf16.msra.mxu0 %v3641
    %4388 = vmatpush.bf16.msra.mxu0 %v3638
    %4389 = vmatpush.bf16.msra.mxu0 %v3635
    %4390 = vmatpush.bf16.msra.mxu0 %v3632
    %4391 = vmatmul.bf16.gmra.mxu0 %v1555
    %v4392 = vpop.f32.mrf.mxu0
    %v4393 = vadd.f32 %v4380, %v4392
    %v4394 = vpop.f32.mrf.mxu0
    %4395 = vdwg.mxu0
    %4396 = vmatpush.bf16.msra.mxu0 %v3198
    %4397 = vmatpush.bf16.msra.mxu0 %v3195
    %4398 = vmatpush.bf16.msra.mxu0 %v3192
    %4399 = vmatpush.bf16.msra.mxu0 %v3189
    %4400 = vmatpush.bf16.msra.mxu0 %v3186
    %4401 = vmatpush.bf16.msra.mxu0 %v3183
    %4402 = vmatpush.bf16.msra.mxu0 %v3180
    %4403 = vmatpush.bf16.msra.mxu0 %v3177
    %4404 = vmatmul.bf16.gmra.mxu0 %v1532
    %v4405 = vpop.f32.mrf.mxu0
    %v4406 = vadd.f32 %v1525, %v4405
    %v4407 = vpop.f32.mrf.mxu0
    %4408 = vdwg.mxu0
    %4409 = vmatpush.bf16.msra.mxu0 %v3222
    %4410 = vmatpush.bf16.msra.mxu0 %v3219
    %4411 = vmatpush.bf16.msra.mxu0 %v3216
    %4412 = vmatpush.bf16.msra.mxu0 %v3213
    %4413 = vmatpush.bf16.msra.mxu0 %v3210
    %4414 = vmatpush.bf16.msra.mxu0 %v3207
    %4415 = vmatpush.bf16.msra.mxu0 %v3204
    %4416 = vmatpush.bf16.msra.mxu0 %v3201
    %4417 = vmatmul.bf16.gmra.mxu0 %v1533
    %v4418 = vpop.f32.mrf.mxu0
    %v4419 = vadd.f32 %v4406, %v4418
    %v4420 = vpop.f32.mrf.mxu0
    %4421 = vdwg.mxu0
    %4422 = vmatpush.bf16.msra.mxu0 %v3246
    %4423 = vmatpush.bf16.msra.mxu0 %v3243
    %4424 = vmatpush.bf16.msra.mxu0 %v3240
    %4425 = vmatpush.bf16.msra.mxu0 %v3237
    %4426 = vmatpush.bf16.msra.mxu0 %v3234
    %4427 = vmatpush.bf16.msra.mxu0 %v3231
    %4428 = vmatpush.bf16.msra.mxu0 %v3228
    %4429 = vmatpush.bf16.msra.mxu0 %v3225
    %4430 = vmatmul.bf16.gmra.mxu0 %v1534
    %v4431 = vpop.f32.mrf.mxu0
    %v4432 = vadd.f32 %v4419, %v4431
    %v4433 = vpop.f32.mrf.mxu0
    %4434 = vdwg.mxu0
    %4435 = vmatpush.bf16.msra.mxu0 %v3270
    %4436 = vmatpush.bf16.msra.mxu0 %v3267
    %4437 = vmatpush.bf16.msra.mxu0 %v3264
    %4438 = vmatpush.bf16.msra.mxu0 %v3261
    %4439 = vmatpush.bf16.msra.mxu0 %v3258
    %4440 = vmatpush.bf16.msra.mxu0 %v3255
    %4441 = vmatpush.bf16.msra.mxu0 %v3252
    %4442 = vmatpush.bf16.msra.mxu0 %v3249
    %4443 = vmatmul.bf16.gmra.mxu0 %v1535
    %v4444 = vpop.f32.mrf.mxu0
    %v4445 = vadd.f32 %v4432, %v4444
    %v4446 = vpop.f32.mrf.mxu0
    %4447 = vdwg.mxu0
    %4448 = vmatpush.bf16.msra.mxu0 %v3294
    %4449 = vmatpush.bf16.msra.mxu0 %v3291
    %4450 = vmatpush.bf16.msra.mxu0 %v3288
    %4451 = vmatpush.bf16.msra.mxu0 %v3285
    %4452 = vmatpush.bf16.msra.mxu0 %v3282
    %4453 = vmatpush.bf16.msra.mxu0 %v3279
    %4454 = vmatpush.bf16.msra.mxu0 %v3276
    %4455 = vmatpush.bf16.msra.mxu0 %v3273
    %4456 = vmatmul.bf16.gmra.mxu0 %v1536
    %v4457 = vpop.f32.mrf.mxu0
    %v4458 = vadd.f32 %v4445, %v4457
    %v4459 = vpop.f32.mrf.mxu0
    %4460 = vdwg.mxu0
    %4461 = vmatpush.bf16.msra.mxu0 %v3318
    %4462 = vmatpush.bf16.msra.mxu0 %v3315
    %4463 = vmatpush.bf16.msra.mxu0 %v3312
    %4464 = vmatpush.bf16.msra.mxu0 %v3309
    %4465 = vmatpush.bf16.msra.mxu0 %v3306
    %4466 = vmatpush.bf16.msra.mxu0 %v3303
    %4467 = vmatpush.bf16.msra.mxu0 %v3300
    %4468 = vmatpush.bf16.msra.mxu0 %v3297
    %4469 = vmatmul.bf16.gmra.mxu0 %v1537
    %v4470 = vpop.f32.mrf.mxu0
    %v4471 = vadd.f32 %v4458, %v4470
    %v4472 = vpop.f32.mrf.mxu0
    %4473 = vdwg.mxu0
    %4474 = vmatpush.bf16.msra.mxu0 %v3342
    %4475 = vmatpush.bf16.msra.mxu0 %v3339
    %4476 = vmatpush.bf16.msra.mxu0 %v3336
    %4477 = vmatpush.bf16.msra.mxu0 %v3333
    %4478 = vmatpush.bf16.msra.mxu0 %v3330
    %4479 = vmatpush.bf16.msra.mxu0 %v3327
    %4480 = vmatpush.bf16.msra.mxu0 %v3324
    %4481 = vmatpush.bf16.msra.mxu0 %v3321
    %4482 = vmatmul.bf16.gmra.mxu0 %v1538
    %v4483 = vpop.f32.mrf.mxu0
    %v4484 = vadd.f32 %v4471, %v4483
    %v4485 = vpop.f32.mrf.mxu0
    %4486 = vdwg.mxu0
    %4487 = vmatpush.bf16.msra.mxu0 %v3366
    %4488 = vmatpush.bf16.msra.mxu0 %v3363
    %4489 = vmatpush.bf16.msra.mxu0 %v3360
    %4490 = vmatpush.bf16.msra.mxu0 %v3357
    %4491 = vmatpush.bf16.msra.mxu0 %v3354
    %4492 = vmatpush.bf16.msra.mxu0 %v3351
    %4493 = vmatpush.bf16.msra.mxu0 %v3348
    %4494 = vmatpush.bf16.msra.mxu0 %v3345
    %4495 = vmatmul.bf16.gmra.mxu0 %v1539
    %v4496 = vpop.f32.mrf.mxu0
    %v4497 = vadd.f32 %v4484, %v4496
    %v4498 = vpop.f32.mrf.mxu0
    %4499 = vdwg.mxu0
    %4500 = vmatpush.bf16.msra.mxu0 %v3390
    %4501 = vmatpush.bf16.msra.mxu0 %v3387
    %4502 = vmatpush.bf16.msra.mxu0 %v3384
    %4503 = vmatpush.bf16.msra.mxu0 %v3381
    %4504 = vmatpush.bf16.msra.mxu0 %v3378
    %4505 = vmatpush.bf16.msra.mxu0 %v3375
    %4506 = vmatpush.bf16.msra.mxu0 %v3372
    %4507 = vmatpush.bf16.msra.mxu0 %v3369
    %4508 = vmatmul.bf16.gmra.mxu0 %v1542
    %v4509 = vpop.f32.mrf.mxu0
    %v4510 = vadd.f32 %v4497, %v4509
    %v4511 = vpop.f32.mrf.mxu0
    %4512 = vdwg.mxu0
    %4513 = vmatpush.bf16.msra.mxu0 %v3414
    %4514 = vmatpush.bf16.msra.mxu0 %v3411
    %4515 = vmatpush.bf16.msra.mxu0 %v3408
    %4516 = vmatpush.bf16.msra.mxu0 %v3405
    %4517 = vmatpush.bf16.msra.mxu0 %v3402
    %4518 = vmatpush.bf16.msra.mxu0 %v3399
    %4519 = vmatpush.bf16.msra.mxu0 %v3396
    %4520 = vmatpush.bf16.msra.mxu0 %v3393
    %4521 = vmatmul.bf16.gmra.mxu0 %v1543
    %v4522 = vpop.f32.mrf.mxu0
    %v4523 = vadd.f32 %v4510, %v4522
    %v4524 = vpop.f32.mrf.mxu0
    %4525 = vdwg.mxu0
    %4526 = vmatpush.bf16.msra.mxu0 %v3438
    %4527 = vmatpush.bf16.msra.mxu0 %v3435
    %4528 = vmatpush.bf16.msra.mxu0 %v3432
    %4529 = vmatpush.bf16.msra.mxu0 %v3429
    %4530 = vmatpush.bf16.msra.mxu0 %v3426
    %4531 = vmatpush.bf16.msra.mxu0 %v3423
    %4532 = vmatpush.bf16.msra.mxu0 %v3420
    %4533 = vmatpush.bf16.msra.mxu0 %v3417
    %4534 = vmatmul.bf16.gmra.mxu0 %v1544
    %v4535 = vpop.f32.mrf.mxu0
    %v4536 = vadd.f32 %v4523, %v4535
    %v4537 = vpop.f32.mrf.mxu0
    %4538 = vdwg.mxu0
    %4539 = vmatpush.bf16.msra.mxu0 %v3462
    %4540 = vmatpush.bf16.msra.mxu0 %v3459
    %4541 = vmatpush.bf16.msra.mxu0 %v3456
    %4542 = vmatpush.bf16.msra.mxu0 %v3453
    %4543 = vmatpush.bf16.msra.mxu0 %v3450
    %4544 = vmatpush.bf16.msra.mxu0 %v3447
    %4545 = vmatpush.bf16.msra.mxu0 %v3444
    %4546 = vmatpush.bf16.msra.mxu0 %v3441
    %4547 = vmatmul.bf16.gmra.mxu0 %v1545
    %v4548 = vpop.f32.mrf.mxu0
    %v4549 = vadd.f32 %v4536, %v4548
    %v4550 = vpop.f32.mrf.mxu0
    %4551 = vdwg.mxu0
    %4552 = vmatpush.bf16.msra.mxu0 %v3486
    %4553 = vmatpush.bf16.msra.mxu0 %v3483
    %4554 = vmatpush.bf16.msra.mxu0 %v3480
    %4555 = vmatpush.bf16.msra.mxu0 %v3477
    %4556 = vmatpush.bf16.msra.mxu0 %v3474
    %4557 = vmatpush.bf16.msra.mxu0 %v3471
    %4558 = vmatpush.bf16.msra.mxu0 %v3468
    %4559 = vmatpush.bf16.msra.mxu0 %v3465
    %4560 = vmatmul.bf16.gmra.mxu0 %v1546
    %v4561 = vpop.f32.mrf.mxu0
    %v4562 = vadd.f32 %v4549, %v4561
    %v4563 = vpop.f32.mrf.mxu0
    %4564 = vdwg.mxu0
    %4565 = vmatpush.bf16.msra.mxu0 %v3510
    %4566 = vmatpush.bf16.msra.mxu0 %v3507
    %4567 = vmatpush.bf16.msra.mxu0 %v3504
    %4568 = vmatpush.bf16.msra.mxu0 %v3501
    %4569 = vmatpush.bf16.msra.mxu0 %v3498
    %4570 = vmatpush.bf16.msra.mxu0 %v3495
    %4571 = vmatpush.bf16.msra.mxu0 %v3492
    %4572 = vmatpush.bf16.msra.mxu0 %v3489
    %4573 = vmatmul.bf16.gmra.mxu0 %v1547
    %v4574 = vpop.f32.mrf.mxu0
    %v4575 = vadd.f32 %v4562, %v4574
    %v4576 = vpop.f32.mrf.mxu0
    %4577 = vdwg.mxu0
    %4578 = vmatpush.bf16.msra.mxu0 %v3534
    %4579 = vmatpush.bf16.msra.mxu0 %v3531
    %4580 = vmatpush.bf16.msra.mxu0 %v3528
    %4581 = vmatpush.bf16.msra.mxu0 %v3525
    %4582 = vmatpush.bf16.msra.mxu0 %v3522
    %4583 = vmatpush.bf16.msra.mxu0 %v3519
    %4584 = vmatpush.bf16.msra.mxu0 %v3516
    %4585 = vmatpush.bf16.msra.mxu0 %v3513
    %4586 = vmatmul.bf16.gmra.mxu0 %v1548
    %v4587 = vpop.f32.mrf.mxu0
    %v4588 = vadd.f32 %v4575, %v4587
    %v4589 = vpop.f32.mrf.mxu0
    %4590 = vdwg.mxu0
    %4591 = vmatpush.bf16.msra.mxu0 %v3558
    %4592 = vmatpush.bf16.msra.mxu0 %v3555
    %4593 = vmatpush.bf16.msra.mxu0 %v3552
    %4594 = vmatpush.bf16.msra.mxu0 %v3549
    %4595 = vmatpush.bf16.msra.mxu0 %v3546
    %4596 = vmatpush.bf16.msra.mxu0 %v3543
    %4597 = vmatpush.bf16.msra.mxu0 %v3540
    %4598 = vmatpush.bf16.msra.mxu0 %v3537
    %4599 = vmatmul.bf16.gmra.mxu0 %v1549
    %v4600 = vpop.f32.mrf.mxu0
    %v4601 = vadd.f32 %v4588, %v4600
    %v4602 = vpop.f32.mrf.mxu0
    %4603 = vdwg.mxu0
    %4604 = vmatpush.bf16.msra.mxu0 %v3582
    %4605 = vmatpush.bf16.msra.mxu0 %v3579
    %4606 = vmatpush.bf16.msra.mxu0 %v3576
    %4607 = vmatpush.bf16.msra.mxu0 %v3573
    %4608 = vmatpush.bf16.msra.mxu0 %v3570
    %4609 = vmatpush.bf16.msra.mxu0 %v3567
    %4610 = vmatpush.bf16.msra.mxu0 %v3564
    %4611 = vmatpush.bf16.msra.mxu0 %v3561
    %4612 = vmatmul.bf16.gmra.mxu0 %v1552
    %v4613 = vpop.f32.mrf.mxu0
    %v4614 = vadd.f32 %v4601, %v4613
    %v4615 = vpop.f32.mrf.mxu0
    %4616 = vdwg.mxu0
    %4617 = vmatpush.bf16.msra.mxu0 %v3606
    %4618 = vmatpush.bf16.msra.mxu0 %v3603
    %4619 = vmatpush.bf16.msra.mxu0 %v3600
    %4620 = vmatpush.bf16.msra.mxu0 %v3597
    %4621 = vmatpush.bf16.msra.mxu0 %v3594
    %4622 = vmatpush.bf16.msra.mxu0 %v3591
    %4623 = vmatpush.bf16.msra.mxu0 %v3588
    %4624 = vmatpush.bf16.msra.mxu0 %v3585
    %4625 = vmatmul.bf16.gmra.mxu0 %v1553
    %v4626 = vpop.f32.mrf.mxu0
    %v4627 = vadd.f32 %v4614, %v4626
    %v4628 = vpop.f32.mrf.mxu0
    %4629 = vdwg.mxu0
    %4630 = vmatpush.bf16.msra.mxu0 %v3630
    %4631 = vmatpush.bf16.msra.mxu0 %v3627
    %4632 = vmatpush.bf16.msra.mxu0 %v3624
    %4633 = vmatpush.bf16.msra.mxu0 %v3621
    %4634 = vmatpush.bf16.msra.mxu0 %v3618
    %4635 = vmatpush.bf16.msra.mxu0 %v3615
    %4636 = vmatpush.bf16.msra.mxu0 %v3612
    %4637 = vmatpush.bf16.msra.mxu0 %v3609
    %4638 = vmatmul.bf16.gmra.mxu0 %v1554
    %v4639 = vpop.f32.mrf.mxu0
    %v4640 = vadd.f32 %v4627, %v4639
    %v4641 = vpop.f32.mrf.mxu0
    %4642 = vdwg.mxu0
    %4643 = vmatpush.bf16.msra.mxu0 %v3654
    %4644 = vmatpush.bf16.msra.mxu0 %v3651
    %4645 = vmatpush.bf16.msra.mxu0 %v3648
    %4646 = vmatpush.bf16.msra.mxu0 %v3645
    %4647 = vmatpush.bf16.msra.mxu0 %v3642
    %4648 = vmatpush.bf16.msra.mxu0 %v3639
    %4649 = vmatpush.bf16.msra.mxu0 %v3636
    %4650 = vmatpush.bf16.msra.mxu0 %v3633
    %4651 = vmatmul.bf16.gmra.mxu0 %v1555
    %v4652 = vpop.f32.mrf.mxu0
    %v4653 = vadd.f32 %v4640, %v4652
    %v4654 = vpop.f32.mrf.mxu0
    %4655 = vdwg.mxu0
    %4656 = vmatpush.bf16.msra.mxu0 %v3199
    %4657 = vmatpush.bf16.msra.mxu0 %v3196
    %4658 = vmatpush.bf16.msra.mxu0 %v3193
    %4659 = vmatpush.bf16.msra.mxu0 %v3190
    %4660 = vmatpush.bf16.msra.mxu0 %v3187
    %4661 = vmatpush.bf16.msra.mxu0 %v3184
    %4662 = vmatpush.bf16.msra.mxu0 %v3181
    %4663 = vmatpush.bf16.msra.mxu0 %v3178
    %4664 = vmatmul.bf16.gmra.mxu0 %v1532
    %v4665 = vpop.f32.mrf.mxu0
    %v4666 = vadd.f32 %v1526, %v4665
    %v4667 = vpop.f32.mrf.mxu0
    %4668 = vdwg.mxu0
    %4669 = vmatpush.bf16.msra.mxu0 %v3223
    %4670 = vmatpush.bf16.msra.mxu0 %v3220
    %4671 = vmatpush.bf16.msra.mxu0 %v3217
    %4672 = vmatpush.bf16.msra.mxu0 %v3214
    %4673 = vmatpush.bf16.msra.mxu0 %v3211
    %4674 = vmatpush.bf16.msra.mxu0 %v3208
    %4675 = vmatpush.bf16.msra.mxu0 %v3205
    %4676 = vmatpush.bf16.msra.mxu0 %v3202
    %4677 = vmatmul.bf16.gmra.mxu0 %v1533
    %v4678 = vpop.f32.mrf.mxu0
    %v4679 = vadd.f32 %v4666, %v4678
    %v4680 = vpop.f32.mrf.mxu0
    %4681 = vdwg.mxu0
    %4682 = vmatpush.bf16.msra.mxu0 %v3247
    %4683 = vmatpush.bf16.msra.mxu0 %v3244
    %4684 = vmatpush.bf16.msra.mxu0 %v3241
    %4685 = vmatpush.bf16.msra.mxu0 %v3238
    %4686 = vmatpush.bf16.msra.mxu0 %v3235
    %4687 = vmatpush.bf16.msra.mxu0 %v3232
    %4688 = vmatpush.bf16.msra.mxu0 %v3229
    %4689 = vmatpush.bf16.msra.mxu0 %v3226
    %4690 = vmatmul.bf16.gmra.mxu0 %v1534
    %v4691 = vpop.f32.mrf.mxu0
    %v4692 = vadd.f32 %v4679, %v4691
    %v4693 = vpop.f32.mrf.mxu0
    %4694 = vdwg.mxu0
    %4695 = vmatpush.bf16.msra.mxu0 %v3271
    %4696 = vmatpush.bf16.msra.mxu0 %v3268
    %4697 = vmatpush.bf16.msra.mxu0 %v3265
    %4698 = vmatpush.bf16.msra.mxu0 %v3262
    %4699 = vmatpush.bf16.msra.mxu0 %v3259
    %4700 = vmatpush.bf16.msra.mxu0 %v3256
    %4701 = vmatpush.bf16.msra.mxu0 %v3253
    %4702 = vmatpush.bf16.msra.mxu0 %v3250
    %4703 = vmatmul.bf16.gmra.mxu0 %v1535
    %v4704 = vpop.f32.mrf.mxu0
    %v4705 = vadd.f32 %v4692, %v4704
    %v4706 = vpop.f32.mrf.mxu0
    %4707 = vdwg.mxu0
    %4708 = vmatpush.bf16.msra.mxu0 %v3295
    %4709 = vmatpush.bf16.msra.mxu0 %v3292
    %4710 = vmatpush.bf16.msra.mxu0 %v3289
    %4711 = vmatpush.bf16.msra.mxu0 %v3286
    %4712 = vmatpush.bf16.msra.mxu0 %v3283
    %4713 = vmatpush.bf16.msra.mxu0 %v3280
    %4714 = vmatpush.bf16.msra.mxu0 %v3277
    %4715 = vmatpush.bf16.msra.mxu0 %v3274
    %4716 = vmatmul.bf16.gmra.mxu0 %v1536
    %v4717 = vpop.f32.mrf.mxu0
    %v4718 = vadd.f32 %v4705, %v4717
    %v4719 = vpop.f32.mrf.mxu0
    %4720 = vdwg.mxu0
    %4721 = vmatpush.bf16.msra.mxu0 %v3319
    %4722 = vmatpush.bf16.msra.mxu0 %v3316
    %4723 = vmatpush.bf16.msra.mxu0 %v3313
    %4724 = vmatpush.bf16.msra.mxu0 %v3310
    %4725 = vmatpush.bf16.msra.mxu0 %v3307
    %4726 = vmatpush.bf16.msra.mxu0 %v3304
    %4727 = vmatpush.bf16.msra.mxu0 %v3301
    %4728 = vmatpush.bf16.msra.mxu0 %v3298
    %4729 = vmatmul.bf16.gmra.mxu0 %v1537
    %v4730 = vpop.f32.mrf.mxu0
    %v4731 = vadd.f32 %v4718, %v4730
    %v4732 = vpop.f32.mrf.mxu0
    %4733 = vdwg.mxu0
    %4734 = vmatpush.bf16.msra.mxu0 %v3343
    %4735 = vmatpush.bf16.msra.mxu0 %v3340
    %4736 = vmatpush.bf16.msra.mxu0 %v3337
    %4737 = vmatpush.bf16.msra.mxu0 %v3334
    %4738 = vmatpush.bf16.msra.mxu0 %v3331
    %4739 = vmatpush.bf16.msra.mxu0 %v3328
    %4740 = vmatpush.bf16.msra.mxu0 %v3325
    %4741 = vmatpush.bf16.msra.mxu0 %v3322
    %4742 = vmatmul.bf16.gmra.mxu0 %v1538
    %v4743 = vpop.f32.mrf.mxu0
    %v4744 = vadd.f32 %v4731, %v4743
    %v4745 = vpop.f32.mrf.mxu0
    %4746 = vdwg.mxu0
    %4747 = vmatpush.bf16.msra.mxu0 %v3367
    %4748 = vmatpush.bf16.msra.mxu0 %v3364
    %4749 = vmatpush.bf16.msra.mxu0 %v3361
    %4750 = vmatpush.bf16.msra.mxu0 %v3358
    %4751 = vmatpush.bf16.msra.mxu0 %v3355
    %4752 = vmatpush.bf16.msra.mxu0 %v3352
    %4753 = vmatpush.bf16.msra.mxu0 %v3349
    %4754 = vmatpush.bf16.msra.mxu0 %v3346
    %4755 = vmatmul.bf16.gmra.mxu0 %v1539
    %v4756 = vpop.f32.mrf.mxu0
    %v4757 = vadd.f32 %v4744, %v4756
    %v4758 = vpop.f32.mrf.mxu0
    %4759 = vdwg.mxu0
    %4760 = vmatpush.bf16.msra.mxu0 %v3391
    %4761 = vmatpush.bf16.msra.mxu0 %v3388
    %4762 = vmatpush.bf16.msra.mxu0 %v3385
    %4763 = vmatpush.bf16.msra.mxu0 %v3382
    %4764 = vmatpush.bf16.msra.mxu0 %v3379
    %4765 = vmatpush.bf16.msra.mxu0 %v3376
    %4766 = vmatpush.bf16.msra.mxu0 %v3373
    %4767 = vmatpush.bf16.msra.mxu0 %v3370
    %4768 = vmatmul.bf16.gmra.mxu0 %v1542
    %v4769 = vpop.f32.mrf.mxu0
    %v4770 = vadd.f32 %v4757, %v4769
    %v4771 = vpop.f32.mrf.mxu0
    %4772 = vdwg.mxu0
    %4773 = vmatpush.bf16.msra.mxu0 %v3415
    %4774 = vmatpush.bf16.msra.mxu0 %v3412
    %4775 = vmatpush.bf16.msra.mxu0 %v3409
    %4776 = vmatpush.bf16.msra.mxu0 %v3406
    %4777 = vmatpush.bf16.msra.mxu0 %v3403
    %4778 = vmatpush.bf16.msra.mxu0 %v3400
    %4779 = vmatpush.bf16.msra.mxu0 %v3397
    %4780 = vmatpush.bf16.msra.mxu0 %v3394
    %4781 = vmatmul.bf16.gmra.mxu0 %v1543
    %v4782 = vpop.f32.mrf.mxu0
    %v4783 = vadd.f32 %v4770, %v4782
    %v4784 = vpop.f32.mrf.mxu0
    %4785 = vdwg.mxu0
    %4786 = vmatpush.bf16.msra.mxu0 %v3439
    %4787 = vmatpush.bf16.msra.mxu0 %v3436
    %4788 = vmatpush.bf16.msra.mxu0 %v3433
    %4789 = vmatpush.bf16.msra.mxu0 %v3430
    %4790 = vmatpush.bf16.msra.mxu0 %v3427
    %4791 = vmatpush.bf16.msra.mxu0 %v3424
    %4792 = vmatpush.bf16.msra.mxu0 %v3421
    %4793 = vmatpush.bf16.msra.mxu0 %v3418
    %4794 = vmatmul.bf16.gmra.mxu0 %v1544
    %v4795 = vpop.f32.mrf.mxu0
    %v4796 = vadd.f32 %v4783, %v4795
    %v4797 = vpop.f32.mrf.mxu0
    %4798 = vdwg.mxu0
    %4799 = vmatpush.bf16.msra.mxu0 %v3463
    %4800 = vmatpush.bf16.msra.mxu0 %v3460
    %4801 = vmatpush.bf16.msra.mxu0 %v3457
    %4802 = vmatpush.bf16.msra.mxu0 %v3454
    %4803 = vmatpush.bf16.msra.mxu0 %v3451
    %4804 = vmatpush.bf16.msra.mxu0 %v3448
    %4805 = vmatpush.bf16.msra.mxu0 %v3445
    %4806 = vmatpush.bf16.msra.mxu0 %v3442
    %4807 = vmatmul.bf16.gmra.mxu0 %v1545
    %v4808 = vpop.f32.mrf.mxu0
    %v4809 = vadd.f32 %v4796, %v4808
    %v4810 = vpop.f32.mrf.mxu0
    %4811 = vdwg.mxu0
    %4812 = vmatpush.bf16.msra.mxu0 %v3487
    %4813 = vmatpush.bf16.msra.mxu0 %v3484
    %4814 = vmatpush.bf16.msra.mxu0 %v3481
    %4815 = vmatpush.bf16.msra.mxu0 %v3478
    %4816 = vmatpush.bf16.msra.mxu0 %v3475
    %4817 = vmatpush.bf16.msra.mxu0 %v3472
    %4818 = vmatpush.bf16.msra.mxu0 %v3469
    %4819 = vmatpush.bf16.msra.mxu0 %v3466
    %4820 = vmatmul.bf16.gmra.mxu0 %v1546
    %v4821 = vpop.f32.mrf.mxu0
    %v4822 = vadd.f32 %v4809, %v4821
    %v4823 = vpop.f32.mrf.mxu0
    %4824 = vdwg.mxu0
    %4825 = vmatpush.bf16.msra.mxu0 %v3511
    %4826 = vmatpush.bf16.msra.mxu0 %v3508
    %4827 = vmatpush.bf16.msra.mxu0 %v3505
    %4828 = vmatpush.bf16.msra.mxu0 %v3502
    %4829 = vmatpush.bf16.msra.mxu0 %v3499
    %4830 = vmatpush.bf16.msra.mxu0 %v3496
    %4831 = vmatpush.bf16.msra.mxu0 %v3493
    %4832 = vmatpush.bf16.msra.mxu0 %v3490
    %4833 = vmatmul.bf16.gmra.mxu0 %v1547
    %v4834 = vpop.f32.mrf.mxu0
    %v4835 = vadd.f32 %v4822, %v4834
    %v4836 = vpop.f32.mrf.mxu0
    %4837 = vdwg.mxu0
    %4838 = vmatpush.bf16.msra.mxu0 %v3535
    %4839 = vmatpush.bf16.msra.mxu0 %v3532
    %4840 = vmatpush.bf16.msra.mxu0 %v3529
    %4841 = vmatpush.bf16.msra.mxu0 %v3526
    %4842 = vmatpush.bf16.msra.mxu0 %v3523
    %4843 = vmatpush.bf16.msra.mxu0 %v3520
    %4844 = vmatpush.bf16.msra.mxu0 %v3517
    %4845 = vmatpush.bf16.msra.mxu0 %v3514
    %4846 = vmatmul.bf16.gmra.mxu0 %v1548
    %v4847 = vpop.f32.mrf.mxu0
    %v4848 = vadd.f32 %v4835, %v4847
    %v4849 = vpop.f32.mrf.mxu0
    %4850 = vdwg.mxu0
    %4851 = vmatpush.bf16.msra.mxu0 %v3559
    %4852 = vmatpush.bf16.msra.mxu0 %v3556
    %4853 = vmatpush.bf16.msra.mxu0 %v3553
    %4854 = vmatpush.bf16.msra.mxu0 %v3550
    %4855 = vmatpush.bf16.msra.mxu0 %v3547
    %4856 = vmatpush.bf16.msra.mxu0 %v3544
    %4857 = vmatpush.bf16.msra.mxu0 %v3541
    %4858 = vmatpush.bf16.msra.mxu0 %v3538
    %4859 = vmatmul.bf16.gmra.mxu0 %v1549
    %v4860 = vpop.f32.mrf.mxu0
    %v4861 = vadd.f32 %v4848, %v4860
    %v4862 = vpop.f32.mrf.mxu0
    %4863 = vdwg.mxu0
    %4864 = vmatpush.bf16.msra.mxu0 %v3583
    %4865 = vmatpush.bf16.msra.mxu0 %v3580
    %4866 = vmatpush.bf16.msra.mxu0 %v3577
    %4867 = vmatpush.bf16.msra.mxu0 %v3574
    %4868 = vmatpush.bf16.msra.mxu0 %v3571
    %4869 = vmatpush.bf16.msra.mxu0 %v3568
    %4870 = vmatpush.bf16.msra.mxu0 %v3565
    %4871 = vmatpush.bf16.msra.mxu0 %v3562
    %4872 = vmatmul.bf16.gmra.mxu0 %v1552
    %v4873 = vpop.f32.mrf.mxu0
    %v4874 = vadd.f32 %v4861, %v4873
    %v4875 = vpop.f32.mrf.mxu0
    %4876 = vdwg.mxu0
    %4877 = vmatpush.bf16.msra.mxu0 %v3607
    %4878 = vmatpush.bf16.msra.mxu0 %v3604
    %4879 = vmatpush.bf16.msra.mxu0 %v3601
    %4880 = vmatpush.bf16.msra.mxu0 %v3598
    %4881 = vmatpush.bf16.msra.mxu0 %v3595
    %4882 = vmatpush.bf16.msra.mxu0 %v3592
    %4883 = vmatpush.bf16.msra.mxu0 %v3589
    %4884 = vmatpush.bf16.msra.mxu0 %v3586
    %4885 = vmatmul.bf16.gmra.mxu0 %v1553
    %v4886 = vpop.f32.mrf.mxu0
    %v4887 = vadd.f32 %v4874, %v4886
    %v4888 = vpop.f32.mrf.mxu0
    %4889 = vdwg.mxu0
    %4890 = vmatpush.bf16.msra.mxu0 %v3631
    %4891 = vmatpush.bf16.msra.mxu0 %v3628
    %4892 = vmatpush.bf16.msra.mxu0 %v3625
    %4893 = vmatpush.bf16.msra.mxu0 %v3622
    %4894 = vmatpush.bf16.msra.mxu0 %v3619
    %4895 = vmatpush.bf16.msra.mxu0 %v3616
    %4896 = vmatpush.bf16.msra.mxu0 %v3613
    %4897 = vmatpush.bf16.msra.mxu0 %v3610
    %4898 = vmatmul.bf16.gmra.mxu0 %v1554
    %v4899 = vpop.f32.mrf.mxu0
    %v4900 = vadd.f32 %v4887, %v4899
    %v4901 = vpop.f32.mrf.mxu0
    %4902 = vdwg.mxu0
    %4903 = vmatpush.bf16.msra.mxu0 %v3655
    %4904 = vmatpush.bf16.msra.mxu0 %v3652
    %4905 = vmatpush.bf16.msra.mxu0 %v3649
    %4906 = vmatpush.bf16.msra.mxu0 %v3646
    %4907 = vmatpush.bf16.msra.mxu0 %v3643
    %4908 = vmatpush.bf16.msra.mxu0 %v3640
    %4909 = vmatpush.bf16.msra.mxu0 %v3637
    %4910 = vmatpush.bf16.msra.mxu0 %v3634
    %4911 = vmatmul.bf16.gmra.mxu0 %v1555
    %v4912 = vpop.f32.mrf.mxu0
    %v4913 = vadd.f32 %v4900, %v4912
    %v4914 = vpop.f32.mrf.mxu0
    %4915 = vdwg.mxu0
    %v4916 = vmax.f32 %v4393, 0.0
    %v4917 = vmax.f32 %v4653, 0.0
    %v4918 = vmax.f32 %v4913, 0.0
    %v4919 = vld [vmem:[%s7] sm:$0xff]
    %v4920 = vld [vmem:[%s7 + $0x8] sm:$0xff]
    %v4921 = vld [vmem:[%s7 + $0x10] sm:$0xff]
    %v4922 = vld [vmem:[%s7 + $0x18] sm:$0xff]
    %v4923 = vld [vmem:[%s7 + $0x20] sm:$0xff]
    %v4924 = vld [vmem:[%s7 + $0x28] sm:$0xff]
    %v4925 = vld [vmem:[%s7 + $0x30] sm:$0xff]
    %v4926 = vld [vmem:[%s7 + $0x38] sm:$0xff]
    %v4927 = vld [vmem:[%s7 + $0x40] sm:$0xff]
    %v4928 = vld [vmem:[%s7 + $0x48] sm:$0xff]
    %v4929 = vld [vmem:[%s7 + $0x50] sm:$0xff]
    %v4930 = vld [vmem:[%s7 + $0x58] sm:$0xff]
    %v4931 = vld [vmem:[%s7 + $0x60] sm:$0xff]
    %v4932 = vld [vmem:[%s7 + $0x68] sm:$0xff]
    %v4933 = vld [vmem:[%s7 + $0x70] sm:$0xff]
    %v4934 = vld [vmem:[%s7 + $0x78] sm:$0xff]
    %v4935 = vld [vmem:[%s7 + $0x80] sm:$0xff]
    %v4936 = vld [vmem:[%s7 + $0x88] sm:$0xff]
    %v4937 = vld [vmem:[%s7 + $0x90] sm:$0xff]
    %v4938 = vld [vmem:[%s7 + $0x98] sm:$0xff]
    %v4939 = vld [vmem:[%s7 + $0xa0] sm:$0xff]
    %v4940 = vld [vmem:[%s7 + $0xa8] sm:$0xff]
    %v4941 = vld [vmem:[%s7 + $0xb0] sm:$0xff]
    %v4942 = vld [vmem:[%s7 + $0xb8] sm:$0xff]
    %v4943 = vld [vmem:[%s7 + $0xc0] sm:$0xff]
    %v4944 = vld [vmem:[%s7 + $0xc8] sm:$0xff]
    %v4945 = vld [vmem:[%s7 + $0xd0] sm:$0xff]
    %v4946 = vld [vmem:[%s7 + $0xd8] sm:$0xff]
    %v4947 = vld [vmem:[%s7 + $0xe0] sm:$0xff]
    %v4948 = vld [vmem:[%s7 + $0xe8] sm:$0xff]
    %v4949 = vld [vmem:[%s7 + $0xf0] sm:$0xff]
    %v4950 = vld [vmem:[%s7 + $0xf8] sm:$0xff]
    %v4951 = vld [vmem:[%s7 + $0x100] sm:$0xff]
    %v4952 = vld [vmem:[%s7 + $0x108] sm:$0xff]
    %v4953 = vld [vmem:[%s7 + $0x110] sm:$0xff]
    %v4954 = vld [vmem:[%s7 + $0x118] sm:$0xff]
    %v4955 = vld [vmem:[%s7 + $0x120] sm:$0xff]
    %v4956 = vld [vmem:[%s7 + $0x128] sm:$0xff]
    %v4957 = vld [vmem:[%s7 + $0x130] sm:$0xff]
    %v4958 = vld [vmem:[%s7 + $0x138] sm:$0xff]
    %v4959 = vld [vmem:[%s7 + $0x140] sm:$0xff]
    %v4960 = vld [vmem:[%s7 + $0x148] sm:$0xff]
    %v4961 = vld [vmem:[%s7 + $0x150] sm:$0xff]
    %v4962 = vld [vmem:[%s7 + $0x158] sm:$0xff]
    %v4963 = vld [vmem:[%s7 + $0x160] sm:$0xff]
    %v4964 = vld [vmem:[%s7 + $0x168] sm:$0xff]
    %v4965 = vld [vmem:[%s7 + $0x170] sm:$0xff]
    %v4966 = vld [vmem:[%s7 + $0x178] sm:$0xff]
    %v4967 = vld [vmem:[#allocation9] sm:$0x1]
    %v4969 = vperm.slane %v4967, 0
    %4971 = vmatpush.msra.mxu0 %v4934
    %4972 = vmatpush.msra.mxu0 %v4933
    %4973 = vmatpush.msra.mxu0 %v4932
    %4974 = vmatpush.msra.mxu0 %v4931
    %4975 = vmatpush.msra.mxu0 %v4930
    %4976 = vmatpush.msra.mxu0 %v4929
    %4977 = vmatpush.msra.mxu0 %v4928
    %4978 = vmatpush.msra.mxu0 %v4927
    %4979 = vmatpush.msra.mxu0 %v4926
    %4980 = vmatpush.msra.mxu0 %v4925
    %4981 = vmatpush.msra.mxu0 %v4924
    %4982 = vmatpush.msra.mxu0 %v4923
    %4983 = vmatpush.msra.mxu0 %v4922
    %4984 = vmatpush.msra.mxu0 %v4921
    %4985 = vmatpush.msra.mxu0 %v4920
    %4986 = vmatpush.msra.mxu0 %v4919
    %4987 = vmatmul.f32.gmra.mxu0 %v4916
    %v4988 = vpop.f32.mrf.mxu0
    %v4989 = vadd.f32 %v4969, %v4988
    %4990 = vdwg.mxu0
    %4991 = vmatpush.msra.mxu0 %v4950
    %4992 = vmatpush.msra.mxu0 %v4949
    %4993 = vmatpush.msra.mxu0 %v4948
    %4994 = vmatpush.msra.mxu0 %v4947
    %4995 = vmatpush.msra.mxu0 %v4946
    %4996 = vmatpush.msra.mxu0 %v4945
    %4997 = vmatpush.msra.mxu0 %v4944
    %4998 = vmatpush.msra.mxu0 %v4943
    %4999 = vmatpush.msra.mxu0 %v4942
    %5000 = vmatpush.msra.mxu0 %v4941
    %5001 = vmatpush.msra.mxu0 %v4940
    %5002 = vmatpush.msra.mxu0 %v4939
    %5003 = vmatpush.msra.mxu0 %v4938
    %5004 = vmatpush.msra.mxu0 %v4937
    %5005 = vmatpush.msra.mxu0 %v4936
    %5006 = vmatpush.msra.mxu0 %v4935
    %5007 = vmatmul.f32.gmra.mxu0 %v4917
    %v5008 = vpop.f32.mrf.mxu0
    %v5009 = vadd.f32 %v4989, %v5008
    %5010 = vdwg.mxu0
    %5011 = vmatpush.msra.mxu0 %v4966
    %5012 = vmatpush.msra.mxu0 %v4965
    %5013 = vmatpush.msra.mxu0 %v4964
    %5014 = vmatpush.msra.mxu0 %v4963
    %5015 = vmatpush.msra.mxu0 %v4962
    %5016 = vmatpush.msra.mxu0 %v4961
    %5017 = vmatpush.msra.mxu0 %v4960
    %5018 = vmatpush.msra.mxu0 %v4959
    %5019 = vmatpush.msra.mxu0 %v4958
    %5020 = vmatpush.msra.mxu0 %v4957
    %5021 = vmatpush.msra.mxu0 %v4956
    %5022 = vmatpush.msra.mxu0 %v4955
    %5023 = vmatpush.msra.mxu0 %v4954
    %5024 = vmatpush.msra.mxu0 %v4953
    %5025 = vmatpush.msra.mxu0 %v4952
    %5026 = vmatpush.msra.mxu0 %v4951
    %5027 = vmatmul.f32.gmra.mxu0 %v4918
    %v5028 = vpop.f32.mrf.mxu0
    %v5029 = vadd.f32 %v5009, %v5028
    %5030 = vdwg.mxu0
    %v5031 = vld [vmem:[%s9] sm:$0xf]
    %v5032 = vld [vmem:[#allocation10] sm:$0xff]
    %v5033 = vld [vmem:[#allocation10 + $0x8] sm:$0xf]
    %v5034 = vld [vmem:[#allocation10 + $0xc] sm:$0xff]
    %v5035 = vld [vmem:[#allocation10 + $0x14] sm:$0xf]
    %v5036 = vld [vmem:[#allocation10 + $0x18] sm:$0xff]
    %v5037 = vld [vmem:[#allocation10 + $0x20] sm:$0xf]
    %v5038 = vld [vmem:[#allocation10 + $0x24] sm:$0xff]
    %v5039 = vld [vmem:[#allocation10 + $0x2c] sm:$0xf]
    %v5040 = vld [vmem:[#allocation10 + $0x30] sm:$0xff]
    %v5041 = vld [vmem:[#allocation10 + $0x38] sm:$0xf]
    %v5042 = vld [vmem:[#allocation10 + $0x3c] sm:$0xff]
    %v5043 = vld [vmem:[#allocation10 + $0x44] sm:$0xf]
    %v5044 = vld [vmem:[#allocation10 + $0x48] sm:$0xff]
    %v5045 = vld [vmem:[#allocation10 + $0x50] sm:$0xf]
    %v5046 = vld [vmem:[#allocation10 + $0x54] sm:$0xff]
    %v5047 = vld [vmem:[#allocation10 + $0x5c] sm:$0xf]
    %v5048 = vld [vmem:[#allocation10 + $0x60] sm:$0xff]
    %v5049 = vld [vmem:[#allocation10 + $0x68] sm:$0xf]
    %v5050 = vld [vmem:[#allocation10 + $0x6c] sm:$0xff]
    %v5051 = vld [vmem:[#allocation10 + $0x74] sm:$0xf]
    %v5052 = vld [vmem:[#allocation10 + $0x78] sm:$0xff]
    %v5053 = vld [vmem:[#allocation10 + $0x80] sm:$0xf]
    %v5054 = vld [vmem:[#allocation10 + $0x84] sm:$0xff]
    %v5055 = vld [vmem:[#allocation10 + $0x8c] sm:$0xf]
    %v5056 = vld [vmem:[#allocation10 + $0x90] sm:$0xff]
    %v5057 = vld [vmem:[#allocation10 + $0x98] sm:$0xf]
    %v5058 = vld [vmem:[#allocation10 + $0x9c] sm:$0xff]
    %v5059 = vld [vmem:[#allocation10 + $0xa4] sm:$0xf]
    %v5060 = vld [vmem:[#allocation10 + $0xa8] sm:$0xff]
    %v5061 = vld [vmem:[#allocation10 + $0xb0] sm:$0xf]
    %v5062 = vld [vmem:[#allocation10 + $0xb4] sm:$0xff]
    %v5063 = vld [vmem:[#allocation10 + $0xbc] sm:$0xf]
    %v5064 = vld [vmem:[#allocation10 + $0xc0] sm:$0xff]
    %v5065 = vld [vmem:[#allocation10 + $0xc8] sm:$0xf]
    %v5066 = vld [vmem:[#allocation10 + $0xcc] sm:$0xff]
    %v5067 = vld [vmem:[#allocation10 + $0xd4] sm:$0xf]
    %v5068 = vld [vmem:[#allocation10 + $0xd8] sm:$0xff]
    %v5069 = vld [vmem:[#allocation10 + $0xe0] sm:$0xf]
    %v5070 = vld [vmem:[#allocation10 + $0xe4] sm:$0xff]
    %v5071 = vld [vmem:[#allocation10 + $0xec] sm:$0xf]
    %v5072 = vld [vmem:[#allocation10 + $0xf0] sm:$0xff]
    %v5073 = vld [vmem:[#allocation10 + $0xf8] sm:$0xf]
    %v5074 = vld [vmem:[#allocation10 + $0xfc] sm:$0xff]
    %v5075 = vld [vmem:[#allocation10 + $0x104] sm:$0xf]
    %v5076 = vld [vmem:[#allocation10 + $0x108] sm:$0xff]
    %v5077 = vld [vmem:[#allocation10 + $0x110] sm:$0xf]
    %v5078 = vld [vmem:[#allocation10 + $0x114] sm:$0xff]
    %v5079 = vld [vmem:[#allocation10 + $0x11c] sm:$0xf]
    %v5080 = vld [vmem:[#allocation10 + $0x120] sm:$0xff]
    %v5081 = vld [vmem:[#allocation10 + $0x128] sm:$0xf]
    %v5082 = vld [vmem:[#allocation10 + $0x12c] sm:$0xff]
    %v5083 = vld [vmem:[#allocation10 + $0x134] sm:$0xf]
    %v5084 = vld [vmem:[#allocation10 + $0x138] sm:$0xff]
    %v5085 = vld [vmem:[#allocation10 + $0x140] sm:$0xf]
    %v5086 = vld [vmem:[#allocation10 + $0x144] sm:$0xff]
    %v5087 = vld [vmem:[#allocation10 + $0x14c] sm:$0xf]
    %v5088 = vld [vmem:[#allocation10 + $0x150] sm:$0xff]
    %v5089 = vld [vmem:[#allocation10 + $0x158] sm:$0xf]
    %v5090 = vld [vmem:[#allocation10 + $0x15c] sm:$0xff]
    %v5091 = vld [vmem:[#allocation10 + $0x164] sm:$0xf]
    %v5092 = vld [vmem:[#allocation10 + $0x168] sm:$0xff]
    %v5093 = vld [vmem:[#allocation10 + $0x170] sm:$0xf]
    %v5094 = vld [vmem:[#allocation10 + $0x174] sm:$0xff]
    %v5095 = vld [vmem:[#allocation10 + $0x17c] sm:$0xf]
    %v5096 = vld [vmem:[#allocation10 + $0x180] sm:$0xff]
    %v5097 = vld [vmem:[#allocation10 + $0x188] sm:$0xf]
    %v5098 = vld [vmem:[#allocation10 + $0x18c] sm:$0xff]
    %v5099 = vld [vmem:[#allocation10 + $0x194] sm:$0xf]
    %v5100 = vld [vmem:[#allocation10 + $0x198] sm:$0xff]
    %v5101 = vld [vmem:[#allocation10 + $0x1a0] sm:$0xf]
    %v5102 = vld [vmem:[#allocation10 + $0x1a4] sm:$0xff]
    %v5103 = vld [vmem:[#allocation10 + $0x1ac] sm:$0xf]
    %v5104 = vld [vmem:[#allocation10 + $0x1b0] sm:$0xff]
    %v5105 = vld [vmem:[#allocation10 + $0x1b8] sm:$0xf]
    %v5106 = vld [vmem:[#allocation10 + $0x1bc] sm:$0xff]
    %v5107 = vld [vmem:[#allocation10 + $0x1c4] sm:$0xf]
    %v5108 = vld [vmem:[#allocation10 + $0x1c8] sm:$0xff]
    %v5109 = vld [vmem:[#allocation10 + $0x1d0] sm:$0xf]
    %v5110 = vld [vmem:[#allocation10 + $0x1d4] sm:$0xff]
    %v5111 = vld [vmem:[#allocation10 + $0x1dc] sm:$0xf]
    %v5112 = vld [vmem:[#allocation10 + $0x1e0] sm:$0xff]
    %v5113 = vld [vmem:[#allocation10 + $0x1e8] sm:$0xf]
    %v5114 = vld [vmem:[#allocation10 + $0x1ec] sm:$0xff]
    %v5115 = vld [vmem:[#allocation10 + $0x1f4] sm:$0xf]
    %v5116 = vld [vmem:[#allocation10 + $0x1f8] sm:$0xff]
    %v5117 = vld [vmem:[#allocation10 + $0x200] sm:$0xf]
    %v5118 = vld [vmem:[#allocation10 + $0x204] sm:$0xff]
    %v5119 = vld [vmem:[#allocation10 + $0x20c] sm:$0xf]
    %v5120 = vld [vmem:[#allocation10 + $0x210] sm:$0xff]
    %v5121 = vld [vmem:[#allocation10 + $0x218] sm:$0xf]
    %v5122 = vld [vmem:[#allocation10 + $0x21c] sm:$0xff]
    %v5123 = vld [vmem:[#allocation10 + $0x224] sm:$0xf]
    %v5124 = vld [vmem:[#allocation10 + $0x228] sm:$0xff]
    %v5125 = vld [vmem:[#allocation10 + $0x230] sm:$0xf]
    %v5126 = vld [vmem:[#allocation10 + $0x234] sm:$0xff]
    %v5127 = vld [vmem:[#allocation10 + $0x23c] sm:$0xf]
    %v5128 = vld [vmem:[#allocation10 + $0x240] sm:$0xff]
    %v5129 = vld [vmem:[#allocation10 + $0x248] sm:$0xf]
    %v5130 = vld [vmem:[#allocation10 + $0x24c] sm:$0xff]
    %v5131 = vld [vmem:[#allocation10 + $0x254] sm:$0xf]
    %v5132 = vld [vmem:[#allocation10 + $0x258] sm:$0xff]
    %v5133 = vld [vmem:[#allocation10 + $0x260] sm:$0xf]
    %v5134 = vld [vmem:[#allocation10 + $0x264] sm:$0xff]
    %v5135 = vld [vmem:[#allocation10 + $0x26c] sm:$0xf]
    %v5136 = vld [vmem:[#allocation10 + $0x270] sm:$0xff]
    %v5137 = vld [vmem:[#allocation10 + $0x278] sm:$0xf]
    %v5138 = vld [vmem:[#allocation10 + $0x27c] sm:$0xff]
    %v5139 = vld [vmem:[#allocation10 + $0x284] sm:$0xf]
    %v5140 = vld [vmem:[#allocation10 + $0x288] sm:$0xff]
    %v5141 = vld [vmem:[#allocation10 + $0x290] sm:$0xf]
    %v5142 = vld [vmem:[#allocation10 + $0x294] sm:$0xff]
    %v5143 = vld [vmem:[#allocation10 + $0x29c] sm:$0xf]
    %v5144 = vld [vmem:[#allocation10 + $0x2a0] sm:$0xff]
    %v5145 = vld [vmem:[#allocation10 + $0x2a8] sm:$0xf]
    %v5146 = vld [vmem:[#allocation10 + $0x2ac] sm:$0xff]
    %v5147 = vld [vmem:[#allocation10 + $0x2b4] sm:$0xf]
    %v5148 = vld [vmem:[#allocation10 + $0x2b8] sm:$0xff]
    %v5149 = vld [vmem:[#allocation10 + $0x2c0] sm:$0xf]
    %v5150 = vld [vmem:[#allocation10 + $0x2c4] sm:$0xff]
    %v5151 = vld [vmem:[#allocation10 + $0x2cc] sm:$0xf]
    %v5152 = vld [vmem:[#allocation10 + $0x2d0] sm:$0xff]
    %v5153 = vld [vmem:[#allocation10 + $0x2d8] sm:$0xf]
    %v5154 = vld [vmem:[#allocation10 + $0x2dc] sm:$0xff]
    %v5155 = vld [vmem:[#allocation10 + $0x2e4] sm:$0xf]
    %v5156 = vld [vmem:[#allocation10 + $0x2e8] sm:$0xff]
    %v5157 = vld [vmem:[#allocation10 + $0x2f0] sm:$0xf]
    %v5158 = vld [vmem:[#allocation10 + $0x2f4] sm:$0xff]
    %v5159 = vld [vmem:[#allocation10 + $0x2fc] sm:$0xf]
    %v5160 = vld [vmem:[#allocation12] sm:$0x7]
    %v5162 = vperm.slane %v5160, 0
    %v5163 = vperm.slane %v5160, 1
    %v5164 = vperm.slane %v5160, 2
    %5169 = vst [vmem:[#allocation1] ss:$9 sm:$0xff] %v5031
    %v5170 = vld [vmem:[#allocation1] sm:$0xff]
    %v5171 = vld [vmem:[#allocation1 + $0x9] sm:$0xff]
    %v5172 = vld [vmem:[#allocation1 + $0x12] sm:$0xff]
    %v5173 = vld [vmem:[#allocation1 + $0x1b] sm:$0xff]
    %v5306 = vunpack.c.l.b16 %v5032
    %v5307 = vunpack.c.h.b16 %v5032
    %v5308 = vunpack.c.l.b16 %v5033
    %v5309 = vunpack.c.l.b16 %v5034
    %v5310 = vunpack.c.h.b16 %v5034
    %v5311 = vunpack.c.l.b16 %v5035
    %v5312 = vunpack.c.l.b16 %v5036
    %v5313 = vunpack.c.h.b16 %v5036
    %v5314 = vunpack.c.l.b16 %v5037
    %v5315 = vunpack.c.l.b16 %v5038
    %v5316 = vunpack.c.h.b16 %v5038
    %v5317 = vunpack.c.l.b16 %v5039
    %v5318 = vunpack.c.l.b16 %v5040
    %v5319 = vunpack.c.h.b16 %v5040
    %v5320 = vunpack.c.l.b16 %v5041
    %v5321 = vunpack.c.l.b16 %v5042
    %v5322 = vunpack.c.h.b16 %v5042
    %v5323 = vunpack.c.l.b16 %v5043
    %v5324 = vunpack.c.l.b16 %v5044
    %v5325 = vunpack.c.h.b16 %v5044
    %v5326 = vunpack.c.l.b16 %v5045
    %v5327 = vunpack.c.l.b16 %v5046
    %v5328 = vunpack.c.h.b16 %v5046
    %v5329 = vunpack.c.l.b16 %v5047
    %v5330 = vunpack.c.l.b16 %v5048
    %v5331 = vunpack.c.h.b16 %v5048
    %v5332 = vunpack.c.l.b16 %v5049
    %v5333 = vunpack.c.l.b16 %v5050
    %v5334 = vunpack.c.h.b16 %v5050
    %v5335 = vunpack.c.l.b16 %v5051
    %v5336 = vunpack.c.l.b16 %v5052
    %v5337 = vunpack.c.h.b16 %v5052
    %v5338 = vunpack.c.l.b16 %v5053
    %v5339 = vunpack.c.l.b16 %v5054
    %v5340 = vunpack.c.h.b16 %v5054
    %v5341 = vunpack.c.l.b16 %v5055
    %v5342 = vunpack.c.l.b16 %v5056
    %v5343 = vunpack.c.h.b16 %v5056
    %v5344 = vunpack.c.l.b16 %v5057
    %v5345 = vunpack.c.l.b16 %v5058
    %v5346 = vunpack.c.h.b16 %v5058
    %v5347 = vunpack.c.l.b16 %v5059
    %v5348 = vunpack.c.l.b16 %v5060
    %v5349 = vunpack.c.h.b16 %v5060
    %v5350 = vunpack.c.l.b16 %v5061
    %v5351 = vunpack.c.l.b16 %v5062
    %v5352 = vunpack.c.h.b16 %v5062
    %v5353 = vunpack.c.l.b16 %v5063
    %v5354 = vunpack.c.l.b16 %v5064
    %v5355 = vunpack.c.h.b16 %v5064
    %v5356 = vunpack.c.l.b16 %v5065
    %v5357 = vunpack.c.l.b16 %v5066
    %v5358 = vunpack.c.h.b16 %v5066
    %v5359 = vunpack.c.l.b16 %v5067
    %v5360 = vunpack.c.l.b16 %v5068
    %v5361 = vunpack.c.h.b16 %v5068
    %v5362 = vunpack.c.l.b16 %v5069
    %v5363 = vunpack.c.l.b16 %v5070
    %v5364 = vunpack.c.h.b16 %v5070
    %v5365 = vunpack.c.l.b16 %v5071
    %v5366 = vunpack.c.l.b16 %v5072
    %v5367 = vunpack.c.h.b16 %v5072
    %v5368 = vunpack.c.l.b16 %v5073
    %v5369 = vunpack.c.l.b16 %v5074
    %v5370 = vunpack.c.h.b16 %v5074
    %v5371 = vunpack.c.l.b16 %v5075
    %v5372 = vunpack.c.l.b16 %v5076
    %v5373 = vunpack.c.h.b16 %v5076
    %v5374 = vunpack.c.l.b16 %v5077
    %v5375 = vunpack.c.l.b16 %v5078
    %v5376 = vunpack.c.h.b16 %v5078
    %v5377 = vunpack.c.l.b16 %v5079
    %v5378 = vunpack.c.l.b16 %v5080
    %v5379 = vunpack.c.h.b16 %v5080
    %v5380 = vunpack.c.l.b16 %v5081
    %v5381 = vunpack.c.l.b16 %v5082
    %v5382 = vunpack.c.h.b16 %v5082
    %v5383 = vunpack.c.l.b16 %v5083
    %v5384 = vunpack.c.l.b16 %v5084
    %v5385 = vunpack.c.h.b16 %v5084
    %v5386 = vunpack.c.l.b16 %v5085
    %v5387 = vunpack.c.l.b16 %v5086
    %v5388 = vunpack.c.h.b16 %v5086
    %v5389 = vunpack.c.l.b16 %v5087
    %v5390 = vunpack.c.l.b16 %v5088
    %v5391 = vunpack.c.h.b16 %v5088
    %v5392 = vunpack.c.l.b16 %v5089
    %v5393 = vunpack.c.l.b16 %v5090
    %v5394 = vunpack.c.h.b16 %v5090
    %v5395 = vunpack.c.l.b16 %v5091
    %v5396 = vunpack.c.l.b16 %v5092
    %v5397 = vunpack.c.h.b16 %v5092
    %v5398 = vunpack.c.l.b16 %v5093
    %v5399 = vunpack.c.l.b16 %v5094
    %v5400 = vunpack.c.h.b16 %v5094
    %v5401 = vunpack.c.l.b16 %v5095
    %v5402 = vunpack.c.l.b16 %v5096
    %v5403 = vunpack.c.h.b16 %v5096
    %v5404 = vunpack.c.l.b16 %v5097
    %v5405 = vunpack.c.l.b16 %v5098
    %v5406 = vunpack.c.h.b16 %v5098
    %v5407 = vunpack.c.l.b16 %v5099
    %v5408 = vunpack.c.l.b16 %v5100
    %v5409 = vunpack.c.h.b16 %v5100
    %v5410 = vunpack.c.l.b16 %v5101
    %v5411 = vunpack.c.l.b16 %v5102
    %v5412 = vunpack.c.h.b16 %v5102
    %v5413 = vunpack.c.l.b16 %v5103
    %v5414 = vunpack.c.l.b16 %v5104
    %v5415 = vunpack.c.h.b16 %v5104
    %v5416 = vunpack.c.l.b16 %v5105
    %v5417 = vunpack.c.l.b16 %v5106
    %v5418 = vunpack.c.h.b16 %v5106
    %v5419 = vunpack.c.l.b16 %v5107
    %v5420 = vunpack.c.l.b16 %v5108
    %v5421 = vunpack.c.h.b16 %v5108
    %v5422 = vunpack.c.l.b16 %v5109
    %v5423 = vunpack.c.l.b16 %v5110
    %v5424 = vunpack.c.h.b16 %v5110
    %v5425 = vunpack.c.l.b16 %v5111
    %v5426 = vunpack.c.l.b16 %v5112
    %v5427 = vunpack.c.h.b16 %v5112
    %v5428 = vunpack.c.l.b16 %v5113
    %v5429 = vunpack.c.l.b16 %v5114
    %v5430 = vunpack.c.h.b16 %v5114
    %v5431 = vunpack.c.l.b16 %v5115
    %v5432 = vunpack.c.l.b16 %v5116
    %v5433 = vunpack.c.h.b16 %v5116
    %v5434 = vunpack.c.l.b16 %v5117
    %v5435 = vunpack.c.l.b16 %v5118
    %v5436 = vunpack.c.h.b16 %v5118
    %v5437 = vunpack.c.l.b16 %v5119
    %v5438 = vunpack.c.l.b16 %v5120
    %v5439 = vunpack.c.h.b16 %v5120
    %v5440 = vunpack.c.l.b16 %v5121
    %v5441 = vunpack.c.l.b16 %v5122
    %v5442 = vunpack.c.h.b16 %v5122
    %v5443 = vunpack.c.l.b16 %v5123
    %v5444 = vunpack.c.l.b16 %v5124
    %v5445 = vunpack.c.h.b16 %v5124
    %v5446 = vunpack.c.l.b16 %v5125
    %v5447 = vunpack.c.l.b16 %v5126
    %v5448 = vunpack.c.h.b16 %v5126
    %v5449 = vunpack.c.l.b16 %v5127
    %v5450 = vunpack.c.l.b16 %v5128
    %v5451 = vunpack.c.h.b16 %v5128
    %v5452 = vunpack.c.l.b16 %v5129
    %v5453 = vunpack.c.l.b16 %v5130
    %v5454 = vunpack.c.h.b16 %v5130
    %v5455 = vunpack.c.l.b16 %v5131
    %v5456 = vunpack.c.l.b16 %v5132
    %v5457 = vunpack.c.h.b16 %v5132
    %v5458 = vunpack.c.l.b16 %v5133
    %v5459 = vunpack.c.l.b16 %v5134
    %v5460 = vunpack.c.h.b16 %v5134
    %v5461 = vunpack.c.l.b16 %v5135
    %v5462 = vunpack.c.l.b16 %v5136
    %v5463 = vunpack.c.h.b16 %v5136
    %v5464 = vunpack.c.l.b16 %v5137
    %v5465 = vunpack.c.l.b16 %v5138
    %v5466 = vunpack.c.h.b16 %v5138
    %v5467 = vunpack.c.l.b16 %v5139
    %v5468 = vunpack.c.l.b16 %v5140
    %v5469 = vunpack.c.h.b16 %v5140
    %v5470 = vunpack.c.l.b16 %v5141
    %v5471 = vunpack.c.l.b16 %v5142
    %v5472 = vunpack.c.h.b16 %v5142
    %v5473 = vunpack.c.l.b16 %v5143
    %v5474 = vunpack.c.l.b16 %v5144
    %v5475 = vunpack.c.h.b16 %v5144
    %v5476 = vunpack.c.l.b16 %v5145
    %v5477 = vunpack.c.l.b16 %v5146
    %v5478 = vunpack.c.h.b16 %v5146
    %v5479 = vunpack.c.l.b16 %v5147
    %v5480 = vunpack.c.l.b16 %v5148
    %v5481 = vunpack.c.h.b16 %v5148
    %v5482 = vunpack.c.l.b16 %v5149
    %v5483 = vunpack.c.l.b16 %v5150
    %v5484 = vunpack.c.h.b16 %v5150
    %v5485 = vunpack.c.l.b16 %v5151
    %v5486 = vunpack.c.l.b16 %v5152
    %v5487 = vunpack.c.h.b16 %v5152
    %v5488 = vunpack.c.l.b16 %v5153
    %v5489 = vunpack.c.l.b16 %v5154
    %v5490 = vunpack.c.h.b16 %v5154
    %v5491 = vunpack.c.l.b16 %v5155
    %v5492 = vunpack.c.l.b16 %v5156
    %v5493 = vunpack.c.h.b16 %v5156
    %v5494 = vunpack.c.l.b16 %v5157
    %v5495 = vunpack.c.l.b16 %v5158
    %v5496 = vunpack.c.h.b16 %v5158
    %v5497 = vunpack.c.l.b16 %v5159
    %v5498 = vpack.c.b16 %v5309, %v5306
    %v5499 = vpack.c.b16 %v5310, %v5307
    %v5500 = vpack.c.b16 %v5311, %v5308
    %v5501 = vpack.c.b16 %v5315, %v5312
    %v5502 = vpack.c.b16 %v5316, %v5313
    %v5503 = vpack.c.b16 %v5317, %v5314
    %v5504 = vpack.c.b16 %v5321, %v5318
    %v5505 = vpack.c.b16 %v5322, %v5319
    %v5506 = vpack.c.b16 %v5323, %v5320
    %v5507 = vpack.c.b16 %v5327, %v5324
    %v5508 = vpack.c.b16 %v5328, %v5325
    %v5509 = vpack.c.b16 %v5329, %v5326
    %v5510 = vpack.c.b16 %v5333, %v5330
    %v5511 = vpack.c.b16 %v5334, %v5331
    %v5512 = vpack.c.b16 %v5335, %v5332
    %v5513 = vpack.c.b16 %v5339, %v5336
    %v5514 = vpack.c.b16 %v5340, %v5337
    %v5515 = vpack.c.b16 %v5341, %v5338
    %v5516 = vpack.c.b16 %v5345, %v5342
    %v5517 = vpack.c.b16 %v5346, %v5343
    %v5518 = vpack.c.b16 %v5347, %v5344
    %v5519 = vpack.c.b16 %v5351, %v5348
    %v5520 = vpack.c.b16 %v5352, %v5349
    %v5521 = vpack.c.b16 %v5353, %v5350
    %v5522 = vpack.c.b16 %v5357, %v5354
    %v5523 = vpack.c.b16 %v5358, %v5355
    %v5524 = vpack.c.b16 %v5359, %v5356
    %v5525 = vpack.c.b16 %v5363, %v5360
    %v5526 = vpack.c.b16 %v5364, %v5361
    %v5527 = vpack.c.b16 %v5365, %v5362
    %v5528 = vpack.c.b16 %v5369, %v5366
    %v5529 = vpack.c.b16 %v5370, %v5367
    %v5530 = vpack.c.b16 %v5371, %v5368
    %v5531 = vpack.c.b16 %v5375, %v5372
    %v5532 = vpack.c.b16 %v5376, %v5373
    %v5533 = vpack.c.b16 %v5377, %v5374
    %v5534 = vpack.c.b16 %v5381, %v5378
    %v5535 = vpack.c.b16 %v5382, %v5379
    %v5536 = vpack.c.b16 %v5383, %v5380
    %v5537 = vpack.c.b16 %v5387, %v5384
    %v5538 = vpack.c.b16 %v5388, %v5385
    %v5539 = vpack.c.b16 %v5389, %v5386
    %v5540 = vpack.c.b16 %v5393, %v5390
    %v5541 = vpack.c.b16 %v5394, %v5391
    %v5542 = vpack.c.b16 %v5395, %v5392
    %v5543 = vpack.c.b16 %v5399, %v5396
    %v5544 = vpack.c.b16 %v5400, %v5397
    %v5545 = vpack.c.b16 %v5401, %v5398
    %v5546 = vpack.c.b16 %v5405, %v5402
    %v5547 = vpack.c.b16 %v5406, %v5403
    %v5548 = vpack.c.b16 %v5407, %v5404
    %v5549 = vpack.c.b16 %v5411, %v5408
    %v5550 = vpack.c.b16 %v5412, %v5409
    %v5551 = vpack.c.b16 %v5413, %v5410
    %v5552 = vpack.c.b16 %v5417, %v5414
    %v5553 = vpack.c.b16 %v5418, %v5415
    %v5554 = vpack.c.b16 %v5419, %v5416
    %v5555 = vpack.c.b16 %v5423, %v5420
    %v5556 = vpack.c.b16 %v5424, %v5421
    %v5557 = vpack.c.b16 %v5425, %v5422
    %v5558 = vpack.c.b16 %v5429, %v5426
    %v5559 = vpack.c.b16 %v5430, %v5427
    %v5560 = vpack.c.b16 %v5431, %v5428
    %v5561 = vpack.c.b16 %v5435, %v5432
    %v5562 = vpack.c.b16 %v5436, %v5433
    %v5563 = vpack.c.b16 %v5437, %v5434
    %v5564 = vpack.c.b16 %v5441, %v5438
    %v5565 = vpack.c.b16 %v5442, %v5439
    %v5566 = vpack.c.b16 %v5443, %v5440
    %v5567 = vpack.c.b16 %v5447, %v5444
    %v5568 = vpack.c.b16 %v5448, %v5445
    %v5569 = vpack.c.b16 %v5449, %v5446
    %v5570 = vpack.c.b16 %v5453, %v5450
    %v5571 = vpack.c.b16 %v5454, %v5451
    %v5572 = vpack.c.b16 %v5455, %v5452
    %v5573 = vpack.c.b16 %v5459, %v5456
    %v5574 = vpack.c.b16 %v5460, %v5457
    %v5575 = vpack.c.b16 %v5461, %v5458
    %v5576 = vpack.c.b16 %v5465, %v5462
    %v5577 = vpack.c.b16 %v5466, %v5463
    %v5578 = vpack.c.b16 %v5467, %v5464
    %v5579 = vpack.c.b16 %v5471, %v5468
    %v5580 = vpack.c.b16 %v5472, %v5469
    %v5581 = vpack.c.b16 %v5473, %v5470
    %v5582 = vpack.c.b16 %v5477, %v5474
    %v5583 = vpack.c.b16 %v5478, %v5475
    %v5584 = vpack.c.b16 %v5479, %v5476
    %v5585 = vpack.c.b16 %v5483, %v5480
    %v5586 = vpack.c.b16 %v5484, %v5481
    %v5587 = vpack.c.b16 %v5485, %v5482
    %v5588 = vpack.c.b16 %v5489, %v5486
    %v5589 = vpack.c.b16 %v5490, %v5487
    %v5590 = vpack.c.b16 %v5491, %v5488
    %v5591 = vpack.c.b16 %v5495, %v5492
    %v5592 = vpack.c.b16 %v5496, %v5493
    %v5593 = vpack.c.b16 %v5497, %v5494
    %5690 = vmatpush.bf16.msra.mxu0 %v5519
    %5691 = vmatpush.bf16.msra.mxu0 %v5516
    %5692 = vmatpush.bf16.msra.mxu0 %v5513
    %5693 = vmatpush.bf16.msra.mxu0 %v5510
    %5694 = vmatpush.bf16.msra.mxu0 %v5507
    %5695 = vmatpush.bf16.msra.mxu0 %v5504
    %5696 = vmatpush.bf16.msra.mxu0 %v5501
    %5697 = vmatpush.bf16.msra.mxu0 %v5498
    %5698 = vmatmul.bf16.gmra.mxu0 %v5170
    %v5699 = vpop.f32.mrf.mxu0
    %v5700 = vadd.f32 %v5162, %v5699
    %v5701 = vpop.f32.mrf.mxu0
    %5702 = vdwg.mxu0
    %5703 = vmatpush.bf16.msra.mxu0 %v5543
    %5704 = vmatpush.bf16.msra.mxu0 %v5540
    %5705 = vmatpush.bf16.msra.mxu0 %v5537
    %5706 = vmatpush.bf16.msra.mxu0 %v5534
    %5707 = vmatpush.bf16.msra.mxu0 %v5531
    %5708 = vmatpush.bf16.msra.mxu0 %v5528
    %5709 = vmatpush.bf16.msra.mxu0 %v5525
    %5710 = vmatpush.bf16.msra.mxu0 %v5522
    %5711 = vmatmul.bf16.gmra.mxu0 %v5171
    %v5712 = vpop.f32.mrf.mxu0
    %v5713 = vadd.f32 %v5700, %v5712
    %v5714 = vpop.f32.mrf.mxu0
    %5715 = vdwg.mxu0
    %5716 = vmatpush.bf16.msra.mxu0 %v5567
    %5717 = vmatpush.bf16.msra.mxu0 %v5564
    %5718 = vmatpush.bf16.msra.mxu0 %v5561
    %5719 = vmatpush.bf16.msra.mxu0 %v5558
    %5720 = vmatpush.bf16.msra.mxu0 %v5555
    %5721 = vmatpush.bf16.msra.mxu0 %v5552
    %5722 = vmatpush.bf16.msra.mxu0 %v5549
    %5723 = vmatpush.bf16.msra.mxu0 %v5546
    %5724 = vmatmul.bf16.gmra.mxu0 %v5172
    %v5725 = vpop.f32.mrf.mxu0
    %v5726 = vadd.f32 %v5713, %v5725
    %v5727 = vpop.f32.mrf.mxu0
    %5728 = vdwg.mxu0
    %5729 = vmatpush.bf16.msra.mxu0 %v5591
    %5730 = vmatpush.bf16.msra.mxu0 %v5588
    %5731 = vmatpush.bf16.msra.mxu0 %v5585
    %5732 = vmatpush.bf16.msra.mxu0 %v5582
    %5733 = vmatpush.bf16.msra.mxu0 %v5579
    %5734 = vmatpush.bf16.msra.mxu0 %v5576
    %5735 = vmatpush.bf16.msra.mxu0 %v5573
    %5736 = vmatpush.bf16.msra.mxu0 %v5570
    %5737 = vmatmul.bf16.gmra.mxu0 %v5173
    %v5738 = vpop.f32.mrf.mxu0
    %v5739 = vadd.f32 %v5726, %v5738
    %v5740 = vpop.f32.mrf.mxu0
    %5741 = vdwg.mxu0
    %5742 = vmatpush.bf16.msra.mxu0 %v5520
    %5743 = vmatpush.bf16.msra.mxu0 %v5517
    %5744 = vmatpush.bf16.msra.mxu0 %v5514
    %5745 = vmatpush.bf16.msra.mxu0 %v5511
    %5746 = vmatpush.bf16.msra.mxu0 %v5508
    %5747 = vmatpush.bf16.msra.mxu0 %v5505
    %5748 = vmatpush.bf16.msra.mxu0 %v5502
    %5749 = vmatpush.bf16.msra.mxu0 %v5499
    %5750 = vmatmul.bf16.gmra.mxu0 %v5170
    %v5751 = vpop.f32.mrf.mxu0
    %v5752 = vadd.f32 %v5163, %v5751
    %v5753 = vpop.f32.mrf.mxu0
    %5754 = vdwg.mxu0
    %5755 = vmatpush.bf16.msra.mxu0 %v5544
    %5756 = vmatpush.bf16.msra.mxu0 %v5541
    %5757 = vmatpush.bf16.msra.mxu0 %v5538
    %5758 = vmatpush.bf16.msra.mxu0 %v5535
    %5759 = vmatpush.bf16.msra.mxu0 %v5532
    %5760 = vmatpush.bf16.msra.mxu0 %v5529
    %5761 = vmatpush.bf16.msra.mxu0 %v5526
    %5762 = vmatpush.bf16.msra.mxu0 %v5523
    %5763 = vmatmul.bf16.gmra.mxu0 %v5171
    %v5764 = vpop.f32.mrf.mxu0
    %v5765 = vadd.f32 %v5752, %v5764
    %v5766 = vpop.f32.mrf.mxu0
    %5767 = vdwg.mxu0
    %5768 = vmatpush.bf16.msra.mxu0 %v5568
    %5769 = vmatpush.bf16.msra.mxu0 %v5565
    %5770 = vmatpush.bf16.msra.mxu0 %v5562
    %5771 = vmatpush.bf16.msra.mxu0 %v5559
    %5772 = vmatpush.bf16.msra.mxu0 %v5556
    %5773 = vmatpush.bf16.msra.mxu0 %v5553
    %5774 = vmatpush.bf16.msra.mxu0 %v5550
    %5775 = vmatpush.bf16.msra.mxu0 %v5547
    %5776 = vmatmul.bf16.gmra.mxu0 %v5172
    %v5777 = vpop.f32.mrf.mxu0
    %v5778 = vadd.f32 %v5765, %v5777
    %v5779 = vpop.f32.mrf.mxu0
    %5780 = vdwg.mxu0
    %5781 = vmatpush.bf16.msra.mxu0 %v5592
    %5782 = vmatpush.bf16.msra.mxu0 %v5589
    %5783 = vmatpush.bf16.msra.mxu0 %v5586
    %5784 = vmatpush.bf16.msra.mxu0 %v5583
    %5785 = vmatpush.bf16.msra.mxu0 %v5580
    %5786 = vmatpush.bf16.msra.mxu0 %v5577
    %5787 = vmatpush.bf16.msra.mxu0 %v5574
    %5788 = vmatpush.bf16.msra.mxu0 %v5571
    %5789 = vmatmul.bf16.gmra.mxu0 %v5173
    %v5790 = vpop.f32.mrf.mxu0
    %v5791 = vadd.f32 %v5778, %v5790
    %v5792 = vpop.f32.mrf.mxu0
    %5793 = vdwg.mxu0
    %5794 = vmatpush.bf16.msra.mxu0 %v5521
    %5795 = vmatpush.bf16.msra.mxu0 %v5518
    %5796 = vmatpush.bf16.msra.mxu0 %v5515
    %5797 = vmatpush.bf16.msra.mxu0 %v5512
    %5798 = vmatpush.bf16.msra.mxu0 %v5509
    %5799 = vmatpush.bf16.msra.mxu0 %v5506
    %5800 = vmatpush.bf16.msra.mxu0 %v5503
    %5801 = vmatpush.bf16.msra.mxu0 %v5500
    %5802 = vmatmul.bf16.gmra.mxu0 %v5170
    %v5803 = vpop.f32.mrf.mxu0
    %v5804 = vadd.f32 %v5164, %v5803
    %v5805 = vpop.f32.mrf.mxu0
    %5806 = vdwg.mxu0
    %5807 = vmatpush.bf16.msra.mxu0 %v5545
    %5808 = vmatpush.bf16.msra.mxu0 %v5542
    %5809 = vmatpush.bf16.msra.mxu0 %v5539
    %5810 = vmatpush.bf16.msra.mxu0 %v5536
    %5811 = vmatpush.bf16.msra.mxu0 %v5533
    %5812 = vmatpush.bf16.msra.mxu0 %v5530
    %5813 = vmatpush.bf16.msra.mxu0 %v5527
    %5814 = vmatpush.bf16.msra.mxu0 %v5524
    %5815 = vmatmul.bf16.gmra.mxu0 %v5171
    %v5816 = vpop.f32.mrf.mxu0
    %v5817 = vadd.f32 %v5804, %v5816
    %v5818 = vpop.f32.mrf.mxu0
    %5819 = vdwg.mxu0
    %5820 = vmatpush.bf16.msra.mxu0 %v5569
    %5821 = vmatpush.bf16.msra.mxu0 %v5566
    %5822 = vmatpush.bf16.msra.mxu0 %v5563
    %5823 = vmatpush.bf16.msra.mxu0 %v5560
    %5824 = vmatpush.bf16.msra.mxu0 %v5557
    %5825 = vmatpush.bf16.msra.mxu0 %v5554
    %5826 = vmatpush.bf16.msra.mxu0 %v5551
    %5827 = vmatpush.bf16.msra.mxu0 %v5548
    %5828 = vmatmul.bf16.gmra.mxu0 %v5172
    %v5829 = vpop.f32.mrf.mxu0
    %v5830 = vadd.f32 %v5817, %v5829
    %v5831 = vpop.f32.mrf.mxu0
    %5832 = vdwg.mxu0
    %5833 = vmatpush.bf16.msra.mxu0 %v5593
    %5834 = vmatpush.bf16.msra.mxu0 %v5590
    %5835 = vmatpush.bf16.msra.mxu0 %v5587
    %5836 = vmatpush.bf16.msra.mxu0 %v5584
    %5837 = vmatpush.bf16.msra.mxu0 %v5581
    %5838 = vmatpush.bf16.msra.mxu0 %v5578
    %5839 = vmatpush.bf16.msra.mxu0 %v5575
    %5840 = vmatpush.bf16.msra.mxu0 %v5572
    %5841 = vmatmul.bf16.gmra.mxu0 %v5173
    %v5842 = vpop.f32.mrf.mxu0
    %v5843 = vadd.f32 %v5830, %v5842
    %v5844 = vpop.f32.mrf.mxu0
    %5845 = vdwg.mxu0
    %v5846 = vmax.f32 %v5739, 0.0
    %v5847 = vmax.f32 %v5791, 0.0
    %v5848 = vmax.f32 %v5843, 0.0
    %v5849 = vld [vmem:[%s12] sm:$0xff]
    %v5850 = vld [vmem:[%s12 + $0x8] sm:$0xff]
    %v5851 = vld [vmem:[%s12 + $0x10] sm:$0xff]
    %v5852 = vld [vmem:[%s12 + $0x18] sm:$0xff]
    %v5853 = vld [vmem:[%s12 + $0x20] sm:$0xff]
    %v5854 = vld [vmem:[%s12 + $0x28] sm:$0xff]
    %v5855 = vld [vmem:[%s12 + $0x30] sm:$0xff]
    %v5856 = vld [vmem:[%s12 + $0x38] sm:$0xff]
    %v5857 = vld [vmem:[%s12 + $0x40] sm:$0xff]
    %v5858 = vld [vmem:[%s12 + $0x48] sm:$0xff]
    %v5859 = vld [vmem:[%s12 + $0x50] sm:$0xff]
    %v5860 = vld [vmem:[%s12 + $0x58] sm:$0xff]
    %v5861 = vld [vmem:[%s12 + $0x60] sm:$0xff]
    %v5862 = vld [vmem:[%s12 + $0x68] sm:$0xff]
    %v5863 = vld [vmem:[%s12 + $0x70] sm:$0xff]
    %v5864 = vld [vmem:[%s12 + $0x78] sm:$0xff]
    %v5865 = vld [vmem:[%s12 + $0x80] sm:$0xff]
    %v5866 = vld [vmem:[%s12 + $0x88] sm:$0xff]
    %v5867 = vld [vmem:[%s12 + $0x90] sm:$0xff]
    %v5868 = vld [vmem:[%s12 + $0x98] sm:$0xff]
    %v5869 = vld [vmem:[%s12 + $0xa0] sm:$0xff]
    %v5870 = vld [vmem:[%s12 + $0xa8] sm:$0xff]
    %v5871 = vld [vmem:[%s12 + $0xb0] sm:$0xff]
    %v5872 = vld [vmem:[%s12 + $0xb8] sm:$0xff]
    %v5873 = vld [vmem:[%s12 + $0xc0] sm:$0xff]
    %v5874 = vld [vmem:[%s12 + $0xc8] sm:$0xff]
    %v5875 = vld [vmem:[%s12 + $0xd0] sm:$0xff]
    %v5876 = vld [vmem:[%s12 + $0xd8] sm:$0xff]
    %v5877 = vld [vmem:[%s12 + $0xe0] sm:$0xff]
    %v5878 = vld [vmem:[%s12 + $0xe8] sm:$0xff]
    %v5879 = vld [vmem:[%s12 + $0xf0] sm:$0xff]
    %v5880 = vld [vmem:[%s12 + $0xf8] sm:$0xff]
    %v5881 = vld [vmem:[%s12 + $0x100] sm:$0xff]
    %v5882 = vld [vmem:[%s12 + $0x108] sm:$0xff]
    %v5883 = vld [vmem:[%s12 + $0x110] sm:$0xff]
    %v5884 = vld [vmem:[%s12 + $0x118] sm:$0xff]
    %v5885 = vld [vmem:[%s12 + $0x120] sm:$0xff]
    %v5886 = vld [vmem:[%s12 + $0x128] sm:$0xff]
    %v5887 = vld [vmem:[%s12 + $0x130] sm:$0xff]
    %v5888 = vld [vmem:[%s12 + $0x138] sm:$0xff]
    %v5889 = vld [vmem:[%s12 + $0x140] sm:$0xff]
    %v5890 = vld [vmem:[%s12 + $0x148] sm:$0xff]
    %v5891 = vld [vmem:[%s12 + $0x150] sm:$0xff]
    %v5892 = vld [vmem:[%s12 + $0x158] sm:$0xff]
    %v5893 = vld [vmem:[%s12 + $0x160] sm:$0xff]
    %v5894 = vld [vmem:[%s12 + $0x168] sm:$0xff]
    %v5895 = vld [vmem:[%s12 + $0x170] sm:$0xff]
    %v5896 = vld [vmem:[%s12 + $0x178] sm:$0xff]
    %v5897 = vld [vmem:[#allocation13] sm:$0x1]
    %v5899 = vperm.slane %v5897, 0
    %5901 = vmatpush.msra.mxu0 %v5864
    %5902 = vmatpush.msra.mxu0 %v5863
    %5903 = vmatpush.msra.mxu0 %v5862
    %5904 = vmatpush.msra.mxu0 %v5861
    %5905 = vmatpush.msra.mxu0 %v5860
    %5906 = vmatpush.msra.mxu0 %v5859
    %5907 = vmatpush.msra.mxu0 %v5858
    %5908 = vmatpush.msra.mxu0 %v5857
    %5909 = vmatpush.msra.mxu0 %v5856
    %5910 = vmatpush.msra.mxu0 %v5855
    %5911 = vmatpush.msra.mxu0 %v5854
    %5912 = vmatpush.msra.mxu0 %v5853
    %5913 = vmatpush.msra.mxu0 %v5852
    %5914 = vmatpush.msra.mxu0 %v5851
    %5915 = vmatpush.msra.mxu0 %v5850
    %5916 = vmatpush.msra.mxu0 %v5849
    %5917 = vmatmul.f32.gmra.mxu0 %v5846
    %v5918 = vpop.f32.mrf.mxu0
    %v5919 = vadd.f32 %v5899, %v5918
    %5920 = vdwg.mxu0
    %5921 = vmatpush.msra.mxu0 %v5880
    %5922 = vmatpush.msra.mxu0 %v5879
    %5923 = vmatpush.msra.mxu0 %v5878
    %5924 = vmatpush.msra.mxu0 %v5877
    %5925 = vmatpush.msra.mxu0 %v5876
    %5926 = vmatpush.msra.mxu0 %v5875
    %5927 = vmatpush.msra.mxu0 %v5874
    %5928 = vmatpush.msra.mxu0 %v5873
    %5929 = vmatpush.msra.mxu0 %v5872
    %5930 = vmatpush.msra.mxu0 %v5871
    %5931 = vmatpush.msra.mxu0 %v5870
    %5932 = vmatpush.msra.mxu0 %v5869
    %5933 = vmatpush.msra.mxu0 %v5868
    %5934 = vmatpush.msra.mxu0 %v5867
    %5935 = vmatpush.msra.mxu0 %v5866
    %5936 = vmatpush.msra.mxu0 %v5865
    %5937 = vmatmul.f32.gmra.mxu0 %v5847
    %v5938 = vpop.f32.mrf.mxu0
    %v5939 = vadd.f32 %v5919, %v5938
    %5940 = vdwg.mxu0
    %5941 = vmatpush.msra.mxu0 %v5896
    %5942 = vmatpush.msra.mxu0 %v5895
    %5943 = vmatpush.msra.mxu0 %v5894
    %5944 = vmatpush.msra.mxu0 %v5893
    %5945 = vmatpush.msra.mxu0 %v5892
    %5946 = vmatpush.msra.mxu0 %v5891
    %5947 = vmatpush.msra.mxu0 %v5890
    %5948 = vmatpush.msra.mxu0 %v5889
    %5949 = vmatpush.msra.mxu0 %v5888
    %5950 = vmatpush.msra.mxu0 %v5887
    %5951 = vmatpush.msra.mxu0 %v5886
    %5952 = vmatpush.msra.mxu0 %v5885
    %5953 = vmatpush.msra.mxu0 %v5884
    %5954 = vmatpush.msra.mxu0 %v5883
    %5955 = vmatpush.msra.mxu0 %v5882
    %5956 = vmatpush.msra.mxu0 %v5881
    %5957 = vmatmul.f32.gmra.mxu0 %v5848
    %v5958 = vpop.f32.mrf.mxu0
    %v5959 = vadd.f32 %v5939, %v5958
    %5960 = vdwg.mxu0
    %v5961 = vadd.f32 %v5029, 1.0
    %v5962 = vand.u32 2147483647, %v5961
    %v5963 = vadd.f32 %v5959, 1.0
    %v5964 = vand.u32 2147483647, %v5963
    %v5965 = vmul.f32 %v5962, %v878
    %5967 = vrot.lane.b32.xlu0 %v5029, 125
    %v5968 = vpop.permute.xlu0 %5967
    %v5970 = vadd.f32 %v5965, %v5968
    %v5971 = vmul.f32 %v5964, %v878
    %5973 = vrot.lane.b32.xlu0 %v5959, 125
    %v5974 = vpop.permute.xlu0 %5973
    %v5976 = vadd.f32 %v5971, %v5974
    %v5977 = vmul.f32 %v5962, %v5964
    %v5978 = vrsqrt.pop %v5977
    %v5979 = vmul.f32 %v5978, %v5977
    %v5980 = vmul.f32 %v5979, %v5978
    %v5981 = vmul.f32 0.5, %v5980
    %v5982 = vsub.f32 1.5, %v5981
    %v5983 = vmul.f32 %v5978, %v5982
    %v5984 = vmul.f32 %v5977, %v5983
    %vm5985 = vcmp.eq.f32.partialorder %v5977, inf
    %v5986 = vsel %vm5985, %v5977, %v5984
    %vm5987 = vcmp.eq.f32.partialorder %v5977, 0.0
    %v5988 = vand.u32 %v5977, 2147483648
    %v5989 = vsel %vm5987, %v5988, %v5986
    %v5990 = vmul.f32 %v5989, %v878
    %v5991 = vadd.f32 %v5029, %v5959
    %v5992 = vmul.f32 %v5991, 0.5
    %5994 = vrot.lane.b32.xlu0 %v5992, 125
    %v5995 = vpop.permute.xlu0 %5994
    %v5997 = vadd.f32 %v5990, %v5995
    %vm5998 = vcmask 17408
    %5999 = vst.msk [vmem:[%s14] sm:$0x3] %vm5998, %v878
    %6001 = vrot.lane.b32.xlu0 %v5970, 3
    %v6002 = vpop.permute.xlu0 %6001
    %vm6004 = vcmask 42008
    %6005 = vst.msk [vmem:[%s14] sm:$0x3] %vm6004, %v6002
    %6007 = vrot.lane.b32.xlu0 %v5976, 6
    %v6008 = vpop.permute.xlu0 %6007
    %vm6010 = vcmask 66608
    %6011 = vst.msk [vmem:[%s14] sm:$0x3] %vm6010, %v6008
    %6013 = vrot.lane.b32.xlu0 %v5997, 9
    %v6014 = vpop.permute.xlu0 %6013
    %vm6016 = vcmask 91208
    %6017 = vst.msk [vmem:[%s14] sm:$0x3] %vm6016, %v6014
    // Predicated region
    $region90: #{_forward_impl.1} parent=1 // pred_check
      _
    $region91: #{_forward_impl.1} parent=1 // pred_check_branch
      %6019 = sbr.rel (0) target = $region93
    $region92: #{_forward_impl.1} parent=1 // pred_region
      _
    $region93: #{_forward_impl.1} parent=1 // pred_fallthru
      _
    // Predicated region
    $region94: #{_forward_impl.1} parent=1 // pred_check
      _
    $region95: #{_forward_impl.1} parent=1 // pred_check_branch
      %6021 = sbr.rel (0) target = $region97
    $region96: #{_forward_impl.1} parent=1 // pred_region
      _
    $region97: #{_forward_impl.1} parent=1 // pred_fallthru
      _
    %6022 = vsyncpa [#allocation3], 1
    %6023 = vsyncpa [#allocation5], 1
    %6024 = vsyncpa [#allocation8], 1
    %6025 = vsyncpa [#allocation11], 1
    %6026 = vsyncpa [#allocation14], 1

</llo_original>
